<compile_context>
chip_gen: v7x
topology: tpu7x:2x2x1
jax: 0.10.0
libtpu: 0.0.40
codegen_flags: <defaults>
</compile_context>

<pallas_src>
import math
import functools

import jax
import jax.numpy as jnp
from jax.experimental import pallas as pl
from jax.experimental.pallas import tpu as pltpu

LN_EPS = 1e-5


# ----------------------------- small math helpers -----------------------------
def _erf(x):
    # Abramowitz & Stegun 7.1.26 rational approximation (max abs err ~1.5e-7).
    a1, a2, a3, a4, a5 = 0.254829592, -0.284496736, 1.421413741, -1.453152027, 1.061405429
    p = 0.3275911
    s = jnp.where(x >= 0.0, 1.0, -1.0)
    ax = jnp.abs(x)
    t = 1.0 / (1.0 + p * ax)
    poly = ((((a5 * t + a4) * t + a3) * t + a2) * t + a1) * t
    return s * (1.0 - poly * jnp.exp(-ax * ax))


def _gelu_exact(x):
    # PyTorch nn.GELU() default is the exact erf form.
    return 0.5 * x * (1.0 + _erf(x * (1.0 / math.sqrt(2.0))))


def _layernorm(x, gamma, beta):
    mu = jnp.mean(x, axis=-1, keepdims=True)
    var = jnp.mean((x - mu) ** 2, axis=-1, keepdims=True)
    return (x - mu) * jax.lax.rsqrt(var + LN_EPS) * gamma + beta


def _mm(a, b):
    # bf16 MXU matmul with f32 accumulation.
    return jnp.dot(a.astype(jnp.bfloat16), b.astype(jnp.bfloat16),
                   preferred_element_type=jnp.float32)


# ------------------------------ fused Pallas kernel -----------------------------
def _fused_swin_unet_kernel(*refs, num_heads, depth, batch, seq):
    # refs layout:
    #   [0]                 patches        (B*L, Cin*P*P)      f32
    #   [1:5]               wp(bf16), bp, pe_gamma, pe_beta
    #   [5 : 5+12*depth]    per-block params (LN1, qkv, out_proj, LN2, MLP)
    #   tail inputs:        wf_t (Cout,E) f32, bf_col (Cout,1) f32,
    #                       u_t (L, Hout*Wout) f32, attn_mask (B*L, B*L) f32
    #   last:               output ref (B, Cout, Hout*Wout) f32
    patch_ref, wp_ref, bp_ref, peg_ref, peb_ref = refs[:5]
    blk_refs = refs[5:5 + 12 * depth]
    wf_ref, bfc_ref, ut_ref, mask_ref, o_ref = refs[5 + 12 * depth:]

    B, L = batch, seq
    N = B * L
    C = wp_ref.shape[1]
    d = C // num_heads
    scale = 1.0 / math.sqrt(d)
    mask = mask_ref[...]                                       # (N, N) additive mask

    # ---- patch embedding (folded 4x4/stride-4 conv as one matmul) + LayerNorm ----
    x = _mm(patch_ref[...], wp_ref[...]) + bp_ref[...]
    x = _layernorm(x, peg_ref[...], peb_ref[...])              # (N, C) f32

    # ---- Swin blocks ----
    for blk in range(depth):
        (g1, be1, wqkv, bqkv, wo, bo,
         g2, be2, w1, bm1, w2, bm2) = blk_refs[12 * blk:12 * (blk + 1)]

        # windowed multi-head self-attention; windows + batch folded into the row
        # axis and isolated by the block-diagonal mask.
        h = _layernorm(x, g1[...], be1[...])
        qkv = _mm(h, wqkv[...]) + bqkv[...]                    # (N, 3C) single projection
        wo_v = wo[...]                                         # (C, C) bf16
        attn = jnp.zeros((N, C), jnp.float32)
        for hd in range(num_heads):
            lo = hd * d
            qh = qkv[:, lo:lo + d] * scale
            kh = qkv[:, C + lo:C + lo + d]
            vh = qkv[:, 2 * C + lo:2 * C + lo + d]
            s = jax.lax.dot_general(
                qh.astype(jnp.bfloat16), kh.astype(jnp.bfloat16),
                (((1,), (1,)), ((), ())),
                preferred_element_type=jnp.float32)            # (N, N)
            s = s + mask
            s = s - jnp.max(s, axis=-1, keepdims=True)
            p = jnp.exp(s)
            p = p * pl.reciprocal(jnp.sum(p, axis=-1, keepdims=True), approx=True)
            oh = _mm(p, vh)                                    # (N, d)
            # distribute the output projection over heads -> no concatenation
            attn = attn + _mm(oh, wo_v[lo:lo + d, :])          # (N, C)
        x = x + attn + bo[...]

        # MLP: C -> 4C -> C with exact GELU (hidden 4C = 128 is lane-dense)
        h2 = _layernorm(x, g2[...], be2[...])
        m = _mm(h2, w1[...]) + bm1[...]
        m = _gelu_exact(m)
        x = x + _mm(m, w2[...]) + bm2[...]

    # ---- final 1x1 conv (transposed layout) + bilinear upsample as matmul ----
    # Output is stored (Cout, Hout*Wout) per batch -> lane-dense 256-wide writeback.
    wf = wf_ref[...]                                           # (Cout, C)
    bfc = bfc_ref[...]                                         # (Cout, 1)
    ut = ut_ref[...]                                           # (L, Hout*Wout)
    for b in range(B):
        tok_b = x[b * L:(b + 1) * L, :]                        # (L, C)
        yt = jax.lax.dot_general(wf, tok_b, (((1,), (1,)), ((), ())),
                                 preferred_element_type=jnp.float32) + bfc   # (Cout, L)
        o_ref[b] = jnp.dot(yt, ut, preferred_element_type=jnp.float32)       # (Cout, HWout)


# ---------------------------- JAX glue (reshapes etc.) --------------------------
def im2col_patches(x_nchw, patch):
    B, C, H, W = x_nchw.shape
    Hp, Wp = H // patch, W // patch
    x = x_nchw.reshape(B, C, Hp, patch, Wp, patch)
    x = x.transpose(0, 2, 4, 1, 3, 5)        # (B, Hp, Wp, C, kh, kw)
    return x.reshape(B, Hp * Wp, C * patch * patch)


def bilinear_matrix(out_size, in_size):
    # PyTorch F.interpolate(mode='bilinear', align_corners=False) 1-D weights.
    scale = in_size / out_size
    i = jnp.arange(out_size, dtype=jnp.float32)
    src = jnp.maximum((i + 0.5) * scale - 0.5, 0.0)
    i0 = jnp.minimum(jnp.floor(src).astype(jnp.int32), in_size - 1)
    i1 = jnp.minimum(i0 + 1, in_size - 1)
    lam = src - i0.astype(jnp.float32)
    m = jnp.zeros((out_size, in_size), jnp.float32)
    rows = jnp.arange(out_size)
    m = m.at[rows, i0].add(1.0 - lam)
    m = m.at[rows, i1].add(lam)
    return m


def swin_unet_forward(x_tokens, params, *, patch_size, num_heads):
    B, HW, Cin = x_tokens.shape
    H = W = int(round(math.sqrt(HW)))
    x = jnp.transpose(x_tokens, (0, 2, 1)).reshape(B, Cin, H, W)        # NCHW
    pad_h = (patch_size - H % patch_size) % patch_size
    pad_w = (patch_size - W % patch_size) % patch_size
    if pad_h or pad_w:
        x = jnp.pad(x, ((0, 0), (0, 0), (0, pad_h), (0, pad_w)))
    Hp, Wp = (H + pad_h) // patch_size, (W + pad_w) // patch_size
    L = Hp * Wp
    Hout, Wout = Hp * patch_size, Wp * patch_size

    patches = im2col_patches(x, patch_size).reshape(B * L, Cin * patch_size * patch_size)

    E = params["wp"].shape[1]
    Cout = params["wf"].shape[1]
    depth = len(params["blocks"])

    # Bilinear upsample as one matmul over the token axis (transposed so the kernel
    # writes a lane-dense (Cout, Hout*Wout) slab per batch).
    # TODO(synk): at large resolutions replace this dense Kronecker matrix with two
    #             separable row/col interpolation passes — it scales as (H*W)*(Hp*Wp)
    #             and would exceed VMEM (notably v7x's 64 MiB).
    u_t = jnp.kron(bilinear_matrix(Hout, Hp), bilinear_matrix(Wout, Wp)).T   # (L, Hout*Wout)

    # Block-diagonal additive mask: rows attend only within their own (batch, window)
    # block of S = L // num_heads consecutive stacked tokens.
    S = L // num_heads
    blk_id = jnp.arange(B * L, dtype=jnp.int32) // S
    attn_mask = jnp.where(blk_id[:, None] == blk_id[None, :], 0.0, -1e30).astype(jnp.float32)

    bf16 = jnp.bfloat16
    inputs = [patches, params["wp"].astype(bf16), params["bp"],
              params["pe_g"], params["pe_b"]]
    for (g1, be1, wqkv, bqkv, wo, bo, g2, be2, w1, bm1, w2, bm2) in params["blocks"]:
        inputs += [g1, be1, wqkv.astype(bf16), bqkv, wo.astype(bf16), bo,
                   g2, be2, w1.astype(bf16), bm1, w2.astype(bf16), bm2]
    inputs += [params["wf"].T, params["bf"].reshape(Cout, 1), u_t, attn_mask]

    kernel = functools.partial(_fused_swin_unet_kernel, num_heads=num_heads,
                               depth=depth, batch=B, seq=L)
    out_t = pl.pallas_call(
        kernel,
        out_shape=jax.ShapeDtypeStruct((B, Cout, Hout * Wout), jnp.float32),
        in_specs=[pl.BlockSpec(memory_space=pltpu.MemorySpace.VMEM)] * len(inputs),
        out_specs=pl.BlockSpec(memory_space=pltpu.MemorySpace.VMEM),
    )(*inputs)
    return jnp.transpose(out_t, (0, 2, 1))                               # (B, Hout*Wout, Cout)


# --------------------------- pure-JAX reference (check) -------------------------
def reference_forward(x_tokens, params, *, patch_size, num_heads):
    B, HW, Cin = x_tokens.shape
    H = W = int(round(math.sqrt(HW)))
    x = jnp.transpose(x_tokens, (0, 2, 1)).reshape(B, Cin, H, W)
    patches = im2col_patches(x, patch_size)
    tok = _layernorm(patches @ params["wp"] + params["bp"], params["pe_g"], params["pe_b"])
    for (g1, be1, wqkv, bqkv, wo, bo, g2, be2, w1, bm1, w2, bm2) in params["blocks"]:
        Bt, L, C = tok.shape
        S, d = L // num_heads, C // num_heads
        h = _layernorm(tok, g1, be1).reshape(Bt, num_heads, S, C)
        qkv = h @ wqkv + bqkv
        q, k, v = qkv[..., :C], qkv[..., C:2 * C], qkv[..., 2 * C:]
        q = q.reshape(Bt, num_heads, S, num_heads, d) * (1.0 / math.sqrt(d))
        k = k.reshape(Bt, num_heads, S, num_heads, d)
        v = v.reshape(Bt, num_heads, S, num_heads, d)
        s = jnp.einsum("bwqhd,bwkhd->bwhqk", q, k)
        p = jax.nn.softmax(s, axis=-1)
        o = jnp.einsum("bwhqk,bwkhd->bwqhd", p, v).reshape(Bt, num_heads, S, C)
        attn = (o @ wo + bo).reshape(Bt, L, C)
        tok = tok + attn
        h2 = _layernorm(tok, g2, be2)
        tok = tok + (_gelu_exact(h2 @ w1 + bm1) @ w2 + bm2)
    Hp, Wp = H // patch_size, W // patch_size
    U = jnp.kron(bilinear_matrix(Hp * patch_size, Hp), bilinear_matrix(Wp * patch_size, Wp))
    y = tok @ params["wf"] + params["bf"]
    return jnp.einsum("hl,blc->bhc", U, y)


# ------------------------------ parameter init ----------------------------------
def init_params(key, *, in_chans, embed_dim, patch_size, depth):
    E, C, P = embed_dim, in_chans, patch_size
    keys = jax.random.split(key, 4 + depth + 2)

    def nrm(k, shape, scale=0.02):
        return scale * jax.random.normal(k, shape, jnp.float32)

    params = {
        "wp": nrm(keys[0], (C * P * P, E)),           # patch conv weight, folded & transposed
        "bp": nrm(keys[1], (1, E), 0.01),
        "pe_g": 1.0 + nrm(keys[2], (1, E), 0.1),
        "pe_b": nrm(keys[3], (1, E), 0.1),
        "blocks": [],
        "wf": nrm(keys[4 + depth], (E, C)),           # final 1x1 conv weight^T
        "bf": nrm(keys[5 + depth], (1, C), 0.01),
    }
    for i in range(depth):
        kk = jax.random.split(keys[4 + i], 12)
        D = E
        params["blocks"].append((
            1.0 + nrm(kk[0], (1, D), 0.1),   # norm1 gamma
            nrm(kk[1], (1, D), 0.1),         # norm1 beta
            nrm(kk[2], (D, 3 * D)),          # in_proj_weight^T
            nrm(kk[3], (1, 3 * D), 0.01),    # in_proj_bias
            nrm(kk[4], (D, D)),              # out_proj.weight^T
            nrm(kk[5], (1, D), 0.01),        # out_proj.bias
            1.0 + nrm(kk[6], (1, D), 0.1),   # norm2 gamma
            nrm(kk[7], (1, D), 0.1),         # norm2 beta
            nrm(kk[8], (D, 4 * D)),          # mlp W1^T
            nrm(kk[9], (1, 4 * D), 0.01),    # mlp b1
            nrm(kk[10], (4 * D, D)),         # mlp W2^T
            nrm(kk[11], (1, D), 0.01),       # mlp b2
        ))
    return params


# ------------------------------------ main ---------------------------------------
if __name__ == "__main__":
    # Small, consistent configuration: in_chans=4, embed_dim=32, depths=[2], num_heads=[4],
    # patch_size=4, input spatial 16x16  ->  input tokens (2, 256, 4).
    B, in_chans, H = 2, 4, 16
    embed_dim, patch_size, depth, num_heads = 32, 4, 2, 4

    key = jax.random.PRNGKey(0)
    kx, kp = jax.random.split(key)
    x = jax.random.normal(kx, (B, H * H, in_chans), jnp.float32)
    params = init_params(kp, in_chans=in_chans, embed_dim=embed_dim,
                         patch_size=patch_size, depth=depth)

    fwd = jax.jit(functools.partial(swin_unet_forward, patch_size=patch_size,
                                    num_heads=num_heads))
    out = jax.block_until_ready(fwd(x, params))

    assert out.shape == (B, H * H, in_chans), out.shape
    assert bool(jnp.all(jnp.isfinite(out)))

    ref = reference_forward(x, params, patch_size=patch_size, num_heads=num_heads)
    max_err = float(jnp.max(jnp.abs(out - ref)))
    assert bool(jnp.allclose(out, ref, rtol=1e-2, atol=1e-2)), max_err

    print("KERNEL_OK")
</pallas_src>

<mosaic_0001>
module attributes {stable_mosaic.version = 11 : i64} {
  func.func private @main(%arg0: i32) attributes {dimension_semantics = [#tpu.dimension_semantics<core_parallel>], iteration_bounds = array<i64: 2>, tpu.core_type = #tpu.core_type<sc_scalar_subcore>, window_params = []} {
    return
  }
}

module attributes {stable_mosaic.version = 11 : i64} {
  func.func private @main(%arg0: i32) attributes {dimension_semantics = [#tpu.dimension_semantics<core_parallel>], iteration_bounds = array<i64: 2>, tpu.core_type = #tpu.core_type<sc_scalar_subcore>, window_params = []} {
    return
  }
}

module attributes {stable_mosaic.version = 11 : i64} {
  func.func @_fused_swin_unet_kernel(%arg0: memref<32x64xf32, #tpu.memory_space<vmem>>, %arg1: memref<64x32xbf16, #tpu.memory_space<vmem>>, %arg2: memref<1x32xf32, #tpu.memory_space<vmem>>, %arg3: memref<1x32xf32, #tpu.memory_space<vmem>>, %arg4: memref<1x32xf32, #tpu.memory_space<vmem>>, %arg5: memref<1x32xf32, #tpu.memory_space<vmem>>, %arg6: memref<1x32xf32, #tpu.memory_space<vmem>>, %arg7: memref<32x96xbf16, #tpu.memory_space<vmem>>, %arg8: memref<1x96xf32, #tpu.memory_space<vmem>>, %arg9: memref<32x32xbf16, #tpu.memory_space<vmem>>, %arg10: memref<1x32xf32, #tpu.memory_space<vmem>>, %arg11: memref<1x32xf32, #tpu.memory_space<vmem>>, %arg12: memref<1x32xf32, #tpu.memory_space<vmem>>, %arg13: memref<32x128xbf16, #tpu.memory_space<vmem>>, %arg14: memref<1x128xf32, #tpu.memory_space<vmem>>, %arg15: memref<128x32xbf16, #tpu.memory_space<vmem>>, %arg16: memref<1x32xf32, #tpu.memory_space<vmem>>, %arg17: memref<1x32xf32, #tpu.memory_space<vmem>>, %arg18: memref<1x32xf32, #tpu.memory_space<vmem>>, %arg19: memref<32x96xbf16, #tpu.memory_space<vmem>>, %arg20: memref<1x96xf32, #tpu.memory_space<vmem>>, %arg21: memref<32x32xbf16, #tpu.memory_space<vmem>>, %arg22: memref<1x32xf32, #tpu.memory_space<vmem>>, %arg23: memref<1x32xf32, #tpu.memory_space<vmem>>, %arg24: memref<1x32xf32, #tpu.memory_space<vmem>>, %arg25: memref<32x128xbf16, #tpu.memory_space<vmem>>, %arg26: memref<1x128xf32, #tpu.memory_space<vmem>>, %arg27: memref<128x32xbf16, #tpu.memory_space<vmem>>, %arg28: memref<1x32xf32, #tpu.memory_space<vmem>>, %arg29: memref<4x32xf32, #tpu.memory_space<vmem>>, %arg30: memref<4x1xf32, #tpu.memory_space<vmem>>, %arg31: memref<16x256xf32, #tpu.memory_space<vmem>>, %arg32: memref<32x32xf32, #tpu.memory_space<vmem>>, %arg33: memref<2x4x256xf32, #tpu.memory_space<vmem>>) attributes {dimension_semantics = [], scalar_prefetch = 0 : i64, scratch_operands = 0 : i64, tpu.core_type = #tpu.core_type<tc>} {
    %c0 = arith.constant 0 : index
    %c0_0 = arith.constant 0 : index
    %0 = vector.load %arg32[%c0, %c0_0] : memref<32x32xf32, #tpu.memory_space<vmem>>, vector<32x32xf32>
    %c0_1 = arith.constant 0 : index
    %c0_2 = arith.constant 0 : index
    %1 = vector.load %arg0[%c0_1, %c0_2] : memref<32x64xf32, #tpu.memory_space<vmem>>, vector<32x64xf32>
    %c0_3 = arith.constant 0 : index
    %c0_4 = arith.constant 0 : index
    %2 = vector.load %arg1[%c0_3, %c0_4] : memref<64x32xbf16, #tpu.memory_space<vmem>>, vector<64x32xbf16>
    %3 = arith.truncf %1 : vector<32x64xf32> to vector<32x64xbf16>
    %cst = arith.constant dense<0.000000e+00> : vector<32x32xf32>
    %4 = tpu.matmul %3, %2, %cst {dimension_numbers = #tpu.dot_dimension_numbers<[1], [0], [0], [1], [0, 0, 1, 1], [], []>} : vector<32x64xbf16>, vector<64x32xbf16>, vector<32x32xf32> -> vector<32x32xf32>
    %c0_5 = arith.constant 0 : index
    %c0_6 = arith.constant 0 : index
    %5 = vector.load %arg2[%c0_5, %c0_6] : memref<1x32xf32, #tpu.memory_space<vmem>>, vector<1x32xf32>
    %6 = vector.broadcast %5 : vector<1x32xf32> to vector<32x32xf32>
    %7 = arith.addf %4, %6 : vector<32x32xf32>
    %c0_7 = arith.constant 0 : index
    %c0_8 = arith.constant 0 : index
    %8 = vector.load %arg3[%c0_7, %c0_8] : memref<1x32xf32, #tpu.memory_space<vmem>>, vector<1x32xf32>
    %c0_9 = arith.constant 0 : index
    %c0_10 = arith.constant 0 : index
    %9 = vector.load %arg4[%c0_9, %c0_10] : memref<1x32xf32, #tpu.memory_space<vmem>>, vector<1x32xf32>
    %cst_11 = arith.constant dense<0.000000e+00> : vector<32xf32>
    %10 = vector.multi_reduction <add>, %7, %cst_11 [1] : vector<32x32xf32> to vector<32xf32>
    %11 = vector.shape_cast %10 : vector<32xf32> to vector<32x1xf32>
    %cst_12 = arith.constant 3.200000e+01 : f32
    %12 = vector.broadcast %cst_12 : f32 to vector<32x1xf32>
    %13 = arith.divf %11, %12 : vector<32x1xf32>
    %14 = vector.broadcast %13 : vector<32x1xf32> to vector<32x32xf32>
    %15 = arith.subf %7, %14 : vector<32x32xf32>
    %16 = arith.mulf %15, %15 : vector<32x32xf32>
    %cst_13 = arith.constant dense<0.000000e+00> : vector<32xf32>
    %17 = vector.multi_reduction <add>, %16, %cst_13 [1] : vector<32x32xf32> to vector<32xf32>
    %18 = vector.shape_cast %17 : vector<32xf32> to vector<32x1xf32>
    %cst_14 = arith.constant 3.200000e+01 : f32
    %19 = vector.broadcast %cst_14 : f32 to vector<32x1xf32>
    %20 = arith.divf %18, %19 : vector<32x1xf32>
    %21 = vector.broadcast %13 : vector<32x1xf32> to vector<32x32xf32>
    %22 = arith.subf %7, %21 : vector<32x32xf32>
    %cst_15 = arith.constant 9.99999974E-6 : f32
    %23 = vector.broadcast %cst_15 : f32 to vector<32x1xf32>
    %24 = arith.addf %20, %23 : vector<32x1xf32>
    %25 = math.rsqrt %24 : vector<32x1xf32>
    %26 = vector.broadcast %25 : vector<32x1xf32> to vector<32x32xf32>
    %27 = arith.mulf %22, %26 : vector<32x32xf32>
    %28 = vector.broadcast %8 : vector<1x32xf32> to vector<32x32xf32>
    %29 = arith.mulf %27, %28 : vector<32x32xf32>
    %30 = vector.broadcast %9 : vector<1x32xf32> to vector<32x32xf32>
    %31 = arith.addf %29, %30 : vector<32x32xf32>
    %c0_16 = arith.constant 0 : index
    %c0_17 = arith.constant 0 : index
    %32 = vector.load %arg5[%c0_16, %c0_17] : memref<1x32xf32, #tpu.memory_space<vmem>>, vector<1x32xf32>
    %c0_18 = arith.constant 0 : index
    %c0_19 = arith.constant 0 : index
    %33 = vector.load %arg6[%c0_18, %c0_19] : memref<1x32xf32, #tpu.memory_space<vmem>>, vector<1x32xf32>
    %cst_20 = arith.constant dense<0.000000e+00> : vector<32xf32>
    %34 = vector.multi_reduction <add>, %31, %cst_20 [1] : vector<32x32xf32> to vector<32xf32>
    %35 = vector.shape_cast %34 : vector<32xf32> to vector<32x1xf32>
    %cst_21 = arith.constant 3.200000e+01 : f32
    %36 = vector.broadcast %cst_21 : f32 to vector<32x1xf32>
    %37 = arith.divf %35, %36 : vector<32x1xf32>
    %38 = vector.broadcast %37 : vector<32x1xf32> to vector<32x32xf32>
    %39 = arith.subf %31, %38 : vector<32x32xf32>
    %40 = arith.mulf %39, %39 : vector<32x32xf32>
    %cst_22 = arith.constant dense<0.000000e+00> : vector<32xf32>
    %41 = vector.multi_reduction <add>, %40, %cst_22 [1] : vector<32x32xf32> to vector<32xf32>
    %42 = vector.shape_cast %41 : vector<32xf32> to vector<32x1xf32>
    %cst_23 = arith.constant 3.200000e+01 : f32
    %43 = vector.broadcast %cst_23 : f32 to vector<32x1xf32>
    %44 = arith.divf %42, %43 : vector<32x1xf32>
    %45 = vector.broadcast %37 : vector<32x1xf32> to vector<32x32xf32>
    %46 = arith.subf %31, %45 : vector<32x32xf32>
    %cst_24 = arith.constant 9.99999974E-6 : f32
    %47 = vector.broadcast %cst_24 : f32 to vector<32x1xf32>
    %48 = arith.addf %44, %47 : vector<32x1xf32>
    %49 = math.rsqrt %48 : vector<32x1xf32>
    %50 = vector.broadcast %49 : vector<32x1xf32> to vector<32x32xf32>
    %51 = arith.mulf %46, %50 : vector<32x32xf32>
    %52 = vector.broadcast %32 : vector<1x32xf32> to vector<32x32xf32>
    %53 = arith.mulf %51, %52 : vector<32x32xf32>
    %54 = vector.broadcast %33 : vector<1x32xf32> to vector<32x32xf32>
    %55 = arith.addf %53, %54 : vector<32x32xf32>
    %c0_25 = arith.constant 0 : index
    %c0_26 = arith.constant 0 : index
    %56 = vector.load %arg7[%c0_25, %c0_26] : memref<32x96xbf16, #tpu.memory_space<vmem>>, vector<32x96xbf16>
    %57 = arith.truncf %55 : vector<32x32xf32> to vector<32x32xbf16>
    %cst_27 = arith.constant dense<0.000000e+00> : vector<32x96xf32>
    %58 = tpu.matmul %57, %56, %cst_27 {dimension_numbers = #tpu.dot_dimension_numbers<[1], [0], [0], [1], [0, 0, 1, 1], [], []>} : vector<32x32xbf16>, vector<32x96xbf16>, vector<32x96xf32> -> vector<32x96xf32>
    %c0_28 = arith.constant 0 : index
    %c0_29 = arith.constant 0 : index
    %59 = vector.load %arg8[%c0_28, %c0_29] : memref<1x96xf32, #tpu.memory_space<vmem>>, vector<1x96xf32>
    %60 = vector.broadcast %59 : vector<1x96xf32> to vector<32x96xf32>
    %61 = arith.addf %58, %60 : vector<32x96xf32>
    %c0_30 = arith.constant 0 : index
    %c0_31 = arith.constant 0 : index
    %62 = vector.load %arg9[%c0_30, %c0_31] : memref<32x32xbf16, #tpu.memory_space<vmem>>, vector<32x32xbf16>
    %cst_32 = arith.constant 0.000000e+00 : f32
    %63 = vector.broadcast %cst_32 : f32 to vector<32x32xf32>
    %64 = vector.extract_strided_slice %61 {offsets = [0, 0], sizes = [32, 8], strides = [1, 1]} : vector<32x96xf32> to vector<32x8xf32>
    %cst_33 = arith.constant 0.353553385 : f32
    %65 = vector.broadcast %cst_33 : f32 to vector<32x8xf32>
    %66 = arith.mulf %64, %65 : vector<32x8xf32>
    %67 = vector.extract_strided_slice %61 {offsets = [0, 32], sizes = [32, 8], strides = [1, 1]} : vector<32x96xf32> to vector<32x8xf32>
    %68 = vector.extract_strided_slice %61 {offsets = [0, 64], sizes = [32, 8], strides = [1, 1]} : vector<32x96xf32> to vector<32x8xf32>
    %69 = arith.truncf %66 : vector<32x8xf32> to vector<32x8xbf16>
    %70 = arith.truncf %67 : vector<32x8xf32> to vector<32x8xbf16>
    %cst_34 = arith.constant dense<0.000000e+00> : vector<32x32xf32>
    %71 = tpu.matmul %69, %70, %cst_34 {dimension_numbers = #tpu.dot_dimension_numbers<[1], [1], [0], [0], [0, 0, 1, 0], [], []>} : vector<32x8xbf16>, vector<32x8xbf16>, vector<32x32xf32> -> vector<32x32xf32>
    %72 = arith.addf %71, %0 : vector<32x32xf32>
    %cst_35 = arith.constant dense<0xFF800000> : vector<32xf32>
    %73 = vector.multi_reduction <maximumf>, %72, %cst_35 [1] : vector<32x32xf32> to vector<32xf32>
    %74 = vector.shape_cast %73 : vector<32xf32> to vector<32x1xf32>
    %75 = vector.broadcast %74 : vector<32x1xf32> to vector<32x32xf32>
    %76 = arith.subf %72, %75 : vector<32x32xf32>
    %77 = math.exp %76 : vector<32x32xf32>
    %cst_36 = arith.constant dense<0.000000e+00> : vector<32xf32>
    %78 = vector.multi_reduction <add>, %77, %cst_36 [1] : vector<32x32xf32> to vector<32xf32>
    %79 = vector.shape_cast %78 : vector<32xf32> to vector<32x1xf32>
    %80 = tpu.reciprocal %79 {approx = true} : vector<32x1xf32> -> vector<32x1xf32>
    %81 = vector.broadcast %80 : vector<32x1xf32> to vector<32x32xf32>
    %82 = arith.mulf %77, %81 : vector<32x32xf32>
    %83 = arith.truncf %82 : vector<32x32xf32> to vector<32x32xbf16>
    %84 = arith.truncf %68 : vector<32x8xf32> to vector<32x8xbf16>
    %cst_37 = arith.constant dense<0.000000e+00> : vector<32x8xf32>
    %85 = tpu.matmul %83, %84, %cst_37 {dimension_numbers = #tpu.dot_dimension_numbers<[1], [0], [0], [1], [0, 0, 1, 1], [], []>} : vector<32x32xbf16>, vector<32x8xbf16>, vector<32x8xf32> -> vector<32x8xf32>
    %86 = vector.extract_strided_slice %62 {offsets = [0, 0], sizes = [8, 32], strides = [1, 1]} : vector<32x32xbf16> to vector<8x32xbf16>
    %87 = arith.truncf %85 : vector<32x8xf32> to vector<32x8xbf16>
    %cst_38 = arith.constant dense<0.000000e+00> : vector<32x32xf32>
    %88 = tpu.matmul %87, %86, %cst_38 {dimension_numbers = #tpu.dot_dimension_numbers<[1], [0], [0], [1], [0, 0, 1, 1], [], []>} : vector<32x8xbf16>, vector<8x32xbf16>, vector<32x32xf32> -> vector<32x32xf32>
    %89 = arith.addf %63, %88 : vector<32x32xf32>
    %90 = vector.extract_strided_slice %61 {offsets = [0, 8], sizes = [32, 8], strides = [1, 1]} : vector<32x96xf32> to vector<32x8xf32>
    %cst_39 = arith.constant 0.353553385 : f32
    %91 = vector.broadcast %cst_39 : f32 to vector<32x8xf32>
    %92 = arith.mulf %90, %91 : vector<32x8xf32>
    %93 = vector.extract_strided_slice %61 {offsets = [0, 40], sizes = [32, 8], strides = [1, 1]} : vector<32x96xf32> to vector<32x8xf32>
    %94 = vector.extract_strided_slice %61 {offsets = [0, 72], sizes = [32, 8], strides = [1, 1]} : vector<32x96xf32> to vector<32x8xf32>
    %95 = arith.truncf %92 : vector<32x8xf32> to vector<32x8xbf16>
    %96 = arith.truncf %93 : vector<32x8xf32> to vector<32x8xbf16>
    %cst_40 = arith.constant dense<0.000000e+00> : vector<32x32xf32>
    %97 = tpu.matmul %95, %96, %cst_40 {dimension_numbers = #tpu.dot_dimension_numbers<[1], [1], [0], [0], [0, 0, 1, 0], [], []>} : vector<32x8xbf16>, vector<32x8xbf16>, vector<32x32xf32> -> vector<32x32xf32>
    %98 = arith.addf %97, %0 : vector<32x32xf32>
    %cst_41 = arith.constant dense<0xFF800000> : vector<32xf32>
    %99 = vector.multi_reduction <maximumf>, %98, %cst_41 [1] : vector<32x32xf32> to vector<32xf32>
    %100 = vector.shape_cast %99 : vector<32xf32> to vector<32x1xf32>
    %101 = vector.broadcast %100 : vector<32x1xf32> to vector<32x32xf32>
    %102 = arith.subf %98, %101 : vector<32x32xf32>
    %103 = math.exp %102 : vector<32x32xf32>
    %cst_42 = arith.constant dense<0.000000e+00> : vector<32xf32>
    %104 = vector.multi_reduction <add>, %103, %cst_42 [1] : vector<32x32xf32> to vector<32xf32>
    %105 = vector.shape_cast %104 : vector<32xf32> to vector<32x1xf32>
    %106 = tpu.reciprocal %105 {approx = true} : vector<32x1xf32> -> vector<32x1xf32>
    %107 = vector.broadcast %106 : vector<32x1xf32> to vector<32x32xf32>
    %108 = arith.mulf %103, %107 : vector<32x32xf32>
    %109 = arith.truncf %108 : vector<32x32xf32> to vector<32x32xbf16>
    %110 = arith.truncf %94 : vector<32x8xf32> to vector<32x8xbf16>
    %cst_43 = arith.constant dense<0.000000e+00> : vector<32x8xf32>
    %111 = tpu.matmul %109, %110, %cst_43 {dimension_numbers = #tpu.dot_dimension_numbers<[1], [0], [0], [1], [0, 0, 1, 1], [], []>} : vector<32x32xbf16>, vector<32x8xbf16>, vector<32x8xf32> -> vector<32x8xf32>
    %112 = vector.extract_strided_slice %62 {offsets = [8, 0], sizes = [8, 32], strides = [1, 1]} : vector<32x32xbf16> to vector<8x32xbf16>
    %113 = arith.truncf %111 : vector<32x8xf32> to vector<32x8xbf16>
    %cst_44 = arith.constant dense<0.000000e+00> : vector<32x32xf32>
    %114 = tpu.matmul %113, %112, %cst_44 {dimension_numbers = #tpu.dot_dimension_numbers<[1], [0], [0], [1], [0, 0, 1, 1], [], []>} : vector<32x8xbf16>, vector<8x32xbf16>, vector<32x32xf32> -> vector<32x32xf32>
    %115 = arith.addf %89, %114 : vector<32x32xf32>
    %116 = vector.extract_strided_slice %61 {offsets = [0, 16], sizes = [32, 8], strides = [1, 1]} : vector<32x96xf32> to vector<32x8xf32>
    %cst_45 = arith.constant 0.353553385 : f32
    %117 = vector.broadcast %cst_45 : f32 to vector<32x8xf32>
    %118 = arith.mulf %116, %117 : vector<32x8xf32>
    %119 = vector.extract_strided_slice %61 {offsets = [0, 48], sizes = [32, 8], strides = [1, 1]} : vector<32x96xf32> to vector<32x8xf32>
    %120 = vector.extract_strided_slice %61 {offsets = [0, 80], sizes = [32, 8], strides = [1, 1]} : vector<32x96xf32> to vector<32x8xf32>
    %121 = arith.truncf %118 : vector<32x8xf32> to vector<32x8xbf16>
    %122 = arith.truncf %119 : vector<32x8xf32> to vector<32x8xbf16>
    %cst_46 = arith.constant dense<0.000000e+00> : vector<32x32xf32>
    %123 = tpu.matmul %121, %122, %cst_46 {dimension_numbers = #tpu.dot_dimension_numbers<[1], [1], [0], [0], [0, 0, 1, 0], [], []>} : vector<32x8xbf16>, vector<32x8xbf16>, vector<32x32xf32> -> vector<32x32xf32>
    %124 = arith.addf %123, %0 : vector<32x32xf32>
    %cst_47 = arith.constant dense<0xFF800000> : vector<32xf32>
    %125 = vector.multi_reduction <maximumf>, %124, %cst_47 [1] : vector<32x32xf32> to vector<32xf32>
    %126 = vector.shape_cast %125 : vector<32xf32> to vector<32x1xf32>
    %127 = vector.broadcast %126 : vector<32x1xf32> to vector<32x32xf32>
    %128 = arith.subf %124, %127 : vector<32x32xf32>
    %129 = math.exp %128 : vector<32x32xf32>
    %cst_48 = arith.constant dense<0.000000e+00> : vector<32xf32>
    %130 = vector.multi_reduction <add>, %129, %cst_48 [1] : vector<32x32xf32> to vector<32xf32>
    %131 = vector.shape_cast %130 : vector<32xf32> to vector<32x1xf32>
    %132 = tpu.reciprocal %131 {approx = true} : vector<32x1xf32> -> vector<32x1xf32>
    %133 = vector.broadcast %132 : vector<32x1xf32> to vector<32x32xf32>
    %134 = arith.mulf %129, %133 : vector<32x32xf32>
    %135 = arith.truncf %134 : vector<32x32xf32> to vector<32x32xbf16>
    %136 = arith.truncf %120 : vector<32x8xf32> to vector<32x8xbf16>
    %cst_49 = arith.constant dense<0.000000e+00> : vector<32x8xf32>
    %137 = tpu.matmul %135, %136, %cst_49 {dimension_numbers = #tpu.dot_dimension_numbers<[1], [0], [0], [1], [0, 0, 1, 1], [], []>} : vector<32x32xbf16>, vector<32x8xbf16>, vector<32x8xf32> -> vector<32x8xf32>
    %138 = vector.extract_strided_slice %62 {offsets = [16, 0], sizes = [8, 32], strides = [1, 1]} : vector<32x32xbf16> to vector<8x32xbf16>
    %139 = arith.truncf %137 : vector<32x8xf32> to vector<32x8xbf16>
    %cst_50 = arith.constant dense<0.000000e+00> : vector<32x32xf32>
    %140 = tpu.matmul %139, %138, %cst_50 {dimension_numbers = #tpu.dot_dimension_numbers<[1], [0], [0], [1], [0, 0, 1, 1], [], []>} : vector<32x8xbf16>, vector<8x32xbf16>, vector<32x32xf32> -> vector<32x32xf32>
    %141 = arith.addf %115, %140 : vector<32x32xf32>
    %142 = vector.extract_strided_slice %61 {offsets = [0, 24], sizes = [32, 8], strides = [1, 1]} : vector<32x96xf32> to vector<32x8xf32>
    %cst_51 = arith.constant 0.353553385 : f32
    %143 = vector.broadcast %cst_51 : f32 to vector<32x8xf32>
    %144 = arith.mulf %142, %143 : vector<32x8xf32>
    %145 = vector.extract_strided_slice %61 {offsets = [0, 56], sizes = [32, 8], strides = [1, 1]} : vector<32x96xf32> to vector<32x8xf32>
    %146 = vector.extract_strided_slice %61 {offsets = [0, 88], sizes = [32, 8], strides = [1, 1]} : vector<32x96xf32> to vector<32x8xf32>
    %147 = arith.truncf %144 : vector<32x8xf32> to vector<32x8xbf16>
    %148 = arith.truncf %145 : vector<32x8xf32> to vector<32x8xbf16>
    %cst_52 = arith.constant dense<0.000000e+00> : vector<32x32xf32>
    %149 = tpu.matmul %147, %148, %cst_52 {dimension_numbers = #tpu.dot_dimension_numbers<[1], [1], [0], [0], [0, 0, 1, 0], [], []>} : vector<32x8xbf16>, vector<32x8xbf16>, vector<32x32xf32> -> vector<32x32xf32>
    %150 = arith.addf %149, %0 : vector<32x32xf32>
    %cst_53 = arith.constant dense<0xFF800000> : vector<32xf32>
    %151 = vector.multi_reduction <maximumf>, %150, %cst_53 [1] : vector<32x32xf32> to vector<32xf32>
    %152 = vector.shape_cast %151 : vector<32xf32> to vector<32x1xf32>
    %153 = vector.broadcast %152 : vector<32x1xf32> to vector<32x32xf32>
    %154 = arith.subf %150, %153 : vector<32x32xf32>
    %155 = math.exp %154 : vector<32x32xf32>
    %cst_54 = arith.constant dense<0.000000e+00> : vector<32xf32>
    %156 = vector.multi_reduction <add>, %155, %cst_54 [1] : vector<32x32xf32> to vector<32xf32>
    %157 = vector.shape_cast %156 : vector<32xf32> to vector<32x1xf32>
    %158 = tpu.reciprocal %157 {approx = true} : vector<32x1xf32> -> vector<32x1xf32>
    %159 = vector.broadcast %158 : vector<32x1xf32> to vector<32x32xf32>
    %160 = arith.mulf %155, %159 : vector<32x32xf32>
    %161 = arith.truncf %160 : vector<32x32xf32> to vector<32x32xbf16>
    %162 = arith.truncf %146 : vector<32x8xf32> to vector<32x8xbf16>
    %cst_55 = arith.constant dense<0.000000e+00> : vector<32x8xf32>
    %163 = tpu.matmul %161, %162, %cst_55 {dimension_numbers = #tpu.dot_dimension_numbers<[1], [0], [0], [1], [0, 0, 1, 1], [], []>} : vector<32x32xbf16>, vector<32x8xbf16>, vector<32x8xf32> -> vector<32x8xf32>
    %164 = vector.extract_strided_slice %62 {offsets = [24, 0], sizes = [8, 32], strides = [1, 1]} : vector<32x32xbf16> to vector<8x32xbf16>
    %165 = arith.truncf %163 : vector<32x8xf32> to vector<32x8xbf16>
    %cst_56 = arith.constant dense<0.000000e+00> : vector<32x32xf32>
    %166 = tpu.matmul %165, %164, %cst_56 {dimension_numbers = #tpu.dot_dimension_numbers<[1], [0], [0], [1], [0, 0, 1, 1], [], []>} : vector<32x8xbf16>, vector<8x32xbf16>, vector<32x32xf32> -> vector<32x32xf32>
    %167 = arith.addf %141, %166 : vector<32x32xf32>
    %168 = arith.addf %31, %167 : vector<32x32xf32>
    %c0_57 = arith.constant 0 : index
    %c0_58 = arith.constant 0 : index
    %169 = vector.load %arg10[%c0_57, %c0_58] : memref<1x32xf32, #tpu.memory_space<vmem>>, vector<1x32xf32>
    %170 = vector.broadcast %169 : vector<1x32xf32> to vector<32x32xf32>
    %171 = arith.addf %168, %170 : vector<32x32xf32>
    %c0_59 = arith.constant 0 : index
    %c0_60 = arith.constant 0 : index
    %172 = vector.load %arg11[%c0_59, %c0_60] : memref<1x32xf32, #tpu.memory_space<vmem>>, vector<1x32xf32>
    %c0_61 = arith.constant 0 : index
    %c0_62 = arith.constant 0 : index
    %173 = vector.load %arg12[%c0_61, %c0_62] : memref<1x32xf32, #tpu.memory_space<vmem>>, vector<1x32xf32>
    %cst_63 = arith.constant dense<0.000000e+00> : vector<32xf32>
    %174 = vector.multi_reduction <add>, %171, %cst_63 [1] : vector<32x32xf32> to vector<32xf32>
    %175 = vector.shape_cast %174 : vector<32xf32> to vector<32x1xf32>
    %cst_64 = arith.constant 3.200000e+01 : f32
    %176 = vector.broadcast %cst_64 : f32 to vector<32x1xf32>
    %177 = arith.divf %175, %176 : vector<32x1xf32>
    %178 = vector.broadcast %177 : vector<32x1xf32> to vector<32x32xf32>
    %179 = arith.subf %171, %178 : vector<32x32xf32>
    %180 = arith.mulf %179, %179 : vector<32x32xf32>
    %cst_65 = arith.constant dense<0.000000e+00> : vector<32xf32>
    %181 = vector.multi_reduction <add>, %180, %cst_65 [1] : vector<32x32xf32> to vector<32xf32>
    %182 = vector.shape_cast %181 : vector<32xf32> to vector<32x1xf32>
    %cst_66 = arith.constant 3.200000e+01 : f32
    %183 = vector.broadcast %cst_66 : f32 to vector<32x1xf32>
    %184 = arith.divf %182, %183 : vector<32x1xf32>
    %185 = vector.broadcast %177 : vector<32x1xf32> to vector<32x32xf32>
    %186 = arith.subf %171, %185 : vector<32x32xf32>
    %cst_67 = arith.constant 9.99999974E-6 : f32
    %187 = vector.broadcast %cst_67 : f32 to vector<32x1xf32>
    %188 = arith.addf %184, %187 : vector<32x1xf32>
    %189 = math.rsqrt %188 : vector<32x1xf32>
    %190 = vector.broadcast %189 : vector<32x1xf32> to vector<32x32xf32>
    %191 = arith.mulf %186, %190 : vector<32x32xf32>
    %192 = vector.broadcast %172 : vector<1x32xf32> to vector<32x32xf32>
    %193 = arith.mulf %191, %192 : vector<32x32xf32>
    %194 = vector.broadcast %173 : vector<1x32xf32> to vector<32x32xf32>
    %195 = arith.addf %193, %194 : vector<32x32xf32>
    %c0_68 = arith.constant 0 : index
    %c0_69 = arith.constant 0 : index
    %196 = vector.load %arg13[%c0_68, %c0_69] : memref<32x128xbf16, #tpu.memory_space<vmem>>, vector<32x128xbf16>
    %197 = arith.truncf %195 : vector<32x32xf32> to vector<32x32xbf16>
    %cst_70 = arith.constant dense<0.000000e+00> : vector<32x128xf32>
    %198 = tpu.matmul %197, %196, %cst_70 {dimension_numbers = #tpu.dot_dimension_numbers<[1], [0], [0], [1], [0, 0, 1, 1], [], []>} : vector<32x32xbf16>, vector<32x128xbf16>, vector<32x128xf32> -> vector<32x128xf32>
    %c0_71 = arith.constant 0 : index
    %c0_72 = arith.constant 0 : index
    %199 = vector.load %arg14[%c0_71, %c0_72] : memref<1x128xf32, #tpu.memory_space<vmem>>, vector<1x128xf32>
    %200 = vector.broadcast %199 : vector<1x128xf32> to vector<32x128xf32>
    %201 = arith.addf %198, %200 : vector<32x128xf32>
    %cst_73 = arith.constant 5.000000e-01 : f32
    %202 = vector.broadcast %cst_73 : f32 to vector<32x128xf32>
    %203 = arith.mulf %202, %201 : vector<32x128xf32>
    %cst_74 = arith.constant 0.707106769 : f32
    %204 = vector.broadcast %cst_74 : f32 to vector<32x128xf32>
    %205 = arith.mulf %201, %204 : vector<32x128xf32>
    %cst_75 = arith.constant 0.000000e+00 : f32
    %206 = vector.broadcast %cst_75 : f32 to vector<32x128xf32>
    %207 = arith.cmpf oge, %205, %206 : vector<32x128xf32>
    %cst_76 = arith.constant 1.000000e+00 : f32
    %cst_77 = arith.constant -1.000000e+00 : f32
    %208 = vector.broadcast %cst_76 : f32 to vector<32x128xf32>
    %209 = vector.broadcast %cst_77 : f32 to vector<32x128xf32>
    %210 = arith.select %207, %208, %209 : vector<32x128xi1>, vector<32x128xf32>
    %211 = math.absf %205 : vector<32x128xf32>
    %cst_78 = arith.constant 0.327591091 : f32
    %212 = vector.broadcast %cst_78 : f32 to vector<32x128xf32>
    %213 = arith.mulf %212, %211 : vector<32x128xf32>
    %cst_79 = arith.constant 1.000000e+00 : f32
    %214 = vector.broadcast %cst_79 : f32 to vector<32x128xf32>
    %215 = arith.addf %214, %213 : vector<32x128xf32>
    %cst_80 = arith.constant 1.000000e+00 : f32
    %216 = vector.broadcast %cst_80 : f32 to vector<32x128xf32>
    %217 = arith.divf %216, %215 : vector<32x128xf32>
    %cst_81 = arith.constant 1.06140542 : f32
    %218 = vector.broadcast %cst_81 : f32 to vector<32x128xf32>
    %219 = arith.mulf %218, %217 : vector<32x128xf32>
    %cst_82 = arith.constant -1.45315206 : f32
    %220 = vector.broadcast %cst_82 : f32 to vector<32x128xf32>
    %221 = arith.addf %219, %220 : vector<32x128xf32>
    %222 = arith.mulf %221, %217 : vector<32x128xf32>
    %cst_83 = arith.constant 1.42141378 : f32
    %223 = vector.broadcast %cst_83 : f32 to vector<32x128xf32>
    %224 = arith.addf %222, %223 : vector<32x128xf32>
    %225 = arith.mulf %224, %217 : vector<32x128xf32>
    %cst_84 = arith.constant -0.284496725 : f32
    %226 = vector.broadcast %cst_84 : f32 to vector<32x128xf32>
    %227 = arith.addf %225, %226 : vector<32x128xf32>
    %228 = arith.mulf %227, %217 : vector<32x128xf32>
    %cst_85 = arith.constant 0.254829586 : f32
    %229 = vector.broadcast %cst_85 : f32 to vector<32x128xf32>
    %230 = arith.addf %228, %229 : vector<32x128xf32>
    %231 = arith.mulf %230, %217 : vector<32x128xf32>
    %cst_86 = arith.constant 0.000000e+00 : f32
    %232 = vector.broadcast %cst_86 : f32 to vector<32x128xf32>
    %233 = arith.subf %232, %211 : vector<32x128xf32>
    %234 = arith.mulf %233, %211 : vector<32x128xf32>
    %235 = math.exp %234 : vector<32x128xf32>
    %236 = arith.mulf %231, %235 : vector<32x128xf32>
    %cst_87 = arith.constant 1.000000e+00 : f32
    %237 = vector.broadcast %cst_87 : f32 to vector<32x128xf32>
    %238 = arith.subf %237, %236 : vector<32x128xf32>
    %239 = arith.mulf %210, %238 : vector<32x128xf32>
    %cst_88 = arith.constant 1.000000e+00 : f32
    %240 = vector.broadcast %cst_88 : f32 to vector<32x128xf32>
    %241 = arith.addf %240, %239 : vector<32x128xf32>
    %242 = arith.mulf %203, %241 : vector<32x128xf32>
    %c0_89 = arith.constant 0 : index
    %c0_90 = arith.constant 0 : index
    %243 = vector.load %arg15[%c0_89, %c0_90] : memref<128x32xbf16, #tpu.memory_space<vmem>>, vector<128x32xbf16>
    %244 = arith.truncf %242 : vector<32x128xf32> to vector<32x128xbf16>
    %cst_91 = arith.constant dense<0.000000e+00> : vector<32x32xf32>
    %245 = tpu.matmul %244, %243, %cst_91 {dimension_numbers = #tpu.dot_dimension_numbers<[1], [0], [0], [1], [0, 0, 1, 1], [], []>} : vector<32x128xbf16>, vector<128x32xbf16>, vector<32x32xf32> -> vector<32x32xf32>
    %246 = arith.addf %171, %245 : vector<32x32xf32>
    %c0_92 = arith.constant 0 : index
    %c0_93 = arith.constant 0 : index
    %247 = vector.load %arg16[%c0_92, %c0_93] : memref<1x32xf32, #tpu.memory_space<vmem>>, vector<1x32xf32>
    %248 = vector.broadcast %247 : vector<1x32xf32> to vector<32x32xf32>
    %249 = arith.addf %246, %248 : vector<32x32xf32>
    %c0_94 = arith.constant 0 : index
    %c0_95 = arith.constant 0 : index
    %250 = vector.load %arg17[%c0_94, %c0_95] : memref<1x32xf32, #tpu.memory_space<vmem>>, vector<1x32xf32>
    %c0_96 = arith.constant 0 : index
    %c0_97 = arith.constant 0 : index
    %251 = vector.load %arg18[%c0_96, %c0_97] : memref<1x32xf32, #tpu.memory_space<vmem>>, vector<1x32xf32>
    %cst_98 = arith.constant dense<0.000000e+00> : vector<32xf32>
    %252 = vector.multi_reduction <add>, %249, %cst_98 [1] : vector<32x32xf32> to vector<32xf32>
    %253 = vector.shape_cast %252 : vector<32xf32> to vector<32x1xf32>
    %cst_99 = arith.constant 3.200000e+01 : f32
    %254 = vector.broadcast %cst_99 : f32 to vector<32x1xf32>
    %255 = arith.divf %253, %254 : vector<32x1xf32>
    %256 = vector.broadcast %255 : vector<32x1xf32> to vector<32x32xf32>
    %257 = arith.subf %249, %256 : vector<32x32xf32>
    %258 = arith.mulf %257, %257 : vector<32x32xf32>
    %cst_100 = arith.constant dense<0.000000e+00> : vector<32xf32>
    %259 = vector.multi_reduction <add>, %258, %cst_100 [1] : vector<32x32xf32> to vector<32xf32>
    %260 = vector.shape_cast %259 : vector<32xf32> to vector<32x1xf32>
    %cst_101 = arith.constant 3.200000e+01 : f32
    %261 = vector.broadcast %cst_101 : f32 to vector<32x1xf32>
    %262 = arith.divf %260, %261 : vector<32x1xf32>
    %263 = vector.broadcast %255 : vector<32x1xf32> to vector<32x32xf32>
    %264 = arith.subf %249, %263 : vector<32x32xf32>
    %cst_102 = arith.constant 9.99999974E-6 : f32
    %265 = vector.broadcast %cst_102 : f32 to vector<32x1xf32>
    %266 = arith.addf %262, %265 : vector<32x1xf32>
    %267 = math.rsqrt %266 : vector<32x1xf32>
    %268 = vector.broadcast %267 : vector<32x1xf32> to vector<32x32xf32>
    %269 = arith.mulf %264, %268 : vector<32x32xf32>
    %270 = vector.broadcast %250 : vector<1x32xf32> to vector<32x32xf32>
    %271 = arith.mulf %269, %270 : vector<32x32xf32>
    %272 = vector.broadcast %251 : vector<1x32xf32> to vector<32x32xf32>
    %273 = arith.addf %271, %272 : vector<32x32xf32>
    %c0_103 = arith.constant 0 : index
    %c0_104 = arith.constant 0 : index
    %274 = vector.load %arg19[%c0_103, %c0_104] : memref<32x96xbf16, #tpu.memory_space<vmem>>, vector<32x96xbf16>
    %275 = arith.truncf %273 : vector<32x32xf32> to vector<32x32xbf16>
    %cst_105 = arith.constant dense<0.000000e+00> : vector<32x96xf32>
    %276 = tpu.matmul %275, %274, %cst_105 {dimension_numbers = #tpu.dot_dimension_numbers<[1], [0], [0], [1], [0, 0, 1, 1], [], []>} : vector<32x32xbf16>, vector<32x96xbf16>, vector<32x96xf32> -> vector<32x96xf32>
    %c0_106 = arith.constant 0 : index
    %c0_107 = arith.constant 0 : index
    %277 = vector.load %arg20[%c0_106, %c0_107] : memref<1x96xf32, #tpu.memory_space<vmem>>, vector<1x96xf32>
    %278 = vector.broadcast %277 : vector<1x96xf32> to vector<32x96xf32>
    %279 = arith.addf %276, %278 : vector<32x96xf32>
    %c0_108 = arith.constant 0 : index
    %c0_109 = arith.constant 0 : index
    %280 = vector.load %arg21[%c0_108, %c0_109] : memref<32x32xbf16, #tpu.memory_space<vmem>>, vector<32x32xbf16>
    %cst_110 = arith.constant 0.000000e+00 : f32
    %281 = vector.broadcast %cst_110 : f32 to vector<32x32xf32>
    %282 = vector.extract_strided_slice %279 {offsets = [0, 0], sizes = [32, 8], strides = [1, 1]} : vector<32x96xf32> to vector<32x8xf32>
    %cst_111 = arith.constant 0.353553385 : f32
    %283 = vector.broadcast %cst_111 : f32 to vector<32x8xf32>
    %284 = arith.mulf %282, %283 : vector<32x8xf32>
    %285 = vector.extract_strided_slice %279 {offsets = [0, 32], sizes = [32, 8], strides = [1, 1]} : vector<32x96xf32> to vector<32x8xf32>
    %286 = vector.extract_strided_slice %279 {offsets = [0, 64], sizes = [32, 8], strides = [1, 1]} : vector<32x96xf32> to vector<32x8xf32>
    %287 = arith.truncf %284 : vector<32x8xf32> to vector<32x8xbf16>
    %288 = arith.truncf %285 : vector<32x8xf32> to vector<32x8xbf16>
    %cst_112 = arith.constant dense<0.000000e+00> : vector<32x32xf32>
    %289 = tpu.matmul %287, %288, %cst_112 {dimension_numbers = #tpu.dot_dimension_numbers<[1], [1], [0], [0], [0, 0, 1, 0], [], []>} : vector<32x8xbf16>, vector<32x8xbf16>, vector<32x32xf32> -> vector<32x32xf32>
    %290 = arith.addf %289, %0 : vector<32x32xf32>
    %cst_113 = arith.constant dense<0xFF800000> : vector<32xf32>
    %291 = vector.multi_reduction <maximumf>, %290, %cst_113 [1] : vector<32x32xf32> to vector<32xf32>
    %292 = vector.shape_cast %291 : vector<32xf32> to vector<32x1xf32>
    %293 = vector.broadcast %292 : vector<32x1xf32> to vector<32x32xf32>
    %294 = arith.subf %290, %293 : vector<32x32xf32>
    %295 = math.exp %294 : vector<32x32xf32>
    %cst_114 = arith.constant dense<0.000000e+00> : vector<32xf32>
    %296 = vector.multi_reduction <add>, %295, %cst_114 [1] : vector<32x32xf32> to vector<32xf32>
    %297 = vector.shape_cast %296 : vector<32xf32> to vector<32x1xf32>
    %298 = tpu.reciprocal %297 {approx = true} : vector<32x1xf32> -> vector<32x1xf32>
    %299 = vector.broadcast %298 : vector<32x1xf32> to vector<32x32xf32>
    %300 = arith.mulf %295, %299 : vector<32x32xf32>
    %301 = arith.truncf %300 : vector<32x32xf32> to vector<32x32xbf16>
    %302 = arith.truncf %286 : vector<32x8xf32> to vector<32x8xbf16>
    %cst_115 = arith.constant dense<0.000000e+00> : vector<32x8xf32>
    %303 = tpu.matmul %301, %302, %cst_115 {dimension_numbers = #tpu.dot_dimension_numbers<[1], [0], [0], [1], [0, 0, 1, 1], [], []>} : vector<32x32xbf16>, vector<32x8xbf16>, vector<32x8xf32> -> vector<32x8xf32>
    %304 = vector.extract_strided_slice %280 {offsets = [0, 0], sizes = [8, 32], strides = [1, 1]} : vector<32x32xbf16> to vector<8x32xbf16>
    %305 = arith.truncf %303 : vector<32x8xf32> to vector<32x8xbf16>
    %cst_116 = arith.constant dense<0.000000e+00> : vector<32x32xf32>
    %306 = tpu.matmul %305, %304, %cst_116 {dimension_numbers = #tpu.dot_dimension_numbers<[1], [0], [0], [1], [0, 0, 1, 1], [], []>} : vector<32x8xbf16>, vector<8x32xbf16>, vector<32x32xf32> -> vector<32x32xf32>
    %307 = arith.addf %281, %306 : vector<32x32xf32>
    %308 = vector.extract_strided_slice %279 {offsets = [0, 8], sizes = [32, 8], strides = [1, 1]} : vector<32x96xf32> to vector<32x8xf32>
    %cst_117 = arith.constant 0.353553385 : f32
    %309 = vector.broadcast %cst_117 : f32 to vector<32x8xf32>
    %310 = arith.mulf %308, %309 : vector<32x8xf32>
    %311 = vector.extract_strided_slice %279 {offsets = [0, 40], sizes = [32, 8], strides = [1, 1]} : vector<32x96xf32> to vector<32x8xf32>
    %312 = vector.extract_strided_slice %279 {offsets = [0, 72], sizes = [32, 8], strides = [1, 1]} : vector<32x96xf32> to vector<32x8xf32>
    %313 = arith.truncf %310 : vector<32x8xf32> to vector<32x8xbf16>
    %314 = arith.truncf %311 : vector<32x8xf32> to vector<32x8xbf16>
    %cst_118 = arith.constant dense<0.000000e+00> : vector<32x32xf32>
    %315 = tpu.matmul %313, %314, %cst_118 {dimension_numbers = #tpu.dot_dimension_numbers<[1], [1], [0], [0], [0, 0, 1, 0], [], []>} : vector<32x8xbf16>, vector<32x8xbf16>, vector<32x32xf32> -> vector<32x32xf32>
    %316 = arith.addf %315, %0 : vector<32x32xf32>
    %cst_119 = arith.constant dense<0xFF800000> : vector<32xf32>
    %317 = vector.multi_reduction <maximumf>, %316, %cst_119 [1] : vector<32x32xf32> to vector<32xf32>
    %318 = vector.shape_cast %317 : vector<32xf32> to vector<32x1xf32>
    %319 = vector.broadcast %318 : vector<32x1xf32> to vector<32x32xf32>
    %320 = arith.subf %316, %319 : vector<32x32xf32>
    %321 = math.exp %320 : vector<32x32xf32>
    %cst_120 = arith.constant dense<0.000000e+00> : vector<32xf32>
    %322 = vector.multi_reduction <add>, %321, %cst_120 [1] : vector<32x32xf32> to vector<32xf32>
    %323 = vector.shape_cast %322 : vector<32xf32> to vector<32x1xf32>
    %324 = tpu.reciprocal %323 {approx = true} : vector<32x1xf32> -> vector<32x1xf32>
    %325 = vector.broadcast %324 : vector<32x1xf32> to vector<32x32xf32>
    %326 = arith.mulf %321, %325 : vector<32x32xf32>
    %327 = arith.truncf %326 : vector<32x32xf32> to vector<32x32xbf16>
    %328 = arith.truncf %312 : vector<32x8xf32> to vector<32x8xbf16>
    %cst_121 = arith.constant dense<0.000000e+00> : vector<32x8xf32>
    %329 = tpu.matmul %327, %328, %cst_121 {dimension_numbers = #tpu.dot_dimension_numbers<[1], [0], [0], [1], [0, 0, 1, 1], [], []>} : vector<32x32xbf16>, vector<32x8xbf16>, vector<32x8xf32> -> vector<32x8xf32>
    %330 = vector.extract_strided_slice %280 {offsets = [8, 0], sizes = [8, 32], strides = [1, 1]} : vector<32x32xbf16> to vector<8x32xbf16>
    %331 = arith.truncf %329 : vector<32x8xf32> to vector<32x8xbf16>
    %cst_122 = arith.constant dense<0.000000e+00> : vector<32x32xf32>
    %332 = tpu.matmul %331, %330, %cst_122 {dimension_numbers = #tpu.dot_dimension_numbers<[1], [0], [0], [1], [0, 0, 1, 1], [], []>} : vector<32x8xbf16>, vector<8x32xbf16>, vector<32x32xf32> -> vector<32x32xf32>
    %333 = arith.addf %307, %332 : vector<32x32xf32>
    %334 = vector.extract_strided_slice %279 {offsets = [0, 16], sizes = [32, 8], strides = [1, 1]} : vector<32x96xf32> to vector<32x8xf32>
    %cst_123 = arith.constant 0.353553385 : f32
    %335 = vector.broadcast %cst_123 : f32 to vector<32x8xf32>
    %336 = arith.mulf %334, %335 : vector<32x8xf32>
    %337 = vector.extract_strided_slice %279 {offsets = [0, 48], sizes = [32, 8], strides = [1, 1]} : vector<32x96xf32> to vector<32x8xf32>
    %338 = vector.extract_strided_slice %279 {offsets = [0, 80], sizes = [32, 8], strides = [1, 1]} : vector<32x96xf32> to vector<32x8xf32>
    %339 = arith.truncf %336 : vector<32x8xf32> to vector<32x8xbf16>
    %340 = arith.truncf %337 : vector<32x8xf32> to vector<32x8xbf16>
    %cst_124 = arith.constant dense<0.000000e+00> : vector<32x32xf32>
    %341 = tpu.matmul %339, %340, %cst_124 {dimension_numbers = #tpu.dot_dimension_numbers<[1], [1], [0], [0], [0, 0, 1, 0], [], []>} : vector<32x8xbf16>, vector<32x8xbf16>, vector<32x32xf32> -> vector<32x32xf32>
    %342 = arith.addf %341, %0 : vector<32x32xf32>
    %cst_125 = arith.constant dense<0xFF800000> : vector<32xf32>
    %343 = vector.multi_reduction <maximumf>, %342, %cst_125 [1] : vector<32x32xf32> to vector<32xf32>
    %344 = vector.shape_cast %343 : vector<32xf32> to vector<32x1xf32>
    %345 = vector.broadcast %344 : vector<32x1xf32> to vector<32x32xf32>
    %346 = arith.subf %342, %345 : vector<32x32xf32>
    %347 = math.exp %346 : vector<32x32xf32>
    %cst_126 = arith.constant dense<0.000000e+00> : vector<32xf32>
    %348 = vector.multi_reduction <add>, %347, %cst_126 [1] : vector<32x32xf32> to vector<32xf32>
    %349 = vector.shape_cast %348 : vector<32xf32> to vector<32x1xf32>
    %350 = tpu.reciprocal %349 {approx = true} : vector<32x1xf32> -> vector<32x1xf32>
    %351 = vector.broadcast %350 : vector<32x1xf32> to vector<32x32xf32>
    %352 = arith.mulf %347, %351 : vector<32x32xf32>
    %353 = arith.truncf %352 : vector<32x32xf32> to vector<32x32xbf16>
    %354 = arith.truncf %338 : vector<32x8xf32> to vector<32x8xbf16>
    %cst_127 = arith.constant dense<0.000000e+00> : vector<32x8xf32>
    %355 = tpu.matmul %353, %354, %cst_127 {dimension_numbers = #tpu.dot_dimension_numbers<[1], [0], [0], [1], [0, 0, 1, 1], [], []>} : vector<32x32xbf16>, vector<32x8xbf16>, vector<32x8xf32> -> vector<32x8xf32>
    %356 = vector.extract_strided_slice %280 {offsets = [16, 0], sizes = [8, 32], strides = [1, 1]} : vector<32x32xbf16> to vector<8x32xbf16>
    %357 = arith.truncf %355 : vector<32x8xf32> to vector<32x8xbf16>
    %cst_128 = arith.constant dense<0.000000e+00> : vector<32x32xf32>
    %358 = tpu.matmul %357, %356, %cst_128 {dimension_numbers = #tpu.dot_dimension_numbers<[1], [0], [0], [1], [0, 0, 1, 1], [], []>} : vector<32x8xbf16>, vector<8x32xbf16>, vector<32x32xf32> -> vector<32x32xf32>
    %359 = arith.addf %333, %358 : vector<32x32xf32>
    %360 = vector.extract_strided_slice %279 {offsets = [0, 24], sizes = [32, 8], strides = [1, 1]} : vector<32x96xf32> to vector<32x8xf32>
    %cst_129 = arith.constant 0.353553385 : f32
    %361 = vector.broadcast %cst_129 : f32 to vector<32x8xf32>
    %362 = arith.mulf %360, %361 : vector<32x8xf32>
    %363 = vector.extract_strided_slice %279 {offsets = [0, 56], sizes = [32, 8], strides = [1, 1]} : vector<32x96xf32> to vector<32x8xf32>
    %364 = vector.extract_strided_slice %279 {offsets = [0, 88], sizes = [32, 8], strides = [1, 1]} : vector<32x96xf32> to vector<32x8xf32>
    %365 = arith.truncf %362 : vector<32x8xf32> to vector<32x8xbf16>
    %366 = arith.truncf %363 : vector<32x8xf32> to vector<32x8xbf16>
    %cst_130 = arith.constant dense<0.000000e+00> : vector<32x32xf32>
    %367 = tpu.matmul %365, %366, %cst_130 {dimension_numbers = #tpu.dot_dimension_numbers<[1], [1], [0], [0], [0, 0, 1, 0], [], []>} : vector<32x8xbf16>, vector<32x8xbf16>, vector<32x32xf32> -> vector<32x32xf32>
    %368 = arith.addf %367, %0 : vector<32x32xf32>
    %cst_131 = arith.constant dense<0xFF800000> : vector<32xf32>
    %369 = vector.multi_reduction <maximumf>, %368, %cst_131 [1] : vector<32x32xf32> to vector<32xf32>
    %370 = vector.shape_cast %369 : vector<32xf32> to vector<32x1xf32>
    %371 = vector.broadcast %370 : vector<32x1xf32> to vector<32x32xf32>
    %372 = arith.subf %368, %371 : vector<32x32xf32>
    %373 = math.exp %372 : vector<32x32xf32>
    %cst_132 = arith.constant dense<0.000000e+00> : vector<32xf32>
    %374 = vector.multi_reduction <add>, %373, %cst_132 [1] : vector<32x32xf32> to vector<32xf32>
    %375 = vector.shape_cast %374 : vector<32xf32> to vector<32x1xf32>
    %376 = tpu.reciprocal %375 {approx = true} : vector<32x1xf32> -> vector<32x1xf32>
    %377 = vector.broadcast %376 : vector<32x1xf32> to vector<32x32xf32>
    %378 = arith.mulf %373, %377 : vector<32x32xf32>
    %379 = arith.truncf %378 : vector<32x32xf32> to vector<32x32xbf16>
    %380 = arith.truncf %364 : vector<32x8xf32> to vector<32x8xbf16>
    %cst_133 = arith.constant dense<0.000000e+00> : vector<32x8xf32>
    %381 = tpu.matmul %379, %380, %cst_133 {dimension_numbers = #tpu.dot_dimension_numbers<[1], [0], [0], [1], [0, 0, 1, 1], [], []>} : vector<32x32xbf16>, vector<32x8xbf16>, vector<32x8xf32> -> vector<32x8xf32>
    %382 = vector.extract_strided_slice %280 {offsets = [24, 0], sizes = [8, 32], strides = [1, 1]} : vector<32x32xbf16> to vector<8x32xbf16>
    %383 = arith.truncf %381 : vector<32x8xf32> to vector<32x8xbf16>
    %cst_134 = arith.constant dense<0.000000e+00> : vector<32x32xf32>
    %384 = tpu.matmul %383, %382, %cst_134 {dimension_numbers = #tpu.dot_dimension_numbers<[1], [0], [0], [1], [0, 0, 1, 1], [], []>} : vector<32x8xbf16>, vector<8x32xbf16>, vector<32x32xf32> -> vector<32x32xf32>
    %385 = arith.addf %359, %384 : vector<32x32xf32>
    %386 = arith.addf %249, %385 : vector<32x32xf32>
    %c0_135 = arith.constant 0 : index
    %c0_136 = arith.constant 0 : index
    %387 = vector.load %arg22[%c0_135, %c0_136] : memref<1x32xf32, #tpu.memory_space<vmem>>, vector<1x32xf32>
    %388 = vector.broadcast %387 : vector<1x32xf32> to vector<32x32xf32>
    %389 = arith.addf %386, %388 : vector<32x32xf32>
    %c0_137 = arith.constant 0 : index
    %c0_138 = arith.constant 0 : index
    %390 = vector.load %arg23[%c0_137, %c0_138] : memref<1x32xf32, #tpu.memory_space<vmem>>, vector<1x32xf32>
    %c0_139 = arith.constant 0 : index
    %c0_140 = arith.constant 0 : index
    %391 = vector.load %arg24[%c0_139, %c0_140] : memref<1x32xf32, #tpu.memory_space<vmem>>, vector<1x32xf32>
    %cst_141 = arith.constant dense<0.000000e+00> : vector<32xf32>
    %392 = vector.multi_reduction <add>, %389, %cst_141 [1] : vector<32x32xf32> to vector<32xf32>
    %393 = vector.shape_cast %392 : vector<32xf32> to vector<32x1xf32>
    %cst_142 = arith.constant 3.200000e+01 : f32
    %394 = vector.broadcast %cst_142 : f32 to vector<32x1xf32>
    %395 = arith.divf %393, %394 : vector<32x1xf32>
    %396 = vector.broadcast %395 : vector<32x1xf32> to vector<32x32xf32>
    %397 = arith.subf %389, %396 : vector<32x32xf32>
    %398 = arith.mulf %397, %397 : vector<32x32xf32>
    %cst_143 = arith.constant dense<0.000000e+00> : vector<32xf32>
    %399 = vector.multi_reduction <add>, %398, %cst_143 [1] : vector<32x32xf32> to vector<32xf32>
    %400 = vector.shape_cast %399 : vector<32xf32> to vector<32x1xf32>
    %cst_144 = arith.constant 3.200000e+01 : f32
    %401 = vector.broadcast %cst_144 : f32 to vector<32x1xf32>
    %402 = arith.divf %400, %401 : vector<32x1xf32>
    %403 = vector.broadcast %395 : vector<32x1xf32> to vector<32x32xf32>
    %404 = arith.subf %389, %403 : vector<32x32xf32>
    %cst_145 = arith.constant 9.99999974E-6 : f32
    %405 = vector.broadcast %cst_145 : f32 to vector<32x1xf32>
    %406 = arith.addf %402, %405 : vector<32x1xf32>
    %407 = math.rsqrt %406 : vector<32x1xf32>
    %408 = vector.broadcast %407 : vector<32x1xf32> to vector<32x32xf32>
    %409 = arith.mulf %404, %408 : vector<32x32xf32>
    %410 = vector.broadcast %390 : vector<1x32xf32> to vector<32x32xf32>
    %411 = arith.mulf %409, %410 : vector<32x32xf32>
    %412 = vector.broadcast %391 : vector<1x32xf32> to vector<32x32xf32>
    %413 = arith.addf %411, %412 : vector<32x32xf32>
    %c0_146 = arith.constant 0 : index
    %c0_147 = arith.constant 0 : index
    %414 = vector.load %arg25[%c0_146, %c0_147] : memref<32x128xbf16, #tpu.memory_space<vmem>>, vector<32x128xbf16>
    %415 = arith.truncf %413 : vector<32x32xf32> to vector<32x32xbf16>
    %cst_148 = arith.constant dense<0.000000e+00> : vector<32x128xf32>
    %416 = tpu.matmul %415, %414, %cst_148 {dimension_numbers = #tpu.dot_dimension_numbers<[1], [0], [0], [1], [0, 0, 1, 1], [], []>} : vector<32x32xbf16>, vector<32x128xbf16>, vector<32x128xf32> -> vector<32x128xf32>
    %c0_149 = arith.constant 0 : index
    %c0_150 = arith.constant 0 : index
    %417 = vector.load %arg26[%c0_149, %c0_150] : memref<1x128xf32, #tpu.memory_space<vmem>>, vector<1x128xf32>
    %418 = vector.broadcast %417 : vector<1x128xf32> to vector<32x128xf32>
    %419 = arith.addf %416, %418 : vector<32x128xf32>
    %cst_151 = arith.constant 5.000000e-01 : f32
    %420 = vector.broadcast %cst_151 : f32 to vector<32x128xf32>
    %421 = arith.mulf %420, %419 : vector<32x128xf32>
    %cst_152 = arith.constant 0.707106769 : f32
    %422 = vector.broadcast %cst_152 : f32 to vector<32x128xf32>
    %423 = arith.mulf %419, %422 : vector<32x128xf32>
    %cst_153 = arith.constant 0.000000e+00 : f32
    %424 = vector.broadcast %cst_153 : f32 to vector<32x128xf32>
    %425 = arith.cmpf oge, %423, %424 : vector<32x128xf32>
    %cst_154 = arith.constant 1.000000e+00 : f32
    %cst_155 = arith.constant -1.000000e+00 : f32
    %426 = vector.broadcast %cst_154 : f32 to vector<32x128xf32>
    %427 = vector.broadcast %cst_155 : f32 to vector<32x128xf32>
    %428 = arith.select %425, %426, %427 : vector<32x128xi1>, vector<32x128xf32>
    %429 = math.absf %423 : vector<32x128xf32>
    %cst_156 = arith.constant 0.327591091 : f32
    %430 = vector.broadcast %cst_156 : f32 to vector<32x128xf32>
    %431 = arith.mulf %430, %429 : vector<32x128xf32>
    %cst_157 = arith.constant 1.000000e+00 : f32
    %432 = vector.broadcast %cst_157 : f32 to vector<32x128xf32>
    %433 = arith.addf %432, %431 : vector<32x128xf32>
    %cst_158 = arith.constant 1.000000e+00 : f32
    %434 = vector.broadcast %cst_158 : f32 to vector<32x128xf32>
    %435 = arith.divf %434, %433 : vector<32x128xf32>
    %cst_159 = arith.constant 1.06140542 : f32
    %436 = vector.broadcast %cst_159 : f32 to vector<32x128xf32>
    %437 = arith.mulf %436, %435 : vector<32x128xf32>
    %cst_160 = arith.constant -1.45315206 : f32
    %438 = vector.broadcast %cst_160 : f32 to vector<32x128xf32>
    %439 = arith.addf %437, %438 : vector<32x128xf32>
    %440 = arith.mulf %439, %435 : vector<32x128xf32>
    %cst_161 = arith.constant 1.42141378 : f32
    %441 = vector.broadcast %cst_161 : f32 to vector<32x128xf32>
    %442 = arith.addf %440, %441 : vector<32x128xf32>
    %443 = arith.mulf %442, %435 : vector<32x128xf32>
    %cst_162 = arith.constant -0.284496725 : f32
    %444 = vector.broadcast %cst_162 : f32 to vector<32x128xf32>
    %445 = arith.addf %443, %444 : vector<32x128xf32>
    %446 = arith.mulf %445, %435 : vector<32x128xf32>
    %cst_163 = arith.constant 0.254829586 : f32
    %447 = vector.broadcast %cst_163 : f32 to vector<32x128xf32>
    %448 = arith.addf %446, %447 : vector<32x128xf32>
    %449 = arith.mulf %448, %435 : vector<32x128xf32>
    %cst_164 = arith.constant 0.000000e+00 : f32
    %450 = vector.broadcast %cst_164 : f32 to vector<32x128xf32>
    %451 = arith.subf %450, %429 : vector<32x128xf32>
    %452 = arith.mulf %451, %429 : vector<32x128xf32>
    %453 = math.exp %452 : vector<32x128xf32>
    %454 = arith.mulf %449, %453 : vector<32x128xf32>
    %cst_165 = arith.constant 1.000000e+00 : f32
    %455 = vector.broadcast %cst_165 : f32 to vector<32x128xf32>
    %456 = arith.subf %455, %454 : vector<32x128xf32>
    %457 = arith.mulf %428, %456 : vector<32x128xf32>
    %cst_166 = arith.constant 1.000000e+00 : f32
    %458 = vector.broadcast %cst_166 : f32 to vector<32x128xf32>
    %459 = arith.addf %458, %457 : vector<32x128xf32>
    %460 = arith.mulf %421, %459 : vector<32x128xf32>
    %c0_167 = arith.constant 0 : index
    %c0_168 = arith.constant 0 : index
    %461 = vector.load %arg27[%c0_167, %c0_168] : memref<128x32xbf16, #tpu.memory_space<vmem>>, vector<128x32xbf16>
    %462 = arith.truncf %460 : vector<32x128xf32> to vector<32x128xbf16>
    %cst_169 = arith.constant dense<0.000000e+00> : vector<32x32xf32>
    %463 = tpu.matmul %462, %461, %cst_169 {dimension_numbers = #tpu.dot_dimension_numbers<[1], [0], [0], [1], [0, 0, 1, 1], [], []>} : vector<32x128xbf16>, vector<128x32xbf16>, vector<32x32xf32> -> vector<32x32xf32>
    %464 = arith.addf %389, %463 : vector<32x32xf32>
    %c0_170 = arith.constant 0 : index
    %c0_171 = arith.constant 0 : index
    %465 = vector.load %arg28[%c0_170, %c0_171] : memref<1x32xf32, #tpu.memory_space<vmem>>, vector<1x32xf32>
    %466 = vector.broadcast %465 : vector<1x32xf32> to vector<32x32xf32>
    %467 = arith.addf %464, %466 : vector<32x32xf32>
    %c0_172 = arith.constant 0 : index
    %c0_173 = arith.constant 0 : index
    %468 = vector.load %arg29[%c0_172, %c0_173] : memref<4x32xf32, #tpu.memory_space<vmem>>, vector<4x32xf32>
    %c0_174 = arith.constant 0 : index
    %c0_175 = arith.constant 0 : index
    %469 = vector.load %arg30[%c0_174, %c0_175] : memref<4x1xf32, #tpu.memory_space<vmem>>, vector<4x1xf32>
    %c0_176 = arith.constant 0 : index
    %c0_177 = arith.constant 0 : index
    %470 = vector.load %arg31[%c0_176, %c0_177] : memref<16x256xf32, #tpu.memory_space<vmem>>, vector<16x256xf32>
    %471 = vector.extract_strided_slice %467 {offsets = [0, 0], sizes = [16, 32], strides = [1, 1]} : vector<32x32xf32> to vector<16x32xf32>
    %cst_178 = arith.constant dense<0.000000e+00> : vector<4x16xf32>
    %472 = tpu.matmul %468, %471, %cst_178 {dimension_numbers = #tpu.dot_dimension_numbers<[1], [1], [0], [0], [0, 0, 1, 0], [], []>} : vector<4x32xf32>, vector<16x32xf32>, vector<4x16xf32> -> vector<4x16xf32>
    %473 = vector.broadcast %469 : vector<4x1xf32> to vector<4x16xf32>
    %474 = arith.addf %472, %473 : vector<4x16xf32>
    %cst_179 = arith.constant dense<0.000000e+00> : vector<4x256xf32>
    %475 = tpu.matmul %474, %470, %cst_179 {dimension_numbers = #tpu.dot_dimension_numbers<[1], [0], [0], [1], [0, 0, 1, 1], [], []>} : vector<4x16xf32>, vector<16x256xf32>, vector<4x256xf32> -> vector<4x256xf32>
    %c0_180 = arith.constant 0 : index
    %c0_181 = arith.constant 0 : index
    %c0_182 = arith.constant 0 : index
    %476 = vector.load %arg33[%c0_180, %c0_181, %c0_182] : memref<2x4x256xf32, #tpu.memory_space<vmem>>, vector<1x4x256xf32>
    %477 = vector.shape_cast %476 : vector<1x4x256xf32> to vector<4x256xf32>
    %478 = vector.shape_cast %475 : vector<4x256xf32> to vector<1x4x256xf32>
    tpu.vector_store %arg33[%c0_180, %c0_181, %c0_182], %478 {strides = array<i32>} : memref<2x4x256xf32, #tpu.memory_space<vmem>>, vector<1x4x256xf32>,
    %479 = vector.extract_strided_slice %467 {offsets = [16, 0], sizes = [16, 32], strides = [1, 1]} : vector<32x32xf32> to vector<16x32xf32>
    %cst_183 = arith.constant dense<0.000000e+00> : vector<4x16xf32>
    %480 = tpu.matmul %468, %479, %cst_183 {dimension_numbers = #tpu.dot_dimension_numbers<[1], [1], [0], [0], [0, 0, 1, 0], [], []>} : vector<4x32xf32>, vector<16x32xf32>, vector<4x16xf32> -> vector<4x16xf32>
    %481 = vector.broadcast %469 : vector<4x1xf32> to vector<4x16xf32>
    %482 = arith.addf %480, %481 : vector<4x16xf32>
    %cst_184 = arith.constant dense<0.000000e+00> : vector<4x256xf32>
    %483 = tpu.matmul %482, %470, %cst_184 {dimension_numbers = #tpu.dot_dimension_numbers<[1], [0], [0], [1], [0, 0, 1, 1], [], []>} : vector<4x16xf32>, vector<16x256xf32>, vector<4x256xf32> -> vector<4x256xf32>
    %c1 = arith.constant 1 : index
    %c0_185 = arith.constant 0 : index
    %c0_186 = arith.constant 0 : index
    %484 = vector.load %arg33[%c1, %c0_185, %c0_186] : memref<2x4x256xf32, #tpu.memory_space<vmem>>, vector<1x4x256xf32>
    %485 = vector.shape_cast %484 : vector<1x4x256xf32> to vector<4x256xf32>
    %486 = vector.shape_cast %483 : vector<4x256xf32> to vector<1x4x256xf32>
    tpu.vector_store %arg33[%c1, %c0_185, %c0_186], %486 {strides = array<i32>} : memref<2x4x256xf32, #tpu.memory_space<vmem>>, vector<1x4x256xf32>,
    return
  }
}

</mosaic_0001>

<llo_original>
// kernel: swin_unet_forward.1
$region0: #{swin_unet_forward.1}
  #allocation0 [shape = 'u32[]', space=smem, size = 0x4, offset = 0x4, fixed_abs, tag = 'smem constant byte address 0x4 - core index']
  #allocation1 [shape = 'u32[144,128]{1,0:T(1,128)}', space=vmem, size = 0x12000, scoped, tag = 'internal scratch']
  %s0 = inlined_call_operand.smem [shape: u32[34], index: -1, kind: input, shape index: {}]
  %s1 = sld [smem:[%s0]]
  %s2 = scalar_lea.smem %s0, 1
  %s3 = sld [smem:[%s2]]
  %s4 = scalar_lea.smem %s0, 2
  %s5 = sld [smem:[%s4]]
  %s6 = scalar_lea.smem %s0, 3
  %s7 = sld [smem:[%s6]]
  %s8 = scalar_lea.smem %s0, 4
  %s9 = sld [smem:[%s8]]
  %s10 = scalar_lea.smem %s0, 5
  %s11 = sld [smem:[%s10]]
  %s12 = scalar_lea.smem %s0, 6
  %s13 = sld [smem:[%s12]]
  %s14 = scalar_lea.smem %s0, 7
  %s15 = sld [smem:[%s14]]
  %s16 = scalar_lea.smem %s0, 8
  %s17 = sld [smem:[%s16]]
  %s18 = scalar_lea.smem %s0, 9
  %s19 = sld [smem:[%s18]]
  %s20 = scalar_lea.smem %s0, 10
  %s21 = sld [smem:[%s20]]
  %s22 = scalar_lea.smem %s0, 11
  %s23 = sld [smem:[%s22]]
  %s24 = scalar_lea.smem %s0, 12
  %s25 = sld [smem:[%s24]]
  %s26 = scalar_lea.smem %s0, 13
  %s27 = sld [smem:[%s26]]
  %s28 = scalar_lea.smem %s0, 14
  %s29 = sld [smem:[%s28]]
  %s30 = scalar_lea.smem %s0, 15
  %s31 = sld [smem:[%s30]]
  %s32 = scalar_lea.smem %s0, 16
  %s33 = sld [smem:[%s32]]
  %s34 = scalar_lea.smem %s0, 17
  %s35 = sld [smem:[%s34]]
  %s36 = scalar_lea.smem %s0, 18
  %s37 = sld [smem:[%s36]]
  %s38 = scalar_lea.smem %s0, 19
  %s39 = sld [smem:[%s38]]
  %s40 = scalar_lea.smem %s0, 20
  %s41 = sld [smem:[%s40]]
  %s42 = scalar_lea.smem %s0, 21
  %s43 = sld [smem:[%s42]]
  %s44 = scalar_lea.smem %s0, 22
  %s45 = sld [smem:[%s44]]
  %s46 = scalar_lea.smem %s0, 23
  %s47 = sld [smem:[%s46]]
  %s48 = scalar_lea.smem %s0, 24
  %s49 = sld [smem:[%s48]]
  %s50 = scalar_lea.smem %s0, 25
  %s51 = sld [smem:[%s50]]
  %s52 = scalar_lea.smem %s0, 26
  %s53 = sld [smem:[%s52]]
  %s54 = scalar_lea.smem %s0, 27
  %s55 = sld [smem:[%s54]]
  %s56 = scalar_lea.smem %s0, 28
  %s57 = sld [smem:[%s56]]
  %s58 = scalar_lea.smem %s0, 29
  %s59 = sld [smem:[%s58]]
  %s60 = scalar_lea.smem %s0, 30
  %s61 = sld [smem:[%s60]]
  %s62 = scalar_lea.smem %s0, 31
  %s63 = sld [smem:[%s62]]
  %s64 = scalar_lea.smem %s0, 32
  %s65 = sld [smem:[%s64]]
  %s66 = scalar_lea.smem %s0, 33
  %s67 = sld [smem:[%s66]]
  %s68 = sld [smem:[#allocation0]]
  $region142: #{swin_unet_forward.1} parent=0
    _
  %s70 = ssub.s32 1, %s68
  %s71 = scalar_select 0, %s70, %s68
  $region1: #{swin_unet_forward.1} parent=0
    #allocation2 [shape = 'u8[8192]{0}', space=vmem, size = 0x2000, scoped, tag = 'output window, operand 0, single buffered']
    #allocation3 [shape = 's32[1]{0}', space=sflag, size = 0x4, scoped, tag = 'scoped memory for swin_unet_forward.1']
    %72 = vsyncpa [#allocation3], 0
    // Predicated region
    $region2: #{swin_unet_forward.1} parent=1 // pred_check
      _
    $region3: #{swin_unet_forward.1} parent=1 // pred_check_branch
      %74 = sbr.rel (0) target = $region5
    $region4: #{swin_unet_forward.1} parent=1 // pred_region
      _
    $region5: #{swin_unet_forward.1} parent=1 // pred_fallthru
      _
    // Predicated region
    $region6: #{swin_unet_forward.1} parent=1 // pred_check
      _
    $region7: #{swin_unet_forward.1} parent=1 // pred_check_branch
      %76 = sbr.rel (0) target = $region9
    $region8: #{swin_unet_forward.1} parent=1 // pred_region
      _
    $region9: #{swin_unet_forward.1} parent=1 // pred_fallthru
      _
    // Predicated region
    $region10: #{swin_unet_forward.1} parent=1 // pred_check
      _
    $region11: #{swin_unet_forward.1} parent=1 // pred_check_branch
      %78 = sbr.rel (0) target = $region13
    $region12: #{swin_unet_forward.1} parent=1 // pred_region
      _
    $region13: #{swin_unet_forward.1} parent=1 // pred_fallthru
      _
    // Predicated region
    $region14: #{swin_unet_forward.1} parent=1 // pred_check
      _
    $region15: #{swin_unet_forward.1} parent=1 // pred_check_branch
      %80 = sbr.rel (0) target = $region17
    $region16: #{swin_unet_forward.1} parent=1 // pred_region
      _
    $region17: #{swin_unet_forward.1} parent=1 // pred_fallthru
      _
    // Predicated region
    $region18: #{swin_unet_forward.1} parent=1 // pred_check
      _
    $region19: #{swin_unet_forward.1} parent=1 // pred_check_branch
      %82 = sbr.rel (0) target = $region21
    $region20: #{swin_unet_forward.1} parent=1 // pred_region
      _
    $region21: #{swin_unet_forward.1} parent=1 // pred_fallthru
      _
    // Predicated region
    $region22: #{swin_unet_forward.1} parent=1 // pred_check
      _
    $region23: #{swin_unet_forward.1} parent=1 // pred_check_branch
      %84 = sbr.rel (0) target = $region25
    $region24: #{swin_unet_forward.1} parent=1 // pred_region
      _
    $region25: #{swin_unet_forward.1} parent=1 // pred_fallthru
      _
    // Predicated region
    $region26: #{swin_unet_forward.1} parent=1 // pred_check
      _
    $region27: #{swin_unet_forward.1} parent=1 // pred_check_branch
      %86 = sbr.rel (0) target = $region29
    $region28: #{swin_unet_forward.1} parent=1 // pred_region
      _
    $region29: #{swin_unet_forward.1} parent=1 // pred_fallthru
      _
    // Predicated region
    $region30: #{swin_unet_forward.1} parent=1 // pred_check
      _
    $region31: #{swin_unet_forward.1} parent=1 // pred_check_branch
      %88 = sbr.rel (0) target = $region33
    $region32: #{swin_unet_forward.1} parent=1 // pred_region
      _
    $region33: #{swin_unet_forward.1} parent=1 // pred_fallthru
      _
    // Predicated region
    $region34: #{swin_unet_forward.1} parent=1 // pred_check
      _
    $region35: #{swin_unet_forward.1} parent=1 // pred_check_branch
      %90 = sbr.rel (0) target = $region37
    $region36: #{swin_unet_forward.1} parent=1 // pred_region
      _
    $region37: #{swin_unet_forward.1} parent=1 // pred_fallthru
      _
    // Predicated region
    $region38: #{swin_unet_forward.1} parent=1 // pred_check
      _
    $region39: #{swin_unet_forward.1} parent=1 // pred_check_branch
      %92 = sbr.rel (0) target = $region41
    $region40: #{swin_unet_forward.1} parent=1 // pred_region
      _
    $region41: #{swin_unet_forward.1} parent=1 // pred_fallthru
      _
    // Predicated region
    $region42: #{swin_unet_forward.1} parent=1 // pred_check
      _
    $region43: #{swin_unet_forward.1} parent=1 // pred_check_branch
      %94 = sbr.rel (0) target = $region45
    $region44: #{swin_unet_forward.1} parent=1 // pred_region
      _
    $region45: #{swin_unet_forward.1} parent=1 // pred_fallthru
      _
    // Predicated region
    $region46: #{swin_unet_forward.1} parent=1 // pred_check
      _
    $region47: #{swin_unet_forward.1} parent=1 // pred_check_branch
      %96 = sbr.rel (0) target = $region49
    $region48: #{swin_unet_forward.1} parent=1 // pred_region
      _
    $region49: #{swin_unet_forward.1} parent=1 // pred_fallthru
      _
    // Predicated region
    $region50: #{swin_unet_forward.1} parent=1 // pred_check
      _
    $region51: #{swin_unet_forward.1} parent=1 // pred_check_branch
      %98 = sbr.rel (0) target = $region53
    $region52: #{swin_unet_forward.1} parent=1 // pred_region
      _
    $region53: #{swin_unet_forward.1} parent=1 // pred_fallthru
      _
    // Predicated region
    $region54: #{swin_unet_forward.1} parent=1 // pred_check
      _
    $region55: #{swin_unet_forward.1} parent=1 // pred_check_branch
      %100 = sbr.rel (0) target = $region57
    $region56: #{swin_unet_forward.1} parent=1 // pred_region
      _
    $region57: #{swin_unet_forward.1} parent=1 // pred_fallthru
      _
    // Predicated region
    $region58: #{swin_unet_forward.1} parent=1 // pred_check
      _
    $region59: #{swin_unet_forward.1} parent=1 // pred_check_branch
      %102 = sbr.rel (0) target = $region61
    $region60: #{swin_unet_forward.1} parent=1 // pred_region
      _
    $region61: #{swin_unet_forward.1} parent=1 // pred_fallthru
      _
    // Predicated region
    $region62: #{swin_unet_forward.1} parent=1 // pred_check
      _
    $region63: #{swin_unet_forward.1} parent=1 // pred_check_branch
      %104 = sbr.rel (0) target = $region65
    $region64: #{swin_unet_forward.1} parent=1 // pred_region
      _
    $region65: #{swin_unet_forward.1} parent=1 // pred_fallthru
      _
    // Predicated region
    $region66: #{swin_unet_forward.1} parent=1 // pred_check
      _
    $region67: #{swin_unet_forward.1} parent=1 // pred_check_branch
      %106 = sbr.rel (0) target = $region69
    $region68: #{swin_unet_forward.1} parent=1 // pred_region
      _
    $region69: #{swin_unet_forward.1} parent=1 // pred_fallthru
      _
    // Predicated region
    $region70: #{swin_unet_forward.1} parent=1 // pred_check
      _
    $region71: #{swin_unet_forward.1} parent=1 // pred_check_branch
      %108 = sbr.rel (0) target = $region73
    $region72: #{swin_unet_forward.1} parent=1 // pred_region
      _
    $region73: #{swin_unet_forward.1} parent=1 // pred_fallthru
      _
    // Predicated region
    $region74: #{swin_unet_forward.1} parent=1 // pred_check
      _
    $region75: #{swin_unet_forward.1} parent=1 // pred_check_branch
      %110 = sbr.rel (0) target = $region77
    $region76: #{swin_unet_forward.1} parent=1 // pred_region
      _
    $region77: #{swin_unet_forward.1} parent=1 // pred_fallthru
      _
    // Predicated region
    $region78: #{swin_unet_forward.1} parent=1 // pred_check
      _
    $region79: #{swin_unet_forward.1} parent=1 // pred_check_branch
      %112 = sbr.rel (0) target = $region81
    $region80: #{swin_unet_forward.1} parent=1 // pred_region
      _
    $region81: #{swin_unet_forward.1} parent=1 // pred_fallthru
      _
    // Predicated region
    $region82: #{swin_unet_forward.1} parent=1 // pred_check
      _
    $region83: #{swin_unet_forward.1} parent=1 // pred_check_branch
      %114 = sbr.rel (0) target = $region85
    $region84: #{swin_unet_forward.1} parent=1 // pred_region
      _
    $region85: #{swin_unet_forward.1} parent=1 // pred_fallthru
      _
    // Predicated region
    $region86: #{swin_unet_forward.1} parent=1 // pred_check
      _
    $region87: #{swin_unet_forward.1} parent=1 // pred_check_branch
      %116 = sbr.rel (0) target = $region89
    $region88: #{swin_unet_forward.1} parent=1 // pred_region
      _
    $region89: #{swin_unet_forward.1} parent=1 // pred_fallthru
      _
    // Predicated region
    $region90: #{swin_unet_forward.1} parent=1 // pred_check
      _
    $region91: #{swin_unet_forward.1} parent=1 // pred_check_branch
      %118 = sbr.rel (0) target = $region93
    $region92: #{swin_unet_forward.1} parent=1 // pred_region
      _
    $region93: #{swin_unet_forward.1} parent=1 // pred_fallthru
      _
    // Predicated region
    $region94: #{swin_unet_forward.1} parent=1 // pred_check
      _
    $region95: #{swin_unet_forward.1} parent=1 // pred_check_branch
      %120 = sbr.rel (0) target = $region97
    $region96: #{swin_unet_forward.1} parent=1 // pred_region
      _
    $region97: #{swin_unet_forward.1} parent=1 // pred_fallthru
      _
    // Predicated region
    $region98: #{swin_unet_forward.1} parent=1 // pred_check
      _
    $region99: #{swin_unet_forward.1} parent=1 // pred_check_branch
      %122 = sbr.rel (0) target = $region101
    $region100: #{swin_unet_forward.1} parent=1 // pred_region
      _
    $region101: #{swin_unet_forward.1} parent=1 // pred_fallthru
      _
    // Predicated region
    $region102: #{swin_unet_forward.1} parent=1 // pred_check
      _
    $region103: #{swin_unet_forward.1} parent=1 // pred_check_branch
      %124 = sbr.rel (0) target = $region105
    $region104: #{swin_unet_forward.1} parent=1 // pred_region
      _
    $region105: #{swin_unet_forward.1} parent=1 // pred_fallthru
      _
    // Predicated region
    $region106: #{swin_unet_forward.1} parent=1 // pred_check
      _
    $region107: #{swin_unet_forward.1} parent=1 // pred_check_branch
      %126 = sbr.rel (0) target = $region109
    $region108: #{swin_unet_forward.1} parent=1 // pred_region
      _
    $region109: #{swin_unet_forward.1} parent=1 // pred_fallthru
      _
    // Predicated region
    $region110: #{swin_unet_forward.1} parent=1 // pred_check
      _
    $region111: #{swin_unet_forward.1} parent=1 // pred_check_branch
      %128 = sbr.rel (0) target = $region113
    $region112: #{swin_unet_forward.1} parent=1 // pred_region
      _
    $region113: #{swin_unet_forward.1} parent=1 // pred_fallthru
      _
    // Predicated region
    $region114: #{swin_unet_forward.1} parent=1 // pred_check
      _
    $region115: #{swin_unet_forward.1} parent=1 // pred_check_branch
      %130 = sbr.rel (0) target = $region117
    $region116: #{swin_unet_forward.1} parent=1 // pred_region
      _
    $region117: #{swin_unet_forward.1} parent=1 // pred_fallthru
      _
    // Predicated region
    $region118: #{swin_unet_forward.1} parent=1 // pred_check
      _
    $region119: #{swin_unet_forward.1} parent=1 // pred_check_branch
      %132 = sbr.rel (0) target = $region121
    $region120: #{swin_unet_forward.1} parent=1 // pred_region
      _
    $region121: #{swin_unet_forward.1} parent=1 // pred_fallthru
      _
    // Predicated region
    $region122: #{swin_unet_forward.1} parent=1 // pred_check
      _
    $region123: #{swin_unet_forward.1} parent=1 // pred_check_branch
      %134 = sbr.rel (0) target = $region125
    $region124: #{swin_unet_forward.1} parent=1 // pred_region
      _
    $region125: #{swin_unet_forward.1} parent=1 // pred_fallthru
      _
    // Predicated region
    $region126: #{swin_unet_forward.1} parent=1 // pred_check
      _
    $region127: #{swin_unet_forward.1} parent=1 // pred_check_branch
      %136 = sbr.rel (0) target = $region129
    $region128: #{swin_unet_forward.1} parent=1 // pred_region
      _
    $region129: #{swin_unet_forward.1} parent=1 // pred_fallthru
      _
    // Predicated region
    $region130: #{swin_unet_forward.1} parent=1 // pred_check
      _
    $region131: #{swin_unet_forward.1} parent=1 // pred_check_branch
      %138 = sbr.rel (0) target = $region133
    $region132: #{swin_unet_forward.1} parent=1 // pred_region
      _
    $region133: #{swin_unet_forward.1} parent=1 // pred_fallthru
      _
    %v140 = vld [vmem:[%s65] sm:$0xff]
    %v141 = vld [vmem:[%s65 + $0x8] sm:$0xff]
    %v142 = vld [vmem:[%s65 + $0x10] sm:$0xff]
    %v143 = vld [vmem:[%s65 + $0x18] sm:$0xff]
    %v144 = vld [vmem:[%s1] sm:$0xff]
    %v145 = vld [vmem:[%s1 + $0x8] sm:$0xff]
    %v146 = vld [vmem:[%s1 + $0x10] sm:$0xff]
    %v147 = vld [vmem:[%s1 + $0x18] sm:$0xff]
    %v148 = vld [vmem:[%s3] sm:$0xf]
    %v149 = vld [vmem:[%s3 + $0x4] sm:$0xf]
    %v150 = vld [vmem:[%s3 + $0x8] sm:$0xf]
    %v151 = vld [vmem:[%s3 + $0xc] sm:$0xf]
    %v152 = vld [vmem:[%s3 + $0x10] sm:$0xf]
    %v153 = vld [vmem:[%s3 + $0x14] sm:$0xf]
    %v154 = vld [vmem:[%s3 + $0x18] sm:$0xf]
    %v155 = vld [vmem:[%s3 + $0x1c] sm:$0xf]
    %v156 = vpack.c.bf16 %v145, %v144
    %v157 = vpack.c.bf16 %v147, %v146
    %v158 = vld [vmem:[%s5] sm:$0x1]
    %v160 = vlaneseq
    %v161 = vshrl.u32 %v160, 7
    %v162 = vsub.s32 0, %v161
    %v163 = vrot.slane %v158, %v162
    %v173 = vunpack.c.l.b16 %v148
    %v174 = vunpack.c.l.b16 %v149
    %v175 = vunpack.c.l.b16 %v150
    %v176 = vunpack.c.l.b16 %v151
    %v177 = vunpack.c.l.b16 %v152
    %v178 = vunpack.c.l.b16 %v153
    %v179 = vunpack.c.l.b16 %v154
    %v180 = vunpack.c.l.b16 %v155
    %v181 = vpack.c.b16 %v174, %v173
    %v182 = vpack.c.b16 %v176, %v175
    %v183 = vpack.c.b16 %v178, %v177
    %v184 = vpack.c.b16 %v180, %v179
    %vm189 = vcmask 523264
    %v191 = vsel %vm189, %v156, 0
    %v194 = vsel %vm189, %v157, 0
    %196 = vmatprep.subr.bf16.mxu0 0
    %197 = vmatpush1.bf16.msra.mxu0 %v181
    %198 = vmatprep.subr.bf16.mxu0 0
    %199 = vmatpush1.bf16.msra.mxu0 %v182
    %200 = vmatprep.subr.bf16.mxu0 0
    %201 = vmatpush1.bf16.msra.mxu0 %v183
    %202 = vmatprep.subr.bf16.mxu0 0
    %203 = vmatpush1.bf16.msra.mxu0 %v184
    %204 = vmatprep.subr.bf16.mxu0 0
    %205 = vmatpush1.bf16.msra.mxu0 0
    %206 = vmatprep.subr.bf16.mxu0 0
    %207 = vmatpush1.bf16.msra.mxu0 0
    %208 = vmatprep.subr.bf16.mxu0 0
    %209 = vmatpush1.bf16.msra.mxu0 0
    %210 = vmatprep.subr.bf16.mxu0 0
    %211 = vmatpush1.bf16.msra.mxu0 0
    %212 = vmatprep.subr.bf16.mxu0 0
    %213 = vmatpush1.bf16.msra.mxu0 0
    %214 = vmatprep.subr.bf16.mxu0 0
    %215 = vmatpush1.bf16.msra.mxu0 0
    %216 = vmatprep.subr.bf16.mxu0 0
    %217 = vmatpush1.bf16.msra.mxu0 0
    %218 = vmatprep.subr.bf16.mxu0 0
    %219 = vmatpush1.bf16.msra.mxu0 0
    %220 = vmatprep.subr.bf16.mxu0 0
    %221 = vmatpush1.bf16.msra.mxu0 0
    %222 = vmatprep.subr.bf16.mxu0 0
    %223 = vmatpush1.bf16.msra.mxu0 0
    %224 = vmatprep.subr.bf16.mxu0 0
    %225 = vmatpush1.bf16.msra.mxu0 0
    %226 = vmatprep.subr.bf16.mxu0 0
    %227 = vmatpush1.bf16.msra.mxu0 0
    %228 = vmatprep.mubr.bf16.mxu0 0
    %229 = vmatmul.mubr.bf16.gmra.mrb[0].mxu0 %v191
    %v230 = vpop.f32.mrb[0].mxu0
    %v231 = vadd.f32 %v163, %v230
    %v232 = vpop.f32.mrb[0].mxu0
    %v233 = vpop.f32.mrb[0].mxu0
    %v234 = vadd.f32 %v163, %v233
    %v235 = vpop.f32.mrb[0].mxu0
    %236 = vmatprep.mubr.bf16.mxu0 0
    %237 = vmatmul.mubr.bf16.gmra.mrb[0].mxu0 %v194
    %v238 = vpop.f32.mrb[0].mxu0
    %v239 = vadd.f32 %v163, %v238
    %v240 = vpop.f32.mrb[0].mxu0
    %v241 = vpop.f32.mrb[0].mxu0
    %v242 = vadd.f32 %v163, %v241
    %v243 = vpop.f32.mrb[0].mxu0
    %244 = vdwg.mxu0
    %v245 = vld [vmem:[%s7] sm:$0x1]
    %v246 = vld [vmem:[%s9] sm:$0x1]
    %vm247 = vcmask 261120
    %v248 = vsel %vm247, %v231, 0.0
    %249 = vadd.xlane.f32.xlu0 %v248
    %v250 = vpop.xlane.xlu0 %249
    %v251 = vsel %vm247, %v234, 0.0
    %252 = vadd.xlane.f32.xlu0 %v251
    %v253 = vpop.xlane.xlu0 %252
    %v254 = vsel %vm247, %v239, 0.0
    %255 = vadd.xlane.f32.xlu0 %v254
    %v256 = vpop.xlane.xlu0 %255
    %v257 = vsel %vm247, %v242, 0.0
    %258 = vadd.xlane.f32.xlu0 %v257
    %v259 = vpop.xlane.xlu0 %258
    %v260 = vrcp.pop 32.0
    %v261 = vmul.f32 %v250, %v260
    %v262 = vmul.f32 %v253, %v260
    %v263 = vmul.f32 %v256, %v260
    %v264 = vmul.f32 %v259, %v260
    %v265 = vsub.f32 %v231, %v261
    %v266 = vsub.f32 %v234, %v262
    %v267 = vsub.f32 %v239, %v263
    %v268 = vsub.f32 %v242, %v264
    %v269 = vmul.f32 %v265, %v265
    %v270 = vmul.f32 %v266, %v266
    %v271 = vmul.f32 %v267, %v267
    %v272 = vmul.f32 %v268, %v268
    %v273 = vsel %vm247, %v269, 0.0
    %274 = vadd.xlane.f32.xlu0 %v273
    %v275 = vpop.xlane.xlu0 %274
    %v276 = vsel %vm247, %v270, 0.0
    %277 = vadd.xlane.f32.xlu0 %v276
    %v278 = vpop.xlane.xlu0 %277
    %v279 = vsel %vm247, %v271, 0.0
    %280 = vadd.xlane.f32.xlu0 %v279
    %v281 = vpop.xlane.xlu0 %280
    %v282 = vsel %vm247, %v272, 0.0
    %283 = vadd.xlane.f32.xlu0 %v282
    %v284 = vpop.xlane.xlu0 %283
    %v285 = vmul.f32 %v275, %v260
    %v286 = vmul.f32 %v278, %v260
    %v287 = vmul.f32 %v281, %v260
    %v288 = vmul.f32 %v284, %v260
    %v289 = vadd.f32 %v285, 1e-05
    %v290 = vadd.f32 %v286, 1e-05
    %v291 = vadd.f32 %v287, 1e-05
    %v292 = vadd.f32 %v288, 1e-05
    %v293 = vrsqrt.pop %v289
    %v294 = vrsqrt.pop %v290
    %v295 = vrsqrt.pop %v291
    %v296 = vrsqrt.pop %v292
    %v297 = vmul.f32 %v265, %v293
    %v298 = vmul.f32 %v266, %v294
    %v299 = vmul.f32 %v267, %v295
    %v300 = vmul.f32 %v268, %v296
    %v302 = vlaneseq
    %v303 = vshrl.u32 %v302, 7
    %v304 = vsub.s32 0, %v303
    %v305 = vrot.slane %v245, %v304
    %v307 = vmul.f32 %v297, %v305
    %v308 = vmul.f32 %v298, %v305
    %v309 = vmul.f32 %v299, %v305
    %v310 = vmul.f32 %v300, %v305
    %v312 = vlaneseq
    %v313 = vshrl.u32 %v312, 7
    %v314 = vsub.s32 0, %v313
    %v315 = vrot.slane %v246, %v314
    %v317 = vadd.f32 %v307, %v315
    %v318 = vadd.f32 %v308, %v315
    %v319 = vadd.f32 %v309, %v315
    %v320 = vadd.f32 %v310, %v315
    %v321 = vld [vmem:[%s11] sm:$0x1]
    %v322 = vld [vmem:[%s13] sm:$0x1]
    %v323 = vsel %vm247, %v317, 0.0
    %324 = vadd.xlane.f32.xlu0 %v323
    %v325 = vpop.xlane.xlu0 %324
    %v326 = vsel %vm247, %v318, 0.0
    %327 = vadd.xlane.f32.xlu0 %v326
    %v328 = vpop.xlane.xlu0 %327
    %v329 = vsel %vm247, %v319, 0.0
    %330 = vadd.xlane.f32.xlu0 %v329
    %v331 = vpop.xlane.xlu0 %330
    %v332 = vsel %vm247, %v320, 0.0
    %333 = vadd.xlane.f32.xlu0 %v332
    %v334 = vpop.xlane.xlu0 %333
    %v335 = vmul.f32 %v325, %v260
    %v336 = vmul.f32 %v328, %v260
    %v337 = vmul.f32 %v331, %v260
    %v338 = vmul.f32 %v334, %v260
    %v339 = vsub.f32 %v317, %v335
    %v340 = vsub.f32 %v318, %v336
    %v341 = vsub.f32 %v319, %v337
    %v342 = vsub.f32 %v320, %v338
    %v343 = vmul.f32 %v339, %v339
    %v344 = vmul.f32 %v340, %v340
    %v345 = vmul.f32 %v341, %v341
    %v346 = vmul.f32 %v342, %v342
    %v347 = vsel %vm247, %v343, 0.0
    %348 = vadd.xlane.f32.xlu0 %v347
    %v349 = vpop.xlane.xlu0 %348
    %v350 = vsel %vm247, %v344, 0.0
    %351 = vadd.xlane.f32.xlu0 %v350
    %v352 = vpop.xlane.xlu0 %351
    %v353 = vsel %vm247, %v345, 0.0
    %354 = vadd.xlane.f32.xlu0 %v353
    %v355 = vpop.xlane.xlu0 %354
    %v356 = vsel %vm247, %v346, 0.0
    %357 = vadd.xlane.f32.xlu0 %v356
    %v358 = vpop.xlane.xlu0 %357
    %v359 = vmul.f32 %v349, %v260
    %v360 = vmul.f32 %v352, %v260
    %v361 = vmul.f32 %v355, %v260
    %v362 = vmul.f32 %v358, %v260
    %v363 = vadd.f32 %v359, 1e-05
    %v364 = vadd.f32 %v360, 1e-05
    %v365 = vadd.f32 %v361, 1e-05
    %v366 = vadd.f32 %v362, 1e-05
    %v367 = vrsqrt.pop %v363
    %v368 = vrsqrt.pop %v364
    %v369 = vrsqrt.pop %v365
    %v370 = vrsqrt.pop %v366
    %v371 = vmul.f32 %v339, %v367
    %v372 = vmul.f32 %v340, %v368
    %v373 = vmul.f32 %v341, %v369
    %v374 = vmul.f32 %v342, %v370
    %v376 = vlaneseq
    %v377 = vshrl.u32 %v376, 7
    %v378 = vsub.s32 0, %v377
    %v379 = vrot.slane %v321, %v378
    %v381 = vmul.f32 %v371, %v379
    %v382 = vmul.f32 %v372, %v379
    %v383 = vmul.f32 %v373, %v379
    %v384 = vmul.f32 %v374, %v379
    %v386 = vlaneseq
    %v387 = vshrl.u32 %v386, 7
    %v388 = vsub.s32 0, %v387
    %v389 = vrot.slane %v322, %v388
    %v391 = vadd.f32 %v381, %v389
    %v392 = vadd.f32 %v382, %v389
    %v393 = vadd.f32 %v383, %v389
    %v394 = vadd.f32 %v384, %v389
    %v395 = vld [vmem:[%s15] sm:$0xf]
    %v396 = vld [vmem:[%s15 + $0x4] sm:$0xf]
    %v397 = vld [vmem:[%s15 + $0x8] sm:$0xf]
    %v398 = vld [vmem:[%s15 + $0xc] sm:$0xf]
    %v399 = vpack.c.bf16 %v392, %v391
    %v400 = vpack.c.bf16 %v394, %v393
    %v401 = vld [vmem:[%s17] sm:$0x1]
    %v403 = vlaneseq
    %v404 = vshrl.u32 %v403, 7
    %v405 = vsub.s32 0, %v404
    %v406 = vrot.slane %v401, %v405
    %v412 = vunpack.c.l.b16 %v395
    %v413 = vunpack.c.l.b16 %v396
    %v414 = vunpack.c.l.b16 %v397
    %v415 = vunpack.c.l.b16 %v398
    %v416 = vpack.c.b16 %v413, %v412
    %v417 = vpack.c.b16 %v415, %v414
    %v421 = vsel %vm247, %v399, 0
    %v424 = vsel %vm247, %v400, 0
    %426 = vmatprep.subr.bf16.mxu0 0
    %427 = vmatpush1.bf16.msra.mxu0 %v416
    %428 = vmatprep.subr.bf16.mxu0 0
    %429 = vmatpush1.bf16.msra.mxu0 %v417
    %430 = vmatprep.subr.bf16.mxu0 0
    %431 = vmatpush1.bf16.msra.mxu0 0
    %432 = vmatprep.subr.bf16.mxu0 0
    %433 = vmatpush1.bf16.msra.mxu0 0
    %434 = vmatprep.subr.bf16.mxu0 0
    %435 = vmatpush1.bf16.msra.mxu0 0
    %436 = vmatprep.subr.bf16.mxu0 0
    %437 = vmatpush1.bf16.msra.mxu0 0
    %438 = vmatprep.subr.bf16.mxu0 0
    %439 = vmatpush1.bf16.msra.mxu0 0
    %440 = vmatprep.subr.bf16.mxu0 0
    %441 = vmatpush1.bf16.msra.mxu0 0
    %442 = vmatprep.subr.bf16.mxu0 0
    %443 = vmatpush1.bf16.msra.mxu0 0
    %444 = vmatprep.subr.bf16.mxu0 0
    %445 = vmatpush1.bf16.msra.mxu0 0
    %446 = vmatprep.subr.bf16.mxu0 0
    %447 = vmatpush1.bf16.msra.mxu0 0
    %448 = vmatprep.subr.bf16.mxu0 0
    %449 = vmatpush1.bf16.msra.mxu0 0
    %450 = vmatprep.subr.bf16.mxu0 0
    %451 = vmatpush1.bf16.msra.mxu0 0
    %452 = vmatprep.subr.bf16.mxu0 0
    %453 = vmatpush1.bf16.msra.mxu0 0
    %454 = vmatprep.subr.bf16.mxu0 0
    %455 = vmatpush1.bf16.msra.mxu0 0
    %456 = vmatprep.subr.bf16.mxu0 0
    %457 = vmatpush1.bf16.msra.mxu0 0
    %458 = vmatprep.mubr.bf16.mxu0 0
    %459 = vmatmul.mubr.bf16.gmra.mrb[0].mxu0 %v421
    %v460 = vpop.f32.mrb[0].mxu0
    %v461 = vadd.f32 %v406, %v460
    %v462 = vpop.f32.mrb[0].mxu0
    %v463 = vpop.f32.mrb[0].mxu0
    %v464 = vadd.f32 %v406, %v463
    %v465 = vpop.f32.mrb[0].mxu0
    %466 = vmatprep.mubr.bf16.mxu0 0
    %467 = vmatmul.mubr.bf16.gmra.mrb[0].mxu0 %v424
    %v468 = vpop.f32.mrb[0].mxu0
    %v469 = vadd.f32 %v406, %v468
    %v470 = vpop.f32.mrb[0].mxu0
    %v471 = vpop.f32.mrb[0].mxu0
    %v472 = vadd.f32 %v406, %v471
    %v473 = vpop.f32.mrb[0].mxu0
    %474 = vdwg.mxu0
    %v475 = vld [vmem:[%s19] sm:$0xf]
    %v476 = vld [vmem:[%s19 + $0x4] sm:$0xf]
    %v477 = vld [vmem:[%s19 + $0x8] sm:$0xf]
    %v478 = vld [vmem:[%s19 + $0xc] sm:$0xf]
    %v479 = vmul.f32 %v461, 0.35355338
    %v480 = vmul.f32 %v464, 0.35355338
    %v481 = vmul.f32 %v469, 0.35355338
    %v482 = vmul.f32 %v472, 0.35355338
    %v483 = vpack.c.bf16 %v480, %v479
    %v484 = vpack.c.bf16 %v482, %v481
    %v485 = vpack.c.bf16 %v464, %v461
    %v486 = vpack.c.bf16 %v472, %v469
    %489 = vrot.lane.b32.xlu0 %v485, 96
    %v490 = vpop.permute.xlu0 %489
    %491 = vrot.lane.b32.xlu0 %v486, 96
    %v492 = vpop.permute.xlu0 %491
    %vm493 = vcmask 64512
    %v495 = vsel %vm493, %v483, 0
    %v498 = vsel %vm493, %v484, 0
    %v501 = vsel %vm493, %v490, 0
    %v504 = vsel %vm493, %v492, 0
    %506 = vmatprep.subr.bf16.mxu0 0
    %507 = vmatpush1.bf16.xpose.msra.mxu0 %v501
    %508 = vmatprep.subr.bf16.mxu0 0
    %509 = vmatpush1.bf16.xpose.msra.mxu0 %v504
    %510 = vmatprep.subr.bf16.mxu0 0
    %511 = vmatpush1.bf16.xpose.msra.mxu0 0
    %512 = vmatprep.subr.bf16.mxu0 0
    %513 = vmatpush1.bf16.xpose.msra.mxu0 0
    %514 = vmatprep.subr.bf16.mxu0 0
    %515 = vmatpush1.bf16.xpose.msra.mxu0 0
    %516 = vmatprep.subr.bf16.mxu0 0
    %517 = vmatpush1.bf16.xpose.msra.mxu0 0
    %518 = vmatprep.subr.bf16.mxu0 0
    %519 = vmatpush1.bf16.xpose.msra.mxu0 0
    %520 = vmatprep.subr.bf16.mxu0 0
    %521 = vmatpush1.bf16.xpose.msra.mxu0 0
    %522 = vmatprep.subr.bf16.mxu0 0
    %523 = vmatpush1.bf16.xpose.msra.mxu0 0
    %524 = vmatprep.subr.bf16.mxu0 0
    %525 = vmatpush1.bf16.xpose.msra.mxu0 0
    %526 = vmatprep.subr.bf16.mxu0 0
    %527 = vmatpush1.bf16.xpose.msra.mxu0 0
    %528 = vmatprep.subr.bf16.mxu0 0
    %529 = vmatpush1.bf16.xpose.msra.mxu0 0
    %530 = vmatprep.subr.bf16.mxu0 0
    %531 = vmatpush1.bf16.xpose.msra.mxu0 0
    %532 = vmatprep.subr.bf16.mxu0 0
    %533 = vmatpush1.bf16.xpose.msra.mxu0 0
    %534 = vmatprep.subr.bf16.mxu0 0
    %535 = vmatpush1.bf16.xpose.msra.mxu0 0
    %536 = vmatprep.subr.bf16.mxu0 0
    %537 = vmatpush1.bf16.xpose.msra.mxu0 0
    %538 = vmatprep.mubr.bf16.mxu0 0
    %539 = vmatmul.mubr.bf16.gmra.mrb[0].mxu0 %v495
    %v540 = vpop.f32.mrb[0].mxu0
    %v541 = vadd.f32 %v140, %v540
    %v542 = vpop.f32.mrb[0].mxu0
    %v543 = vpop.f32.mrb[0].mxu0
    %v544 = vadd.f32 %v141, %v543
    %v545 = vpop.f32.mrb[0].mxu0
    %546 = vmatprep.mubr.bf16.mxu0 0
    %547 = vmatmul.mubr.bf16.gmra.mrb[0].mxu0 %v498
    %v548 = vpop.f32.mrb[0].mxu0
    %v549 = vadd.f32 %v142, %v548
    %v550 = vpop.f32.mrb[0].mxu0
    %v551 = vpop.f32.mrb[0].mxu0
    %v552 = vadd.f32 %v143, %v551
    %v553 = vpop.f32.mrb[0].mxu0
    %554 = vdwg.mxu0
    %v555 = vsel %vm247, %v541, -inf
    %556 = vmax.xlane.f32.xlu0 %v555
    %v557 = vpop.xlane.xlu0 %556
    %v558 = vsel %vm247, %v544, -inf
    %559 = vmax.xlane.f32.xlu0 %v558
    %v560 = vpop.xlane.xlu0 %559
    %v561 = vsel %vm247, %v549, -inf
    %562 = vmax.xlane.f32.xlu0 %v561
    %v563 = vpop.xlane.xlu0 %562
    %v564 = vsel %vm247, %v552, -inf
    %565 = vmax.xlane.f32.xlu0 %v564
    %v566 = vpop.xlane.xlu0 %565
    %v567 = vsub.f32 %v541, %v557
    %v568 = vsub.f32 %v544, %v560
    %v569 = vsub.f32 %v549, %v563
    %v570 = vsub.f32 %v552, %v566
    %v571 = vmul.f32 %v567, 1.442695
    %v572 = vpow.pop %v571
    %v573 = vmul.f32 %v568, 1.442695
    %v574 = vpow.pop %v573
    %v575 = vmul.f32 %v569, 1.442695
    %v576 = vpow.pop %v575
    %v577 = vmul.f32 %v570, 1.442695
    %v578 = vpow.pop %v577
    %v579 = vsel %vm247, %v572, 0.0
    %580 = vadd.xlane.f32.xlu0 %v579
    %v581 = vpop.xlane.xlu0 %580
    %v582 = vsel %vm247, %v574, 0.0
    %583 = vadd.xlane.f32.xlu0 %v582
    %v584 = vpop.xlane.xlu0 %583
    %v585 = vsel %vm247, %v576, 0.0
    %586 = vadd.xlane.f32.xlu0 %v585
    %v587 = vpop.xlane.xlu0 %586
    %v588 = vsel %vm247, %v578, 0.0
    %589 = vadd.xlane.f32.xlu0 %v588
    %v590 = vpop.xlane.xlu0 %589
    %v591 = vrcp.pop %v581
    %v592 = vrcp.pop %v584
    %v593 = vrcp.pop %v587
    %v594 = vrcp.pop %v590
    %v595 = vmul.f32 %v572, %v591
    %v596 = vmul.f32 %v574, %v592
    %v597 = vmul.f32 %v576, %v593
    %v598 = vmul.f32 %v578, %v594
    %v599 = vpack.c.bf16 %v596, %v595
    %v600 = vpack.c.bf16 %v598, %v597
    %601 = vrot.lane.b32.xlu0 %v485, 64
    %v602 = vpop.permute.xlu0 %601
    %603 = vrot.lane.b32.xlu0 %v486, 64
    %v604 = vpop.permute.xlu0 %603
    %v608 = vsel %vm247, %v599, 0
    %v611 = vsel %vm247, %v600, 0
    %613 = vmatprep.subr.bf16.mxu0 0
    %614 = vmatpush1.bf16.msra.mxu0 %v602
    %615 = vmatprep.subr.bf16.mxu0 0
    %616 = vmatpush1.bf16.msra.mxu0 %v604
    %617 = vmatprep.subr.bf16.mxu0 0
    %618 = vmatpush1.bf16.msra.mxu0 0
    %619 = vmatprep.subr.bf16.mxu0 0
    %620 = vmatpush1.bf16.msra.mxu0 0
    %621 = vmatprep.subr.bf16.mxu0 0
    %622 = vmatpush1.bf16.msra.mxu0 0
    %623 = vmatprep.subr.bf16.mxu0 0
    %624 = vmatpush1.bf16.msra.mxu0 0
    %625 = vmatprep.subr.bf16.mxu0 0
    %626 = vmatpush1.bf16.msra.mxu0 0
    %627 = vmatprep.subr.bf16.mxu0 0
    %628 = vmatpush1.bf16.msra.mxu0 0
    %629 = vmatprep.subr.bf16.mxu0 0
    %630 = vmatpush1.bf16.msra.mxu0 0
    %631 = vmatprep.subr.bf16.mxu0 0
    %632 = vmatpush1.bf16.msra.mxu0 0
    %633 = vmatprep.subr.bf16.mxu0 0
    %634 = vmatpush1.bf16.msra.mxu0 0
    %635 = vmatprep.subr.bf16.mxu0 0
    %636 = vmatpush1.bf16.msra.mxu0 0
    %637 = vmatprep.subr.bf16.mxu0 0
    %638 = vmatpush1.bf16.msra.mxu0 0
    %639 = vmatprep.subr.bf16.mxu0 0
    %640 = vmatpush1.bf16.msra.mxu0 0
    %641 = vmatprep.subr.bf16.mxu0 0
    %642 = vmatpush1.bf16.msra.mxu0 0
    %643 = vmatprep.subr.bf16.mxu0 0
    %644 = vmatpush1.bf16.msra.mxu0 0
    %645 = vmatprep.mubr.bf16.mxu0 0
    %646 = vmatmul.mubr.bf16.gmra.mrb[0].mxu0 %v608
    %v647 = vpop.f32.mrb[0].mxu0
    %v648 = vadd.f32 0.0, %v647
    %v649 = vpop.f32.mrb[0].mxu0
    %v650 = vpop.f32.mrb[0].mxu0
    %v651 = vadd.f32 0.0, %v650
    %v652 = vpop.f32.mrb[0].mxu0
    %653 = vmatprep.mubr.bf16.mxu0 0
    %654 = vmatmul.mubr.bf16.gmra.mrb[0].mxu0 %v611
    %v655 = vpop.f32.mrb[0].mxu0
    %v656 = vadd.f32 0.0, %v655
    %v657 = vpop.f32.mrb[0].mxu0
    %v658 = vpop.f32.mrb[0].mxu0
    %v659 = vadd.f32 0.0, %v658
    %v660 = vpop.f32.mrb[0].mxu0
    %661 = vdwg.mxu0
    %v662 = vpack.c.bf16 %v651, %v648
    %v663 = vpack.c.bf16 %v659, %v656
    %666 = vrot.lane.b32.xlu0 %v483, 120
    %v667 = vpop.permute.xlu0 %666
    %668 = vrot.lane.b32.xlu0 %v484, 120
    %v669 = vpop.permute.xlu0 %668
    %670 = vrot.lane.b32.xlu0 %v485, 88
    %v671 = vpop.permute.xlu0 %670
    %672 = vrot.lane.b32.xlu0 %v486, 88
    %v673 = vpop.permute.xlu0 %672
    %v675 = vsel %vm493, %v667, 0
    %v678 = vsel %vm493, %v669, 0
    %v681 = vsel %vm493, %v671, 0
    %v684 = vsel %vm493, %v673, 0
    %686 = vmatprep.subr.bf16.mxu0 0
    %687 = vmatpush1.bf16.xpose.msra.mxu0 %v681
    %688 = vmatprep.subr.bf16.mxu0 0
    %689 = vmatpush1.bf16.xpose.msra.mxu0 %v684
    %690 = vmatprep.subr.bf16.mxu0 0
    %691 = vmatpush1.bf16.xpose.msra.mxu0 0
    %692 = vmatprep.subr.bf16.mxu0 0
    %693 = vmatpush1.bf16.xpose.msra.mxu0 0
    %694 = vmatprep.subr.bf16.mxu0 0
    %695 = vmatpush1.bf16.xpose.msra.mxu0 0
    %696 = vmatprep.subr.bf16.mxu0 0
    %697 = vmatpush1.bf16.xpose.msra.mxu0 0
    %698 = vmatprep.subr.bf16.mxu0 0
    %699 = vmatpush1.bf16.xpose.msra.mxu0 0
    %700 = vmatprep.subr.bf16.mxu0 0
    %701 = vmatpush1.bf16.xpose.msra.mxu0 0
    %702 = vmatprep.subr.bf16.mxu0 0
    %703 = vmatpush1.bf16.xpose.msra.mxu0 0
    %704 = vmatprep.subr.bf16.mxu0 0
    %705 = vmatpush1.bf16.xpose.msra.mxu0 0
    %706 = vmatprep.subr.bf16.mxu0 0
    %707 = vmatpush1.bf16.xpose.msra.mxu0 0
    %708 = vmatprep.subr.bf16.mxu0 0
    %709 = vmatpush1.bf16.xpose.msra.mxu0 0
    %710 = vmatprep.subr.bf16.mxu0 0
    %711 = vmatpush1.bf16.xpose.msra.mxu0 0
    %712 = vmatprep.subr.bf16.mxu0 0
    %713 = vmatpush1.bf16.xpose.msra.mxu0 0
    %714 = vmatprep.subr.bf16.mxu0 0
    %715 = vmatpush1.bf16.xpose.msra.mxu0 0
    %716 = vmatprep.subr.bf16.mxu0 0
    %717 = vmatpush1.bf16.xpose.msra.mxu0 0
    %718 = vmatprep.mubr.bf16.mxu0 0
    %719 = vmatmul.mubr.bf16.gmra.mrb[0].mxu0 %v675
    %v720 = vpop.f32.mrb[0].mxu0
    %v721 = vadd.f32 %v140, %v720
    %v722 = vpop.f32.mrb[0].mxu0
    %v723 = vpop.f32.mrb[0].mxu0
    %v724 = vadd.f32 %v141, %v723
    %v725 = vpop.f32.mrb[0].mxu0
    %726 = vmatprep.mubr.bf16.mxu0 0
    %727 = vmatmul.mubr.bf16.gmra.mrb[0].mxu0 %v678
    %v728 = vpop.f32.mrb[0].mxu0
    %v729 = vadd.f32 %v142, %v728
    %v730 = vpop.f32.mrb[0].mxu0
    %v731 = vpop.f32.mrb[0].mxu0
    %v732 = vadd.f32 %v143, %v731
    %v733 = vpop.f32.mrb[0].mxu0
    %734 = vdwg.mxu0
    %v735 = vsel %vm247, %v721, -inf
    %736 = vmax.xlane.f32.xlu0 %v735
    %v737 = vpop.xlane.xlu0 %736
    %v738 = vsel %vm247, %v724, -inf
    %739 = vmax.xlane.f32.xlu0 %v738
    %v740 = vpop.xlane.xlu0 %739
    %v741 = vsel %vm247, %v729, -inf
    %742 = vmax.xlane.f32.xlu0 %v741
    %v743 = vpop.xlane.xlu0 %742
    %v744 = vsel %vm247, %v732, -inf
    %745 = vmax.xlane.f32.xlu0 %v744
    %v746 = vpop.xlane.xlu0 %745
    %v747 = vsub.f32 %v721, %v737
    %v748 = vsub.f32 %v724, %v740
    %v749 = vsub.f32 %v729, %v743
    %v750 = vsub.f32 %v732, %v746
    %v751 = vmul.f32 %v747, 1.442695
    %v752 = vpow.pop %v751
    %v753 = vmul.f32 %v748, 1.442695
    %v754 = vpow.pop %v753
    %v755 = vmul.f32 %v749, 1.442695
    %v756 = vpow.pop %v755
    %v757 = vmul.f32 %v750, 1.442695
    %v758 = vpow.pop %v757
    %v759 = vsel %vm247, %v752, 0.0
    %760 = vadd.xlane.f32.xlu0 %v759
    %v761 = vpop.xlane.xlu0 %760
    %v762 = vsel %vm247, %v754, 0.0
    %763 = vadd.xlane.f32.xlu0 %v762
    %v764 = vpop.xlane.xlu0 %763
    %v765 = vsel %vm247, %v756, 0.0
    %766 = vadd.xlane.f32.xlu0 %v765
    %v767 = vpop.xlane.xlu0 %766
    %v768 = vsel %vm247, %v758, 0.0
    %769 = vadd.xlane.f32.xlu0 %v768
    %v770 = vpop.xlane.xlu0 %769
    %v771 = vrcp.pop %v761
    %v772 = vrcp.pop %v764
    %v773 = vrcp.pop %v767
    %v774 = vrcp.pop %v770
    %v775 = vmul.f32 %v752, %v771
    %v776 = vmul.f32 %v754, %v772
    %v777 = vmul.f32 %v756, %v773
    %v778 = vmul.f32 %v758, %v774
    %v779 = vpack.c.bf16 %v776, %v775
    %v780 = vpack.c.bf16 %v778, %v777
    %781 = vrot.lane.b32.xlu0 %v485, 56
    %v782 = vpop.permute.xlu0 %781
    %783 = vrot.lane.b32.xlu0 %v486, 56
    %v784 = vpop.permute.xlu0 %783
    %v788 = vsel %vm247, %v779, 0
    %v791 = vsel %vm247, %v780, 0
    %793 = vmatprep.subr.bf16.mxu0 0
    %794 = vmatpush1.bf16.msra.mxu0 %v782
    %795 = vmatprep.subr.bf16.mxu0 0
    %796 = vmatpush1.bf16.msra.mxu0 %v784
    %797 = vmatprep.subr.bf16.mxu0 0
    %798 = vmatpush1.bf16.msra.mxu0 0
    %799 = vmatprep.subr.bf16.mxu0 0
    %800 = vmatpush1.bf16.msra.mxu0 0
    %801 = vmatprep.subr.bf16.mxu0 0
    %802 = vmatpush1.bf16.msra.mxu0 0
    %803 = vmatprep.subr.bf16.mxu0 0
    %804 = vmatpush1.bf16.msra.mxu0 0
    %805 = vmatprep.subr.bf16.mxu0 0
    %806 = vmatpush1.bf16.msra.mxu0 0
    %807 = vmatprep.subr.bf16.mxu0 0
    %808 = vmatpush1.bf16.msra.mxu0 0
    %809 = vmatprep.subr.bf16.mxu0 0
    %810 = vmatpush1.bf16.msra.mxu0 0
    %811 = vmatprep.subr.bf16.mxu0 0
    %812 = vmatpush1.bf16.msra.mxu0 0
    %813 = vmatprep.subr.bf16.mxu0 0
    %814 = vmatpush1.bf16.msra.mxu0 0
    %815 = vmatprep.subr.bf16.mxu0 0
    %816 = vmatpush1.bf16.msra.mxu0 0
    %817 = vmatprep.subr.bf16.mxu0 0
    %818 = vmatpush1.bf16.msra.mxu0 0
    %819 = vmatprep.subr.bf16.mxu0 0
    %820 = vmatpush1.bf16.msra.mxu0 0
    %821 = vmatprep.subr.bf16.mxu0 0
    %822 = vmatpush1.bf16.msra.mxu0 0
    %823 = vmatprep.subr.bf16.mxu0 0
    %824 = vmatpush1.bf16.msra.mxu0 0
    %825 = vmatprep.mubr.bf16.mxu0 0
    %826 = vmatmul.mubr.bf16.gmra.mrb[0].mxu0 %v788
    %v827 = vpop.f32.mrb[0].mxu0
    %v828 = vadd.f32 0.0, %v827
    %v829 = vpop.f32.mrb[0].mxu0
    %v830 = vpop.f32.mrb[0].mxu0
    %v831 = vadd.f32 0.0, %v830
    %v832 = vpop.f32.mrb[0].mxu0
    %833 = vmatprep.mubr.bf16.mxu0 0
    %834 = vmatmul.mubr.bf16.gmra.mrb[0].mxu0 %v791
    %v835 = vpop.f32.mrb[0].mxu0
    %v836 = vadd.f32 0.0, %v835
    %v837 = vpop.f32.mrb[0].mxu0
    %v838 = vpop.f32.mrb[0].mxu0
    %v839 = vadd.f32 0.0, %v838
    %v840 = vpop.f32.mrb[0].mxu0
    %841 = vdwg.mxu0
    %v842 = vpack.c.bf16 %v831, %v828
    %v843 = vpack.c.bf16 %v839, %v836
    %v845 = vsel %vm493, %v842, 0
    %v848 = vsel %vm493, %v843, 0
    %vm850 = vcmask 1043456
    %v852 = vsel %vm850, %v476, 0
    %854 = vmatprep.subr.bf16.mxu0 0
    %855 = vmatpush1.bf16.msra.mxu0 %v852
    %856 = vmatprep.subr.bf16.mxu0 0
    %857 = vmatpush1.bf16.msra.mxu0 0
    %858 = vmatprep.subr.bf16.mxu0 0
    %859 = vmatpush1.bf16.msra.mxu0 0
    %860 = vmatprep.subr.bf16.mxu0 0
    %861 = vmatpush1.bf16.msra.mxu0 0
    %862 = vmatprep.subr.bf16.mxu0 0
    %863 = vmatpush1.bf16.msra.mxu0 0
    %864 = vmatprep.subr.bf16.mxu0 0
    %865 = vmatpush1.bf16.msra.mxu0 0
    %866 = vmatprep.subr.bf16.mxu0 0
    %867 = vmatpush1.bf16.msra.mxu0 0
    %868 = vmatprep.subr.bf16.mxu0 0
    %869 = vmatpush1.bf16.msra.mxu0 0
    %870 = vmatprep.subr.bf16.mxu0 0
    %871 = vmatpush1.bf16.msra.mxu0 0
    %872 = vmatprep.subr.bf16.mxu0 0
    %873 = vmatpush1.bf16.msra.mxu0 0
    %874 = vmatprep.subr.bf16.mxu0 0
    %875 = vmatpush1.bf16.msra.mxu0 0
    %876 = vmatprep.subr.bf16.mxu0 0
    %877 = vmatpush1.bf16.msra.mxu0 0
    %878 = vmatprep.subr.bf16.mxu0 0
    %879 = vmatpush1.bf16.msra.mxu0 0
    %880 = vmatprep.subr.bf16.mxu0 0
    %881 = vmatpush1.bf16.msra.mxu0 0
    %882 = vmatprep.subr.bf16.mxu0 0
    %883 = vmatpush1.bf16.msra.mxu0 0
    %884 = vmatprep.subr.bf16.mxu0 0
    %885 = vmatpush1.bf16.msra.mxu0 0
    %886 = vmatprep.mubr.bf16.mxu0 0
    %887 = vmatmul.mubr.bf16.gmra.mrb[0].mxu0 %v845
    %v888 = vpop.f32.mrb[0].mxu0
    %v889 = vadd.f32 0.0, %v888
    %v890 = vpop.f32.mrb[0].mxu0
    %v891 = vpop.f32.mrb[0].mxu0
    %v892 = vadd.f32 0.0, %v891
    %v893 = vpop.f32.mrb[0].mxu0
    %894 = vmatprep.mubr.bf16.mxu0 0
    %895 = vmatmul.mubr.bf16.gmra.mrb[0].mxu0 %v848
    %v896 = vpop.f32.mrb[0].mxu0
    %v897 = vadd.f32 0.0, %v896
    %v898 = vpop.f32.mrb[0].mxu0
    %v899 = vpop.f32.mrb[0].mxu0
    %v900 = vadd.f32 0.0, %v899
    %v901 = vpop.f32.mrb[0].mxu0
    %902 = vdwg.mxu0
    %v904 = vsel %vm493, %v662, 0
    %v907 = vsel %vm493, %v663, 0
    %v910 = vsel %vm850, %v475, 0
    %912 = vmatprep.subr.bf16.mxu0 0
    %913 = vmatpush1.bf16.msra.mxu0 %v910
    %914 = vmatprep.subr.bf16.mxu0 0
    %915 = vmatpush1.bf16.msra.mxu0 0
    %916 = vmatprep.subr.bf16.mxu0 0
    %917 = vmatpush1.bf16.msra.mxu0 0
    %918 = vmatprep.subr.bf16.mxu0 0
    %919 = vmatpush1.bf16.msra.mxu0 0
    %920 = vmatprep.subr.bf16.mxu0 0
    %921 = vmatpush1.bf16.msra.mxu0 0
    %922 = vmatprep.subr.bf16.mxu0 0
    %923 = vmatpush1.bf16.msra.mxu0 0
    %924 = vmatprep.subr.bf16.mxu0 0
    %925 = vmatpush1.bf16.msra.mxu0 0
    %926 = vmatprep.subr.bf16.mxu0 0
    %927 = vmatpush1.bf16.msra.mxu0 0
    %928 = vmatprep.subr.bf16.mxu0 0
    %929 = vmatpush1.bf16.msra.mxu0 0
    %930 = vmatprep.subr.bf16.mxu0 0
    %931 = vmatpush1.bf16.msra.mxu0 0
    %932 = vmatprep.subr.bf16.mxu0 0
    %933 = vmatpush1.bf16.msra.mxu0 0
    %934 = vmatprep.subr.bf16.mxu0 0
    %935 = vmatpush1.bf16.msra.mxu0 0
    %936 = vmatprep.subr.bf16.mxu0 0
    %937 = vmatpush1.bf16.msra.mxu0 0
    %938 = vmatprep.subr.bf16.mxu0 0
    %939 = vmatpush1.bf16.msra.mxu0 0
    %940 = vmatprep.subr.bf16.mxu0 0
    %941 = vmatpush1.bf16.msra.mxu0 0
    %942 = vmatprep.subr.bf16.mxu0 0
    %943 = vmatpush1.bf16.msra.mxu0 0
    %944 = vmatprep.mubr.bf16.mxu0 0
    %945 = vmatmul.mubr.bf16.gmra.mrb[0].mxu0 %v904
    %v946 = vpop.f32.mrb[0].mxu0
    %v947 = vadd.f32 %v889, %v946
    %v948 = vpop.f32.mrb[0].mxu0
    %v949 = vpop.f32.mrb[0].mxu0
    %v950 = vadd.f32 %v892, %v949
    %v951 = vpop.f32.mrb[0].mxu0
    %952 = vmatprep.mubr.bf16.mxu0 0
    %953 = vmatmul.mubr.bf16.gmra.mrb[0].mxu0 %v907
    %v954 = vpop.f32.mrb[0].mxu0
    %v955 = vadd.f32 %v897, %v954
    %v956 = vpop.f32.mrb[0].mxu0
    %v957 = vpop.f32.mrb[0].mxu0
    %v958 = vadd.f32 %v900, %v957
    %v959 = vpop.f32.mrb[0].mxu0
    %960 = vdwg.mxu0
    %961 = vrot.lane.b32.xlu0 %v483, 112
    %v962 = vpop.permute.xlu0 %961
    %963 = vrot.lane.b32.xlu0 %v484, 112
    %v964 = vpop.permute.xlu0 %963
    %965 = vrot.lane.b32.xlu0 %v485, 80
    %v966 = vpop.permute.xlu0 %965
    %967 = vrot.lane.b32.xlu0 %v486, 80
    %v968 = vpop.permute.xlu0 %967
    %v970 = vsel %vm493, %v962, 0
    %v973 = vsel %vm493, %v964, 0
    %v976 = vsel %vm493, %v966, 0
    %v979 = vsel %vm493, %v968, 0
    %981 = vmatprep.subr.bf16.mxu0 0
    %982 = vmatpush1.bf16.xpose.msra.mxu0 %v976
    %983 = vmatprep.subr.bf16.mxu0 0
    %984 = vmatpush1.bf16.xpose.msra.mxu0 %v979
    %985 = vmatprep.subr.bf16.mxu0 0
    %986 = vmatpush1.bf16.xpose.msra.mxu0 0
    %987 = vmatprep.subr.bf16.mxu0 0
    %988 = vmatpush1.bf16.xpose.msra.mxu0 0
    %989 = vmatprep.subr.bf16.mxu0 0
    %990 = vmatpush1.bf16.xpose.msra.mxu0 0
    %991 = vmatprep.subr.bf16.mxu0 0
    %992 = vmatpush1.bf16.xpose.msra.mxu0 0
    %993 = vmatprep.subr.bf16.mxu0 0
    %994 = vmatpush1.bf16.xpose.msra.mxu0 0
    %995 = vmatprep.subr.bf16.mxu0 0
    %996 = vmatpush1.bf16.xpose.msra.mxu0 0
    %997 = vmatprep.subr.bf16.mxu0 0
    %998 = vmatpush1.bf16.xpose.msra.mxu0 0
    %999 = vmatprep.subr.bf16.mxu0 0
    %1000 = vmatpush1.bf16.xpose.msra.mxu0 0
    %1001 = vmatprep.subr.bf16.mxu0 0
    %1002 = vmatpush1.bf16.xpose.msra.mxu0 0
    %1003 = vmatprep.subr.bf16.mxu0 0
    %1004 = vmatpush1.bf16.xpose.msra.mxu0 0
    %1005 = vmatprep.subr.bf16.mxu0 0
    %1006 = vmatpush1.bf16.xpose.msra.mxu0 0
    %1007 = vmatprep.subr.bf16.mxu0 0
    %1008 = vmatpush1.bf16.xpose.msra.mxu0 0
    %1009 = vmatprep.subr.bf16.mxu0 0
    %1010 = vmatpush1.bf16.xpose.msra.mxu0 0
    %1011 = vmatprep.subr.bf16.mxu0 0
    %1012 = vmatpush1.bf16.xpose.msra.mxu0 0
    %1013 = vmatprep.mubr.bf16.mxu0 0
    %1014 = vmatmul.mubr.bf16.gmra.mrb[0].mxu0 %v970
    %v1015 = vpop.f32.mrb[0].mxu0
    %v1016 = vadd.f32 %v140, %v1015
    %v1017 = vpop.f32.mrb[0].mxu0
    %v1018 = vpop.f32.mrb[0].mxu0
    %v1019 = vadd.f32 %v141, %v1018
    %v1020 = vpop.f32.mrb[0].mxu0
    %1021 = vmatprep.mubr.bf16.mxu0 0
    %1022 = vmatmul.mubr.bf16.gmra.mrb[0].mxu0 %v973
    %v1023 = vpop.f32.mrb[0].mxu0
    %v1024 = vadd.f32 %v142, %v1023
    %v1025 = vpop.f32.mrb[0].mxu0
    %v1026 = vpop.f32.mrb[0].mxu0
    %v1027 = vadd.f32 %v143, %v1026
    %v1028 = vpop.f32.mrb[0].mxu0
    %1029 = vdwg.mxu0
    %v1030 = vsel %vm247, %v1016, -inf
    %1031 = vmax.xlane.f32.xlu0 %v1030
    %v1032 = vpop.xlane.xlu0 %1031
    %v1033 = vsel %vm247, %v1019, -inf
    %1034 = vmax.xlane.f32.xlu0 %v1033
    %v1035 = vpop.xlane.xlu0 %1034
    %v1036 = vsel %vm247, %v1024, -inf
    %1037 = vmax.xlane.f32.xlu0 %v1036
    %v1038 = vpop.xlane.xlu0 %1037
    %v1039 = vsel %vm247, %v1027, -inf
    %1040 = vmax.xlane.f32.xlu0 %v1039
    %v1041 = vpop.xlane.xlu0 %1040
    %v1042 = vsub.f32 %v1016, %v1032
    %v1043 = vsub.f32 %v1019, %v1035
    %v1044 = vsub.f32 %v1024, %v1038
    %v1045 = vsub.f32 %v1027, %v1041
    %v1046 = vmul.f32 %v1042, 1.442695
    %v1047 = vpow.pop %v1046
    %v1048 = vmul.f32 %v1043, 1.442695
    %v1049 = vpow.pop %v1048
    %v1050 = vmul.f32 %v1044, 1.442695
    %v1051 = vpow.pop %v1050
    %v1052 = vmul.f32 %v1045, 1.442695
    %v1053 = vpow.pop %v1052
    %v1054 = vsel %vm247, %v1047, 0.0
    %1055 = vadd.xlane.f32.xlu0 %v1054
    %v1056 = vpop.xlane.xlu0 %1055
    %v1057 = vsel %vm247, %v1049, 0.0
    %1058 = vadd.xlane.f32.xlu0 %v1057
    %v1059 = vpop.xlane.xlu0 %1058
    %v1060 = vsel %vm247, %v1051, 0.0
    %1061 = vadd.xlane.f32.xlu0 %v1060
    %v1062 = vpop.xlane.xlu0 %1061
    %v1063 = vsel %vm247, %v1053, 0.0
    %1064 = vadd.xlane.f32.xlu0 %v1063
    %v1065 = vpop.xlane.xlu0 %1064
    %v1066 = vrcp.pop %v1056
    %v1067 = vrcp.pop %v1059
    %v1068 = vrcp.pop %v1062
    %v1069 = vrcp.pop %v1065
    %v1070 = vmul.f32 %v1047, %v1066
    %v1071 = vmul.f32 %v1049, %v1067
    %v1072 = vmul.f32 %v1051, %v1068
    %v1073 = vmul.f32 %v1053, %v1069
    %v1074 = vpack.c.bf16 %v1071, %v1070
    %v1075 = vpack.c.bf16 %v1073, %v1072
    %1076 = vrot.lane.b32.xlu0 %v485, 48
    %v1077 = vpop.permute.xlu0 %1076
    %1078 = vrot.lane.b32.xlu0 %v486, 48
    %v1079 = vpop.permute.xlu0 %1078
    %v1083 = vsel %vm247, %v1074, 0
    %v1086 = vsel %vm247, %v1075, 0
    %1088 = vmatprep.subr.bf16.mxu0 0
    %1089 = vmatpush1.bf16.msra.mxu0 %v1077
    %1090 = vmatprep.subr.bf16.mxu0 0
    %1091 = vmatpush1.bf16.msra.mxu0 %v1079
    %1092 = vmatprep.subr.bf16.mxu0 0
    %1093 = vmatpush1.bf16.msra.mxu0 0
    %1094 = vmatprep.subr.bf16.mxu0 0
    %1095 = vmatpush1.bf16.msra.mxu0 0
    %1096 = vmatprep.subr.bf16.mxu0 0
    %1097 = vmatpush1.bf16.msra.mxu0 0
    %1098 = vmatprep.subr.bf16.mxu0 0
    %1099 = vmatpush1.bf16.msra.mxu0 0
    %1100 = vmatprep.subr.bf16.mxu0 0
    %1101 = vmatpush1.bf16.msra.mxu0 0
    %1102 = vmatprep.subr.bf16.mxu0 0
    %1103 = vmatpush1.bf16.msra.mxu0 0
    %1104 = vmatprep.subr.bf16.mxu0 0
    %1105 = vmatpush1.bf16.msra.mxu0 0
    %1106 = vmatprep.subr.bf16.mxu0 0
    %1107 = vmatpush1.bf16.msra.mxu0 0
    %1108 = vmatprep.subr.bf16.mxu0 0
    %1109 = vmatpush1.bf16.msra.mxu0 0
    %1110 = vmatprep.subr.bf16.mxu0 0
    %1111 = vmatpush1.bf16.msra.mxu0 0
    %1112 = vmatprep.subr.bf16.mxu0 0
    %1113 = vmatpush1.bf16.msra.mxu0 0
    %1114 = vmatprep.subr.bf16.mxu0 0
    %1115 = vmatpush1.bf16.msra.mxu0 0
    %1116 = vmatprep.subr.bf16.mxu0 0
    %1117 = vmatpush1.bf16.msra.mxu0 0
    %1118 = vmatprep.subr.bf16.mxu0 0
    %1119 = vmatpush1.bf16.msra.mxu0 0
    %1120 = vmatprep.mubr.bf16.mxu0 0
    %1121 = vmatmul.mubr.bf16.gmra.mrb[0].mxu0 %v1083
    %v1122 = vpop.f32.mrb[0].mxu0
    %v1123 = vadd.f32 0.0, %v1122
    %v1124 = vpop.f32.mrb[0].mxu0
    %v1125 = vpop.f32.mrb[0].mxu0
    %v1126 = vadd.f32 0.0, %v1125
    %v1127 = vpop.f32.mrb[0].mxu0
    %1128 = vmatprep.mubr.bf16.mxu0 0
    %1129 = vmatmul.mubr.bf16.gmra.mrb[0].mxu0 %v1086
    %v1130 = vpop.f32.mrb[0].mxu0
    %v1131 = vadd.f32 0.0, %v1130
    %v1132 = vpop.f32.mrb[0].mxu0
    %v1133 = vpop.f32.mrb[0].mxu0
    %v1134 = vadd.f32 0.0, %v1133
    %v1135 = vpop.f32.mrb[0].mxu0
    %1136 = vdwg.mxu0
    %v1137 = vpack.c.bf16 %v1126, %v1123
    %v1138 = vpack.c.bf16 %v1134, %v1131
    %v1140 = vsel %vm493, %v1137, 0
    %v1143 = vsel %vm493, %v1138, 0
    %v1146 = vsel %vm850, %v477, 0
    %1148 = vmatprep.subr.bf16.mxu0 0
    %1149 = vmatpush1.bf16.msra.mxu0 %v1146
    %1150 = vmatprep.subr.bf16.mxu0 0
    %1151 = vmatpush1.bf16.msra.mxu0 0
    %1152 = vmatprep.subr.bf16.mxu0 0
    %1153 = vmatpush1.bf16.msra.mxu0 0
    %1154 = vmatprep.subr.bf16.mxu0 0
    %1155 = vmatpush1.bf16.msra.mxu0 0
    %1156 = vmatprep.subr.bf16.mxu0 0
    %1157 = vmatpush1.bf16.msra.mxu0 0
    %1158 = vmatprep.subr.bf16.mxu0 0
    %1159 = vmatpush1.bf16.msra.mxu0 0
    %1160 = vmatprep.subr.bf16.mxu0 0
    %1161 = vmatpush1.bf16.msra.mxu0 0
    %1162 = vmatprep.subr.bf16.mxu0 0
    %1163 = vmatpush1.bf16.msra.mxu0 0
    %1164 = vmatprep.subr.bf16.mxu0 0
    %1165 = vmatpush1.bf16.msra.mxu0 0
    %1166 = vmatprep.subr.bf16.mxu0 0
    %1167 = vmatpush1.bf16.msra.mxu0 0
    %1168 = vmatprep.subr.bf16.mxu0 0
    %1169 = vmatpush1.bf16.msra.mxu0 0
    %1170 = vmatprep.subr.bf16.mxu0 0
    %1171 = vmatpush1.bf16.msra.mxu0 0
    %1172 = vmatprep.subr.bf16.mxu0 0
    %1173 = vmatpush1.bf16.msra.mxu0 0
    %1174 = vmatprep.subr.bf16.mxu0 0
    %1175 = vmatpush1.bf16.msra.mxu0 0
    %1176 = vmatprep.subr.bf16.mxu0 0
    %1177 = vmatpush1.bf16.msra.mxu0 0
    %1178 = vmatprep.subr.bf16.mxu0 0
    %1179 = vmatpush1.bf16.msra.mxu0 0
    %1180 = vmatprep.mubr.bf16.mxu0 0
    %1181 = vmatmul.mubr.bf16.gmra.mrb[0].mxu0 %v1140
    %v1182 = vpop.f32.mrb[0].mxu0
    %v1183 = vadd.f32 0.0, %v1182
    %v1184 = vpop.f32.mrb[0].mxu0
    %v1185 = vpop.f32.mrb[0].mxu0
    %v1186 = vadd.f32 0.0, %v1185
    %v1187 = vpop.f32.mrb[0].mxu0
    %1188 = vmatprep.mubr.bf16.mxu0 0
    %1189 = vmatmul.mubr.bf16.gmra.mrb[0].mxu0 %v1143
    %v1190 = vpop.f32.mrb[0].mxu0
    %v1191 = vadd.f32 0.0, %v1190
    %v1192 = vpop.f32.mrb[0].mxu0
    %v1193 = vpop.f32.mrb[0].mxu0
    %v1194 = vadd.f32 0.0, %v1193
    %v1195 = vpop.f32.mrb[0].mxu0
    %1196 = vdwg.mxu0
    %v1197 = vadd.f32 %v947, %v1183
    %v1198 = vadd.f32 %v950, %v1186
    %v1199 = vadd.f32 %v955, %v1191
    %v1200 = vadd.f32 %v958, %v1194
    %1201 = vrot.lane.b32.xlu0 %v483, 104
    %v1202 = vpop.permute.xlu0 %1201
    %1203 = vrot.lane.b32.xlu0 %v484, 104
    %v1204 = vpop.permute.xlu0 %1203
    %1205 = vrot.lane.b32.xlu0 %v485, 72
    %v1206 = vpop.permute.xlu0 %1205
    %1207 = vrot.lane.b32.xlu0 %v486, 72
    %v1208 = vpop.permute.xlu0 %1207
    %v1210 = vsel %vm493, %v1202, 0
    %v1213 = vsel %vm493, %v1204, 0
    %v1216 = vsel %vm493, %v1206, 0
    %v1219 = vsel %vm493, %v1208, 0
    %1221 = vmatprep.subr.bf16.mxu0 0
    %1222 = vmatpush1.bf16.xpose.msra.mxu0 %v1216
    %1223 = vmatprep.subr.bf16.mxu0 0
    %1224 = vmatpush1.bf16.xpose.msra.mxu0 %v1219
    %1225 = vmatprep.subr.bf16.mxu0 0
    %1226 = vmatpush1.bf16.xpose.msra.mxu0 0
    %1227 = vmatprep.subr.bf16.mxu0 0
    %1228 = vmatpush1.bf16.xpose.msra.mxu0 0
    %1229 = vmatprep.subr.bf16.mxu0 0
    %1230 = vmatpush1.bf16.xpose.msra.mxu0 0
    %1231 = vmatprep.subr.bf16.mxu0 0
    %1232 = vmatpush1.bf16.xpose.msra.mxu0 0
    %1233 = vmatprep.subr.bf16.mxu0 0
    %1234 = vmatpush1.bf16.xpose.msra.mxu0 0
    %1235 = vmatprep.subr.bf16.mxu0 0
    %1236 = vmatpush1.bf16.xpose.msra.mxu0 0
    %1237 = vmatprep.subr.bf16.mxu0 0
    %1238 = vmatpush1.bf16.xpose.msra.mxu0 0
    %1239 = vmatprep.subr.bf16.mxu0 0
    %1240 = vmatpush1.bf16.xpose.msra.mxu0 0
    %1241 = vmatprep.subr.bf16.mxu0 0
    %1242 = vmatpush1.bf16.xpose.msra.mxu0 0
    %1243 = vmatprep.subr.bf16.mxu0 0
    %1244 = vmatpush1.bf16.xpose.msra.mxu0 0
    %1245 = vmatprep.subr.bf16.mxu0 0
    %1246 = vmatpush1.bf16.xpose.msra.mxu0 0
    %1247 = vmatprep.subr.bf16.mxu0 0
    %1248 = vmatpush1.bf16.xpose.msra.mxu0 0
    %1249 = vmatprep.subr.bf16.mxu0 0
    %1250 = vmatpush1.bf16.xpose.msra.mxu0 0
    %1251 = vmatprep.subr.bf16.mxu0 0
    %1252 = vmatpush1.bf16.xpose.msra.mxu0 0
    %1253 = vmatprep.mubr.bf16.mxu0 0
    %1254 = vmatmul.mubr.bf16.gmra.mrb[0].mxu0 %v1210
    %v1255 = vpop.f32.mrb[0].mxu0
    %v1256 = vadd.f32 %v140, %v1255
    %v1257 = vpop.f32.mrb[0].mxu0
    %v1258 = vpop.f32.mrb[0].mxu0
    %v1259 = vadd.f32 %v141, %v1258
    %v1260 = vpop.f32.mrb[0].mxu0
    %1261 = vmatprep.mubr.bf16.mxu0 0
    %1262 = vmatmul.mubr.bf16.gmra.mrb[0].mxu0 %v1213
    %v1263 = vpop.f32.mrb[0].mxu0
    %v1264 = vadd.f32 %v142, %v1263
    %v1265 = vpop.f32.mrb[0].mxu0
    %v1266 = vpop.f32.mrb[0].mxu0
    %v1267 = vadd.f32 %v143, %v1266
    %v1268 = vpop.f32.mrb[0].mxu0
    %1269 = vdwg.mxu0
    %v1270 = vsel %vm247, %v1256, -inf
    %1271 = vmax.xlane.f32.xlu0 %v1270
    %v1272 = vpop.xlane.xlu0 %1271
    %v1273 = vsel %vm247, %v1259, -inf
    %1274 = vmax.xlane.f32.xlu0 %v1273
    %v1275 = vpop.xlane.xlu0 %1274
    %v1276 = vsel %vm247, %v1264, -inf
    %1277 = vmax.xlane.f32.xlu0 %v1276
    %v1278 = vpop.xlane.xlu0 %1277
    %v1279 = vsel %vm247, %v1267, -inf
    %1280 = vmax.xlane.f32.xlu0 %v1279
    %v1281 = vpop.xlane.xlu0 %1280
    %v1282 = vsub.f32 %v1256, %v1272
    %v1283 = vsub.f32 %v1259, %v1275
    %v1284 = vsub.f32 %v1264, %v1278
    %v1285 = vsub.f32 %v1267, %v1281
    %v1286 = vmul.f32 %v1282, 1.442695
    %v1287 = vpow.pop %v1286
    %v1288 = vmul.f32 %v1283, 1.442695
    %v1289 = vpow.pop %v1288
    %v1290 = vmul.f32 %v1284, 1.442695
    %v1291 = vpow.pop %v1290
    %v1292 = vmul.f32 %v1285, 1.442695
    %v1293 = vpow.pop %v1292
    %v1294 = vsel %vm247, %v1287, 0.0
    %1295 = vadd.xlane.f32.xlu0 %v1294
    %v1296 = vpop.xlane.xlu0 %1295
    %v1297 = vsel %vm247, %v1289, 0.0
    %1298 = vadd.xlane.f32.xlu0 %v1297
    %v1299 = vpop.xlane.xlu0 %1298
    %v1300 = vsel %vm247, %v1291, 0.0
    %1301 = vadd.xlane.f32.xlu0 %v1300
    %v1302 = vpop.xlane.xlu0 %1301
    %v1303 = vsel %vm247, %v1293, 0.0
    %1304 = vadd.xlane.f32.xlu0 %v1303
    %v1305 = vpop.xlane.xlu0 %1304
    %v1306 = vrcp.pop %v1296
    %v1307 = vrcp.pop %v1299
    %v1308 = vrcp.pop %v1302
    %v1309 = vrcp.pop %v1305
    %v1310 = vmul.f32 %v1287, %v1306
    %v1311 = vmul.f32 %v1289, %v1307
    %v1312 = vmul.f32 %v1291, %v1308
    %v1313 = vmul.f32 %v1293, %v1309
    %v1314 = vpack.c.bf16 %v1311, %v1310
    %v1315 = vpack.c.bf16 %v1313, %v1312
    %1316 = vrot.lane.b32.xlu0 %v485, 40
    %v1317 = vpop.permute.xlu0 %1316
    %1318 = vrot.lane.b32.xlu0 %v486, 40
    %v1319 = vpop.permute.xlu0 %1318
    %v1323 = vsel %vm247, %v1314, 0
    %v1326 = vsel %vm247, %v1315, 0
    %1328 = vmatprep.subr.bf16.mxu0 0
    %1329 = vmatpush1.bf16.msra.mxu0 %v1317
    %1330 = vmatprep.subr.bf16.mxu0 0
    %1331 = vmatpush1.bf16.msra.mxu0 %v1319
    %1332 = vmatprep.subr.bf16.mxu0 0
    %1333 = vmatpush1.bf16.msra.mxu0 0
    %1334 = vmatprep.subr.bf16.mxu0 0
    %1335 = vmatpush1.bf16.msra.mxu0 0
    %1336 = vmatprep.subr.bf16.mxu0 0
    %1337 = vmatpush1.bf16.msra.mxu0 0
    %1338 = vmatprep.subr.bf16.mxu0 0
    %1339 = vmatpush1.bf16.msra.mxu0 0
    %1340 = vmatprep.subr.bf16.mxu0 0
    %1341 = vmatpush1.bf16.msra.mxu0 0
    %1342 = vmatprep.subr.bf16.mxu0 0
    %1343 = vmatpush1.bf16.msra.mxu0 0
    %1344 = vmatprep.subr.bf16.mxu0 0
    %1345 = vmatpush1.bf16.msra.mxu0 0
    %1346 = vmatprep.subr.bf16.mxu0 0
    %1347 = vmatpush1.bf16.msra.mxu0 0
    %1348 = vmatprep.subr.bf16.mxu0 0
    %1349 = vmatpush1.bf16.msra.mxu0 0
    %1350 = vmatprep.subr.bf16.mxu0 0
    %1351 = vmatpush1.bf16.msra.mxu0 0
    %1352 = vmatprep.subr.bf16.mxu0 0
    %1353 = vmatpush1.bf16.msra.mxu0 0
    %1354 = vmatprep.subr.bf16.mxu0 0
    %1355 = vmatpush1.bf16.msra.mxu0 0
    %1356 = vmatprep.subr.bf16.mxu0 0
    %1357 = vmatpush1.bf16.msra.mxu0 0
    %1358 = vmatprep.subr.bf16.mxu0 0
    %1359 = vmatpush1.bf16.msra.mxu0 0
    %1360 = vmatprep.mubr.bf16.mxu0 0
    %1361 = vmatmul.mubr.bf16.gmra.mrb[0].mxu0 %v1323
    %v1362 = vpop.f32.mrb[0].mxu0
    %v1363 = vadd.f32 0.0, %v1362
    %v1364 = vpop.f32.mrb[0].mxu0
    %v1365 = vpop.f32.mrb[0].mxu0
    %v1366 = vadd.f32 0.0, %v1365
    %v1367 = vpop.f32.mrb[0].mxu0
    %1368 = vmatprep.mubr.bf16.mxu0 0
    %1369 = vmatmul.mubr.bf16.gmra.mrb[0].mxu0 %v1326
    %v1370 = vpop.f32.mrb[0].mxu0
    %v1371 = vadd.f32 0.0, %v1370
    %v1372 = vpop.f32.mrb[0].mxu0
    %v1373 = vpop.f32.mrb[0].mxu0
    %v1374 = vadd.f32 0.0, %v1373
    %v1375 = vpop.f32.mrb[0].mxu0
    %1376 = vdwg.mxu0
    %v1377 = vpack.c.bf16 %v1366, %v1363
    %v1378 = vpack.c.bf16 %v1374, %v1371
    %v1380 = vsel %vm493, %v1377, 0
    %v1383 = vsel %vm493, %v1378, 0
    %v1386 = vsel %vm850, %v478, 0
    %1388 = vmatprep.subr.bf16.mxu0 0
    %1389 = vmatpush1.bf16.msra.mxu0 %v1386
    %1390 = vmatprep.subr.bf16.mxu0 0
    %1391 = vmatpush1.bf16.msra.mxu0 0
    %1392 = vmatprep.subr.bf16.mxu0 0
    %1393 = vmatpush1.bf16.msra.mxu0 0
    %1394 = vmatprep.subr.bf16.mxu0 0
    %1395 = vmatpush1.bf16.msra.mxu0 0
    %1396 = vmatprep.subr.bf16.mxu0 0
    %1397 = vmatpush1.bf16.msra.mxu0 0
    %1398 = vmatprep.subr.bf16.mxu0 0
    %1399 = vmatpush1.bf16.msra.mxu0 0
    %1400 = vmatprep.subr.bf16.mxu0 0
    %1401 = vmatpush1.bf16.msra.mxu0 0
    %1402 = vmatprep.subr.bf16.mxu0 0
    %1403 = vmatpush1.bf16.msra.mxu0 0
    %1404 = vmatprep.subr.bf16.mxu0 0
    %1405 = vmatpush1.bf16.msra.mxu0 0
    %1406 = vmatprep.subr.bf16.mxu0 0
    %1407 = vmatpush1.bf16.msra.mxu0 0
    %1408 = vmatprep.subr.bf16.mxu0 0
    %1409 = vmatpush1.bf16.msra.mxu0 0
    %1410 = vmatprep.subr.bf16.mxu0 0
    %1411 = vmatpush1.bf16.msra.mxu0 0
    %1412 = vmatprep.subr.bf16.mxu0 0
    %1413 = vmatpush1.bf16.msra.mxu0 0
    %1414 = vmatprep.subr.bf16.mxu0 0
    %1415 = vmatpush1.bf16.msra.mxu0 0
    %1416 = vmatprep.subr.bf16.mxu0 0
    %1417 = vmatpush1.bf16.msra.mxu0 0
    %1418 = vmatprep.subr.bf16.mxu0 0
    %1419 = vmatpush1.bf16.msra.mxu0 0
    %1420 = vmatprep.mubr.bf16.mxu0 0
    %1421 = vmatmul.mubr.bf16.gmra.mrb[0].mxu0 %v1380
    %v1422 = vpop.f32.mrb[0].mxu0
    %v1423 = vadd.f32 0.0, %v1422
    %v1424 = vpop.f32.mrb[0].mxu0
    %v1425 = vpop.f32.mrb[0].mxu0
    %v1426 = vadd.f32 0.0, %v1425
    %v1427 = vpop.f32.mrb[0].mxu0
    %1428 = vmatprep.mubr.bf16.mxu0 0
    %1429 = vmatmul.mubr.bf16.gmra.mrb[0].mxu0 %v1383
    %v1430 = vpop.f32.mrb[0].mxu0
    %v1431 = vadd.f32 0.0, %v1430
    %v1432 = vpop.f32.mrb[0].mxu0
    %v1433 = vpop.f32.mrb[0].mxu0
    %v1434 = vadd.f32 0.0, %v1433
    %v1435 = vpop.f32.mrb[0].mxu0
    %1436 = vdwg.mxu0
    %v1437 = vadd.f32 %v1197, %v1423
    %v1438 = vadd.f32 %v1198, %v1426
    %v1439 = vadd.f32 %v1199, %v1431
    %v1440 = vadd.f32 %v1200, %v1434
    %v1441 = vadd.f32 %v317, %v1437
    %v1442 = vadd.f32 %v318, %v1438
    %v1443 = vadd.f32 %v319, %v1439
    %v1444 = vadd.f32 %v320, %v1440
    %v1445 = vld [vmem:[%s21] sm:$0x1]
    %v1447 = vlaneseq
    %v1448 = vshrl.u32 %v1447, 7
    %v1449 = vsub.s32 0, %v1448
    %v1450 = vrot.slane %v1445, %v1449
    %v1452 = vadd.f32 %v1441, %v1450
    %v1453 = vadd.f32 %v1442, %v1450
    %v1454 = vadd.f32 %v1443, %v1450
    %v1455 = vadd.f32 %v1444, %v1450
    %v1456 = vld [vmem:[%s23] sm:$0x1]
    %v1457 = vld [vmem:[%s25] sm:$0x1]
    %v1458 = vsel %vm247, %v1452, 0.0
    %1459 = vadd.xlane.f32.xlu0 %v1458
    %v1460 = vpop.xlane.xlu0 %1459
    %v1461 = vsel %vm247, %v1453, 0.0
    %1462 = vadd.xlane.f32.xlu0 %v1461
    %v1463 = vpop.xlane.xlu0 %1462
    %v1464 = vsel %vm247, %v1454, 0.0
    %1465 = vadd.xlane.f32.xlu0 %v1464
    %v1466 = vpop.xlane.xlu0 %1465
    %v1467 = vsel %vm247, %v1455, 0.0
    %1468 = vadd.xlane.f32.xlu0 %v1467
    %v1469 = vpop.xlane.xlu0 %1468
    %v1470 = vmul.f32 %v1460, %v260
    %v1471 = vmul.f32 %v1463, %v260
    %v1472 = vmul.f32 %v1466, %v260
    %v1473 = vmul.f32 %v1469, %v260
    %v1474 = vsub.f32 %v1452, %v1470
    %v1475 = vsub.f32 %v1453, %v1471
    %v1476 = vsub.f32 %v1454, %v1472
    %v1477 = vsub.f32 %v1455, %v1473
    %v1478 = vmul.f32 %v1474, %v1474
    %v1479 = vmul.f32 %v1475, %v1475
    %v1480 = vmul.f32 %v1476, %v1476
    %v1481 = vmul.f32 %v1477, %v1477
    %v1482 = vsel %vm247, %v1478, 0.0
    %1483 = vadd.xlane.f32.xlu0 %v1482
    %v1484 = vpop.xlane.xlu0 %1483
    %v1485 = vsel %vm247, %v1479, 0.0
    %1486 = vadd.xlane.f32.xlu0 %v1485
    %v1487 = vpop.xlane.xlu0 %1486
    %v1488 = vsel %vm247, %v1480, 0.0
    %1489 = vadd.xlane.f32.xlu0 %v1488
    %v1490 = vpop.xlane.xlu0 %1489
    %v1491 = vsel %vm247, %v1481, 0.0
    %1492 = vadd.xlane.f32.xlu0 %v1491
    %v1493 = vpop.xlane.xlu0 %1492
    %v1494 = vmul.f32 %v1484, %v260
    %v1495 = vmul.f32 %v1487, %v260
    %v1496 = vmul.f32 %v1490, %v260
    %v1497 = vmul.f32 %v1493, %v260
    %v1498 = vadd.f32 %v1494, 1e-05
    %v1499 = vadd.f32 %v1495, 1e-05
    %v1500 = vadd.f32 %v1496, 1e-05
    %v1501 = vadd.f32 %v1497, 1e-05
    %v1502 = vrsqrt.pop %v1498
    %v1503 = vrsqrt.pop %v1499
    %v1504 = vrsqrt.pop %v1500
    %v1505 = vrsqrt.pop %v1501
    %v1506 = vmul.f32 %v1474, %v1502
    %v1507 = vmul.f32 %v1475, %v1503
    %v1508 = vmul.f32 %v1476, %v1504
    %v1509 = vmul.f32 %v1477, %v1505
    %v1511 = vlaneseq
    %v1512 = vshrl.u32 %v1511, 7
    %v1513 = vsub.s32 0, %v1512
    %v1514 = vrot.slane %v1456, %v1513
    %v1516 = vmul.f32 %v1506, %v1514
    %v1517 = vmul.f32 %v1507, %v1514
    %v1518 = vmul.f32 %v1508, %v1514
    %v1519 = vmul.f32 %v1509, %v1514
    %v1521 = vlaneseq
    %v1522 = vshrl.u32 %v1521, 7
    %v1523 = vsub.s32 0, %v1522
    %v1524 = vrot.slane %v1457, %v1523
    %v1526 = vadd.f32 %v1516, %v1524
    %v1527 = vadd.f32 %v1517, %v1524
    %v1528 = vadd.f32 %v1518, %v1524
    %v1529 = vadd.f32 %v1519, %v1524
    %v1530 = vld [vmem:[%s27] sm:$0xf]
    %v1531 = vld [vmem:[%s27 + $0x4] sm:$0xf]
    %v1532 = vld [vmem:[%s27 + $0x8] sm:$0xf]
    %v1533 = vld [vmem:[%s27 + $0xc] sm:$0xf]
    %v1534 = vpack.c.bf16 %v1527, %v1526
    %v1535 = vpack.c.bf16 %v1529, %v1528
    %v1536 = vld [vmem:[%s29] sm:$0x1]
    %v1538 = vlaneseq
    %v1539 = vshrl.u32 %v1538, 7
    %v1540 = vsub.s32 0, %v1539
    %v1541 = vrot.slane %v1536, %v1540
    %v1547 = vunpack.c.l.b16 %v1530
    %v1548 = vunpack.c.l.b16 %v1531
    %v1549 = vunpack.c.l.b16 %v1532
    %v1550 = vunpack.c.l.b16 %v1533
    %v1551 = vpack.c.b16 %v1548, %v1547
    %v1552 = vpack.c.b16 %v1550, %v1549
    %v1556 = vsel %vm247, %v1534, 0
    %v1559 = vsel %vm247, %v1535, 0
    %1561 = vmatprep.subr.bf16.mxu0 0
    %1562 = vmatpush1.bf16.msra.mxu0 %v1551
    %1563 = vmatprep.subr.bf16.mxu0 0
    %1564 = vmatpush1.bf16.msra.mxu0 %v1552
    %1565 = vmatprep.subr.bf16.mxu0 0
    %1566 = vmatpush1.bf16.msra.mxu0 0
    %1567 = vmatprep.subr.bf16.mxu0 0
    %1568 = vmatpush1.bf16.msra.mxu0 0
    %1569 = vmatprep.subr.bf16.mxu0 0
    %1570 = vmatpush1.bf16.msra.mxu0 0
    %1571 = vmatprep.subr.bf16.mxu0 0
    %1572 = vmatpush1.bf16.msra.mxu0 0
    %1573 = vmatprep.subr.bf16.mxu0 0
    %1574 = vmatpush1.bf16.msra.mxu0 0
    %1575 = vmatprep.subr.bf16.mxu0 0
    %1576 = vmatpush1.bf16.msra.mxu0 0
    %1577 = vmatprep.subr.bf16.mxu0 0
    %1578 = vmatpush1.bf16.msra.mxu0 0
    %1579 = vmatprep.subr.bf16.mxu0 0
    %1580 = vmatpush1.bf16.msra.mxu0 0
    %1581 = vmatprep.subr.bf16.mxu0 0
    %1582 = vmatpush1.bf16.msra.mxu0 0
    %1583 = vmatprep.subr.bf16.mxu0 0
    %1584 = vmatpush1.bf16.msra.mxu0 0
    %1585 = vmatprep.subr.bf16.mxu0 0
    %1586 = vmatpush1.bf16.msra.mxu0 0
    %1587 = vmatprep.subr.bf16.mxu0 0
    %1588 = vmatpush1.bf16.msra.mxu0 0
    %1589 = vmatprep.subr.bf16.mxu0 0
    %1590 = vmatpush1.bf16.msra.mxu0 0
    %1591 = vmatprep.subr.bf16.mxu0 0
    %1592 = vmatpush1.bf16.msra.mxu0 0
    %1593 = vmatprep.mubr.bf16.mxu0 0
    %1594 = vmatmul.mubr.bf16.gmra.mrb[0].mxu0 %v1556
    %v1595 = vpop.f32.mrb[0].mxu0
    %v1596 = vadd.f32 %v1541, %v1595
    %v1597 = vpop.f32.mrb[0].mxu0
    %v1598 = vpop.f32.mrb[0].mxu0
    %v1599 = vadd.f32 %v1541, %v1598
    %v1600 = vpop.f32.mrb[0].mxu0
    %1601 = vmatprep.mubr.bf16.mxu0 0
    %1602 = vmatmul.mubr.bf16.gmra.mrb[0].mxu0 %v1559
    %v1603 = vpop.f32.mrb[0].mxu0
    %v1604 = vadd.f32 %v1541, %v1603
    %v1605 = vpop.f32.mrb[0].mxu0
    %v1606 = vpop.f32.mrb[0].mxu0
    %v1607 = vadd.f32 %v1541, %v1606
    %v1608 = vpop.f32.mrb[0].mxu0
    %1609 = vdwg.mxu0
    %v1610 = vmul.f32 %v1596, 0.5
    %v1611 = vmul.f32 %v1599, 0.5
    %v1612 = vmul.f32 %v1604, 0.5
    %v1613 = vmul.f32 %v1607, 0.5
    %v1614 = vmul.f32 %v1596, 0.70710677
    %v1615 = vmul.f32 %v1599, 0.70710677
    %v1616 = vmul.f32 %v1604, 0.70710677
    %v1617 = vmul.f32 %v1607, 0.70710677
    %vm1618 = vcmp.ge.f32.partialorder %v1614, 0.0
    %vm1619 = vcmp.ge.f32.partialorder %v1615, 0.0
    %vm1620 = vcmp.ge.f32.partialorder %v1616, 0.0
    %vm1621 = vcmp.ge.f32.partialorder %v1617, 0.0
    %v1622 = vsel %vm1618, 1.0, -1.0
    %v1623 = vsel %vm1619, 1.0, -1.0
    %v1624 = vsel %vm1620, 1.0, -1.0
    %v1625 = vsel %vm1621, 1.0, -1.0
    %v1626 = vand.u32 2147483647, %v1614
    %v1627 = vand.u32 2147483647, %v1615
    %v1628 = vand.u32 2147483647, %v1616
    %v1629 = vand.u32 2147483647, %v1617
    %v1630 = vmul.f32 %v1626, 0.3275911
    %v1631 = vmul.f32 %v1627, 0.3275911
    %v1632 = vmul.f32 %v1628, 0.3275911
    %v1633 = vmul.f32 %v1629, 0.3275911
    %v1634 = vadd.f32 %v1630, 1.0
    %v1635 = vadd.f32 %v1631, 1.0
    %v1636 = vadd.f32 %v1632, 1.0
    %v1637 = vadd.f32 %v1633, 1.0
    %v1638 = vrcp.pop %v1634
    %v1639 = vmul.f32 1.0, %v1638
    %v1640 = vrcp.pop %v1635
    %v1641 = vmul.f32 1.0, %v1640
    %v1642 = vrcp.pop %v1636
    %v1643 = vmul.f32 1.0, %v1642
    %v1644 = vrcp.pop %v1637
    %v1645 = vmul.f32 1.0, %v1644
    %v1646 = vmul.f32 %v1639, 1.0614054
    %v1647 = vmul.f32 %v1641, 1.0614054
    %v1648 = vmul.f32 %v1643, 1.0614054
    %v1649 = vmul.f32 %v1645, 1.0614054
    %v1650 = vadd.f32 %v1646, -1.4531521
    %v1651 = vadd.f32 %v1647, -1.4531521
    %v1652 = vadd.f32 %v1648, -1.4531521
    %v1653 = vadd.f32 %v1649, -1.4531521
    %v1654 = vmul.f32 %v1650, %v1639
    %v1655 = vmul.f32 %v1651, %v1641
    %v1656 = vmul.f32 %v1652, %v1643
    %v1657 = vmul.f32 %v1653, %v1645
    %v1658 = vadd.f32 %v1654, 1.4214138
    %v1659 = vadd.f32 %v1655, 1.4214138
    %v1660 = vadd.f32 %v1656, 1.4214138
    %v1661 = vadd.f32 %v1657, 1.4214138
    %v1662 = vmul.f32 %v1658, %v1639
    %v1663 = vmul.f32 %v1659, %v1641
    %v1664 = vmul.f32 %v1660, %v1643
    %v1665 = vmul.f32 %v1661, %v1645
    %v1666 = vadd.f32 %v1662, -0.28449672
    %v1667 = vadd.f32 %v1663, -0.28449672
    %v1668 = vadd.f32 %v1664, -0.28449672
    %v1669 = vadd.f32 %v1665, -0.28449672
    %v1670 = vmul.f32 %v1666, %v1639
    %v1671 = vmul.f32 %v1667, %v1641
    %v1672 = vmul.f32 %v1668, %v1643
    %v1673 = vmul.f32 %v1669, %v1645
    %v1674 = vadd.f32 %v1670, 0.2548296
    %v1675 = vadd.f32 %v1671, 0.2548296
    %v1676 = vadd.f32 %v1672, 0.2548296
    %v1677 = vadd.f32 %v1673, 0.2548296
    %v1678 = vmul.f32 %v1674, %v1639
    %v1679 = vmul.f32 %v1675, %v1641
    %v1680 = vmul.f32 %v1676, %v1643
    %v1681 = vmul.f32 %v1677, %v1645
    %v1682 = vsub.f32 0.0, %v1626
    %v1683 = vsub.f32 0.0, %v1627
    %v1684 = vsub.f32 0.0, %v1628
    %v1685 = vsub.f32 0.0, %v1629
    %v1686 = vmul.f32 %v1682, %v1626
    %v1687 = vmul.f32 %v1683, %v1627
    %v1688 = vmul.f32 %v1684, %v1628
    %v1689 = vmul.f32 %v1685, %v1629
    %v1690 = vmul.f32 %v1686, 1.442695
    %v1691 = vpow.pop %v1690
    %v1692 = vmul.f32 %v1687, 1.442695
    %v1693 = vpow.pop %v1692
    %v1694 = vmul.f32 %v1688, 1.442695
    %v1695 = vpow.pop %v1694
    %v1696 = vmul.f32 %v1689, 1.442695
    %v1697 = vpow.pop %v1696
    %v1698 = vmul.f32 %v1678, %v1691
    %v1699 = vmul.f32 %v1679, %v1693
    %v1700 = vmul.f32 %v1680, %v1695
    %v1701 = vmul.f32 %v1681, %v1697
    %v1702 = vsub.f32 1.0, %v1698
    %v1703 = vsub.f32 1.0, %v1699
    %v1704 = vsub.f32 1.0, %v1700
    %v1705 = vsub.f32 1.0, %v1701
    %v1706 = vmul.f32 %v1622, %v1702
    %v1707 = vmul.f32 %v1623, %v1703
    %v1708 = vmul.f32 %v1624, %v1704
    %v1709 = vmul.f32 %v1625, %v1705
    %v1710 = vadd.f32 %v1706, 1.0
    %v1711 = vadd.f32 %v1707, 1.0
    %v1712 = vadd.f32 %v1708, 1.0
    %v1713 = vadd.f32 %v1709, 1.0
    %v1714 = vmul.f32 %v1610, %v1710
    %v1715 = vmul.f32 %v1611, %v1711
    %v1716 = vmul.f32 %v1612, %v1712
    %v1717 = vmul.f32 %v1613, %v1713
    %v1718 = vld [vmem:[%s31] sm:$0xf]
    %v1719 = vld [vmem:[%s31 + $0x4] sm:$0xf]
    %v1720 = vld [vmem:[%s31 + $0x8] sm:$0xf]
    %v1721 = vld [vmem:[%s31 + $0xc] sm:$0xf]
    %v1722 = vld [vmem:[%s31 + $0x10] sm:$0xf]
    %v1723 = vld [vmem:[%s31 + $0x14] sm:$0xf]
    %v1724 = vld [vmem:[%s31 + $0x18] sm:$0xf]
    %v1725 = vld [vmem:[%s31 + $0x1c] sm:$0xf]
    %v1726 = vld [vmem:[%s31 + $0x20] sm:$0xf]
    %v1727 = vld [vmem:[%s31 + $0x24] sm:$0xf]
    %v1728 = vld [vmem:[%s31 + $0x28] sm:$0xf]
    %v1729 = vld [vmem:[%s31 + $0x2c] sm:$0xf]
    %v1730 = vld [vmem:[%s31 + $0x30] sm:$0xf]
    %v1731 = vld [vmem:[%s31 + $0x34] sm:$0xf]
    %v1732 = vld [vmem:[%s31 + $0x38] sm:$0xf]
    %v1733 = vld [vmem:[%s31 + $0x3c] sm:$0xf]
    %v1734 = vpack.c.bf16 %v1715, %v1714
    %v1735 = vpack.c.bf16 %v1717, %v1716
    %v1752 = vunpack.c.l.b16 %v1718
    %v1753 = vunpack.c.l.b16 %v1719
    %v1754 = vunpack.c.l.b16 %v1720
    %v1755 = vunpack.c.l.b16 %v1721
    %v1756 = vunpack.c.l.b16 %v1722
    %v1757 = vunpack.c.l.b16 %v1723
    %v1758 = vunpack.c.l.b16 %v1724
    %v1759 = vunpack.c.l.b16 %v1725
    %v1760 = vunpack.c.l.b16 %v1726
    %v1761 = vunpack.c.l.b16 %v1727
    %v1762 = vunpack.c.l.b16 %v1728
    %v1763 = vunpack.c.l.b16 %v1729
    %v1764 = vunpack.c.l.b16 %v1730
    %v1765 = vunpack.c.l.b16 %v1731
    %v1766 = vunpack.c.l.b16 %v1732
    %v1767 = vunpack.c.l.b16 %v1733
    %v1768 = vpack.c.b16 %v1753, %v1752
    %v1769 = vpack.c.b16 %v1755, %v1754
    %v1770 = vpack.c.b16 %v1757, %v1756
    %v1771 = vpack.c.b16 %v1759, %v1758
    %v1772 = vpack.c.b16 %v1761, %v1760
    %v1773 = vpack.c.b16 %v1763, %v1762
    %v1774 = vpack.c.b16 %v1765, %v1764
    %v1775 = vpack.c.b16 %v1767, %v1766
    %1784 = vmatprep.subr.bf16.mxu0 0
    %1785 = vmatpush1.bf16.msra.mxu0 %v1768
    %1786 = vmatprep.subr.bf16.mxu0 0
    %1787 = vmatpush1.bf16.msra.mxu0 %v1769
    %1788 = vmatprep.subr.bf16.mxu0 0
    %1789 = vmatpush1.bf16.msra.mxu0 %v1770
    %1790 = vmatprep.subr.bf16.mxu0 0
    %1791 = vmatpush1.bf16.msra.mxu0 %v1771
    %1792 = vmatprep.subr.bf16.mxu0 0
    %1793 = vmatpush1.bf16.msra.mxu0 %v1772
    %1794 = vmatprep.subr.bf16.mxu0 0
    %1795 = vmatpush1.bf16.msra.mxu0 %v1773
    %1796 = vmatprep.subr.bf16.mxu0 0
    %1797 = vmatpush1.bf16.msra.mxu0 %v1774
    %1798 = vmatprep.subr.bf16.mxu0 0
    %1799 = vmatpush1.bf16.msra.mxu0 %v1775
    %1800 = vmatprep.subr.bf16.mxu0 0
    %1801 = vmatpush1.bf16.msra.mxu0 0
    %1802 = vmatprep.subr.bf16.mxu0 0
    %1803 = vmatpush1.bf16.msra.mxu0 0
    %1804 = vmatprep.subr.bf16.mxu0 0
    %1805 = vmatpush1.bf16.msra.mxu0 0
    %1806 = vmatprep.subr.bf16.mxu0 0
    %1807 = vmatpush1.bf16.msra.mxu0 0
    %1808 = vmatprep.subr.bf16.mxu0 0
    %1809 = vmatpush1.bf16.msra.mxu0 0
    %1810 = vmatprep.subr.bf16.mxu0 0
    %1811 = vmatpush1.bf16.msra.mxu0 0
    %1812 = vmatprep.subr.bf16.mxu0 0
    %1813 = vmatpush1.bf16.msra.mxu0 0
    %1814 = vmatprep.subr.bf16.mxu0 0
    %1815 = vmatpush1.bf16.msra.mxu0 0
    %1816 = vmatprep.mubr.bf16.mxu0 0
    %1817 = vmatmul.mubr.bf16.gmra.mrb[0].mxu0 %v1734
    %v1818 = vpop.f32.mrb[0].mxu0
    %v1819 = vadd.f32 0.0, %v1818
    %v1820 = vpop.f32.mrb[0].mxu0
    %v1821 = vpop.f32.mrb[0].mxu0
    %v1822 = vadd.f32 0.0, %v1821
    %v1823 = vpop.f32.mrb[0].mxu0
    %1824 = vmatprep.mubr.bf16.mxu0 0
    %1825 = vmatmul.mubr.bf16.gmra.mrb[0].mxu0 %v1735
    %v1826 = vpop.f32.mrb[0].mxu0
    %v1827 = vadd.f32 0.0, %v1826
    %v1828 = vpop.f32.mrb[0].mxu0
    %v1829 = vpop.f32.mrb[0].mxu0
    %v1830 = vadd.f32 0.0, %v1829
    %v1831 = vpop.f32.mrb[0].mxu0
    %1832 = vdwg.mxu0
    %v1833 = vadd.f32 %v1452, %v1819
    %v1834 = vadd.f32 %v1453, %v1822
    %v1835 = vadd.f32 %v1454, %v1827
    %v1836 = vadd.f32 %v1455, %v1830
    %v1837 = vld [vmem:[%s33] sm:$0x1]
    %v1839 = vlaneseq
    %v1840 = vshrl.u32 %v1839, 7
    %v1841 = vsub.s32 0, %v1840
    %v1842 = vrot.slane %v1837, %v1841
    %v1844 = vadd.f32 %v1833, %v1842
    %v1845 = vadd.f32 %v1834, %v1842
    %v1846 = vadd.f32 %v1835, %v1842
    %v1847 = vadd.f32 %v1836, %v1842
    %v1848 = vld [vmem:[%s35] sm:$0x1]
    %v1849 = vld [vmem:[%s37] sm:$0x1]
    %v1850 = vsel %vm247, %v1844, 0.0
    %1851 = vadd.xlane.f32.xlu0 %v1850
    %v1852 = vpop.xlane.xlu0 %1851
    %v1853 = vsel %vm247, %v1845, 0.0
    %1854 = vadd.xlane.f32.xlu0 %v1853
    %v1855 = vpop.xlane.xlu0 %1854
    %v1856 = vsel %vm247, %v1846, 0.0
    %1857 = vadd.xlane.f32.xlu0 %v1856
    %v1858 = vpop.xlane.xlu0 %1857
    %v1859 = vsel %vm247, %v1847, 0.0
    %1860 = vadd.xlane.f32.xlu0 %v1859
    %v1861 = vpop.xlane.xlu0 %1860
    %v1862 = vmul.f32 %v1852, %v260
    %v1863 = vmul.f32 %v1855, %v260
    %v1864 = vmul.f32 %v1858, %v260
    %v1865 = vmul.f32 %v1861, %v260
    %v1866 = vsub.f32 %v1844, %v1862
    %v1867 = vsub.f32 %v1845, %v1863
    %v1868 = vsub.f32 %v1846, %v1864
    %v1869 = vsub.f32 %v1847, %v1865
    %v1870 = vmul.f32 %v1866, %v1866
    %v1871 = vmul.f32 %v1867, %v1867
    %v1872 = vmul.f32 %v1868, %v1868
    %v1873 = vmul.f32 %v1869, %v1869
    %v1874 = vsel %vm247, %v1870, 0.0
    %1875 = vadd.xlane.f32.xlu0 %v1874
    %v1876 = vpop.xlane.xlu0 %1875
    %v1877 = vsel %vm247, %v1871, 0.0
    %1878 = vadd.xlane.f32.xlu0 %v1877
    %v1879 = vpop.xlane.xlu0 %1878
    %v1880 = vsel %vm247, %v1872, 0.0
    %1881 = vadd.xlane.f32.xlu0 %v1880
    %v1882 = vpop.xlane.xlu0 %1881
    %v1883 = vsel %vm247, %v1873, 0.0
    %1884 = vadd.xlane.f32.xlu0 %v1883
    %v1885 = vpop.xlane.xlu0 %1884
    %v1886 = vmul.f32 %v1876, %v260
    %v1887 = vmul.f32 %v1879, %v260
    %v1888 = vmul.f32 %v1882, %v260
    %v1889 = vmul.f32 %v1885, %v260
    %v1890 = vadd.f32 %v1886, 1e-05
    %v1891 = vadd.f32 %v1887, 1e-05
    %v1892 = vadd.f32 %v1888, 1e-05
    %v1893 = vadd.f32 %v1889, 1e-05
    %v1894 = vrsqrt.pop %v1890
    %v1895 = vrsqrt.pop %v1891
    %v1896 = vrsqrt.pop %v1892
    %v1897 = vrsqrt.pop %v1893
    %v1898 = vmul.f32 %v1866, %v1894
    %v1899 = vmul.f32 %v1867, %v1895
    %v1900 = vmul.f32 %v1868, %v1896
    %v1901 = vmul.f32 %v1869, %v1897
    %v1903 = vlaneseq
    %v1904 = vshrl.u32 %v1903, 7
    %v1905 = vsub.s32 0, %v1904
    %v1906 = vrot.slane %v1848, %v1905
    %v1908 = vmul.f32 %v1898, %v1906
    %v1909 = vmul.f32 %v1899, %v1906
    %v1910 = vmul.f32 %v1900, %v1906
    %v1911 = vmul.f32 %v1901, %v1906
    %v1913 = vlaneseq
    %v1914 = vshrl.u32 %v1913, 7
    %v1915 = vsub.s32 0, %v1914
    %v1916 = vrot.slane %v1849, %v1915
    %v1918 = vadd.f32 %v1908, %v1916
    %v1919 = vadd.f32 %v1909, %v1916
    %v1920 = vadd.f32 %v1910, %v1916
    %v1921 = vadd.f32 %v1911, %v1916
    %v1922 = vld [vmem:[%s39] sm:$0xf]
    %v1923 = vld [vmem:[%s39 + $0x4] sm:$0xf]
    %v1924 = vld [vmem:[%s39 + $0x8] sm:$0xf]
    %v1925 = vld [vmem:[%s39 + $0xc] sm:$0xf]
    %v1926 = vpack.c.bf16 %v1919, %v1918
    %v1927 = vpack.c.bf16 %v1921, %v1920
    %v1928 = vld [vmem:[%s41] sm:$0x1]
    %v1930 = vlaneseq
    %v1931 = vshrl.u32 %v1930, 7
    %v1932 = vsub.s32 0, %v1931
    %v1933 = vrot.slane %v1928, %v1932
    %v1939 = vunpack.c.l.b16 %v1922
    %v1940 = vunpack.c.l.b16 %v1923
    %v1941 = vunpack.c.l.b16 %v1924
    %v1942 = vunpack.c.l.b16 %v1925
    %v1943 = vpack.c.b16 %v1940, %v1939
    %v1944 = vpack.c.b16 %v1942, %v1941
    %v1948 = vsel %vm247, %v1926, 0
    %v1951 = vsel %vm247, %v1927, 0
    %1953 = vmatprep.subr.bf16.mxu0 0
    %1954 = vmatpush1.bf16.msra.mxu0 %v1943
    %1955 = vmatprep.subr.bf16.mxu0 0
    %1956 = vmatpush1.bf16.msra.mxu0 %v1944
    %1957 = vmatprep.subr.bf16.mxu0 0
    %1958 = vmatpush1.bf16.msra.mxu0 0
    %1959 = vmatprep.subr.bf16.mxu0 0
    %1960 = vmatpush1.bf16.msra.mxu0 0
    %1961 = vmatprep.subr.bf16.mxu0 0
    %1962 = vmatpush1.bf16.msra.mxu0 0
    %1963 = vmatprep.subr.bf16.mxu0 0
    %1964 = vmatpush1.bf16.msra.mxu0 0
    %1965 = vmatprep.subr.bf16.mxu0 0
    %1966 = vmatpush1.bf16.msra.mxu0 0
    %1967 = vmatprep.subr.bf16.mxu0 0
    %1968 = vmatpush1.bf16.msra.mxu0 0
    %1969 = vmatprep.subr.bf16.mxu0 0
    %1970 = vmatpush1.bf16.msra.mxu0 0
    %1971 = vmatprep.subr.bf16.mxu0 0
    %1972 = vmatpush1.bf16.msra.mxu0 0
    %1973 = vmatprep.subr.bf16.mxu0 0
    %1974 = vmatpush1.bf16.msra.mxu0 0
    %1975 = vmatprep.subr.bf16.mxu0 0
    %1976 = vmatpush1.bf16.msra.mxu0 0
    %1977 = vmatprep.subr.bf16.mxu0 0
    %1978 = vmatpush1.bf16.msra.mxu0 0
    %1979 = vmatprep.subr.bf16.mxu0 0
    %1980 = vmatpush1.bf16.msra.mxu0 0
    %1981 = vmatprep.subr.bf16.mxu0 0
    %1982 = vmatpush1.bf16.msra.mxu0 0
    %1983 = vmatprep.subr.bf16.mxu0 0
    %1984 = vmatpush1.bf16.msra.mxu0 0
    %1985 = vmatprep.mubr.bf16.mxu0 0
    %1986 = vmatmul.mubr.bf16.gmra.mrb[0].mxu0 %v1948
    %v1987 = vpop.f32.mrb[0].mxu0
    %v1988 = vadd.f32 %v1933, %v1987
    %v1989 = vpop.f32.mrb[0].mxu0
    %v1990 = vpop.f32.mrb[0].mxu0
    %v1991 = vadd.f32 %v1933, %v1990
    %v1992 = vpop.f32.mrb[0].mxu0
    %1993 = vmatprep.mubr.bf16.mxu0 0
    %1994 = vmatmul.mubr.bf16.gmra.mrb[0].mxu0 %v1951
    %v1995 = vpop.f32.mrb[0].mxu0
    %v1996 = vadd.f32 %v1933, %v1995
    %v1997 = vpop.f32.mrb[0].mxu0
    %v1998 = vpop.f32.mrb[0].mxu0
    %v1999 = vadd.f32 %v1933, %v1998
    %v2000 = vpop.f32.mrb[0].mxu0
    %2001 = vdwg.mxu0
    %v2002 = vld [vmem:[%s43] sm:$0xf]
    %v2003 = vld [vmem:[%s43 + $0x4] sm:$0xf]
    %v2004 = vld [vmem:[%s43 + $0x8] sm:$0xf]
    %v2005 = vld [vmem:[%s43 + $0xc] sm:$0xf]
    %v2006 = vmul.f32 %v1988, 0.35355338
    %v2007 = vmul.f32 %v1991, 0.35355338
    %v2008 = vmul.f32 %v1996, 0.35355338
    %v2009 = vmul.f32 %v1999, 0.35355338
    %v2010 = vpack.c.bf16 %v2007, %v2006
    %v2011 = vpack.c.bf16 %v2009, %v2008
    %v2012 = vpack.c.bf16 %v1991, %v1988
    %v2013 = vpack.c.bf16 %v1999, %v1996
    %2016 = vrot.lane.b32.xlu0 %v2012, 96
    %v2017 = vpop.permute.xlu0 %2016
    %2018 = vrot.lane.b32.xlu0 %v2013, 96
    %v2019 = vpop.permute.xlu0 %2018
    %v2021 = vsel %vm493, %v2010, 0
    %v2024 = vsel %vm493, %v2011, 0
    %v2027 = vsel %vm493, %v2017, 0
    %v2030 = vsel %vm493, %v2019, 0
    %2032 = vmatprep.subr.bf16.mxu0 0
    %2033 = vmatpush1.bf16.xpose.msra.mxu0 %v2027
    %2034 = vmatprep.subr.bf16.mxu0 0
    %2035 = vmatpush1.bf16.xpose.msra.mxu0 %v2030
    %2036 = vmatprep.subr.bf16.mxu0 0
    %2037 = vmatpush1.bf16.xpose.msra.mxu0 0
    %2038 = vmatprep.subr.bf16.mxu0 0
    %2039 = vmatpush1.bf16.xpose.msra.mxu0 0
    %2040 = vmatprep.subr.bf16.mxu0 0
    %2041 = vmatpush1.bf16.xpose.msra.mxu0 0
    %2042 = vmatprep.subr.bf16.mxu0 0
    %2043 = vmatpush1.bf16.xpose.msra.mxu0 0
    %2044 = vmatprep.subr.bf16.mxu0 0
    %2045 = vmatpush1.bf16.xpose.msra.mxu0 0
    %2046 = vmatprep.subr.bf16.mxu0 0
    %2047 = vmatpush1.bf16.xpose.msra.mxu0 0
    %2048 = vmatprep.subr.bf16.mxu0 0
    %2049 = vmatpush1.bf16.xpose.msra.mxu0 0
    %2050 = vmatprep.subr.bf16.mxu0 0
    %2051 = vmatpush1.bf16.xpose.msra.mxu0 0
    %2052 = vmatprep.subr.bf16.mxu0 0
    %2053 = vmatpush1.bf16.xpose.msra.mxu0 0
    %2054 = vmatprep.subr.bf16.mxu0 0
    %2055 = vmatpush1.bf16.xpose.msra.mxu0 0
    %2056 = vmatprep.subr.bf16.mxu0 0
    %2057 = vmatpush1.bf16.xpose.msra.mxu0 0
    %2058 = vmatprep.subr.bf16.mxu0 0
    %2059 = vmatpush1.bf16.xpose.msra.mxu0 0
    %2060 = vmatprep.subr.bf16.mxu0 0
    %2061 = vmatpush1.bf16.xpose.msra.mxu0 0
    %2062 = vmatprep.subr.bf16.mxu0 0
    %2063 = vmatpush1.bf16.xpose.msra.mxu0 0
    %2064 = vmatprep.mubr.bf16.mxu0 0
    %2065 = vmatmul.mubr.bf16.gmra.mrb[0].mxu0 %v2021
    %v2066 = vpop.f32.mrb[0].mxu0
    %v2067 = vadd.f32 %v140, %v2066
    %v2068 = vpop.f32.mrb[0].mxu0
    %v2069 = vpop.f32.mrb[0].mxu0
    %v2070 = vadd.f32 %v141, %v2069
    %v2071 = vpop.f32.mrb[0].mxu0
    %2072 = vmatprep.mubr.bf16.mxu0 0
    %2073 = vmatmul.mubr.bf16.gmra.mrb[0].mxu0 %v2024
    %v2074 = vpop.f32.mrb[0].mxu0
    %v2075 = vadd.f32 %v142, %v2074
    %v2076 = vpop.f32.mrb[0].mxu0
    %v2077 = vpop.f32.mrb[0].mxu0
    %v2078 = vadd.f32 %v143, %v2077
    %v2079 = vpop.f32.mrb[0].mxu0
    %2080 = vdwg.mxu0
    %v2081 = vsel %vm247, %v2067, -inf
    %2082 = vmax.xlane.f32.xlu0 %v2081
    %v2083 = vpop.xlane.xlu0 %2082
    %v2084 = vsel %vm247, %v2070, -inf
    %2085 = vmax.xlane.f32.xlu0 %v2084
    %v2086 = vpop.xlane.xlu0 %2085
    %v2087 = vsel %vm247, %v2075, -inf
    %2088 = vmax.xlane.f32.xlu0 %v2087
    %v2089 = vpop.xlane.xlu0 %2088
    %v2090 = vsel %vm247, %v2078, -inf
    %2091 = vmax.xlane.f32.xlu0 %v2090
    %v2092 = vpop.xlane.xlu0 %2091
    %v2093 = vsub.f32 %v2067, %v2083
    %v2094 = vsub.f32 %v2070, %v2086
    %v2095 = vsub.f32 %v2075, %v2089
    %v2096 = vsub.f32 %v2078, %v2092
    %v2097 = vmul.f32 %v2093, 1.442695
    %v2098 = vpow.pop %v2097
    %v2099 = vmul.f32 %v2094, 1.442695
    %v2100 = vpow.pop %v2099
    %v2101 = vmul.f32 %v2095, 1.442695
    %v2102 = vpow.pop %v2101
    %v2103 = vmul.f32 %v2096, 1.442695
    %v2104 = vpow.pop %v2103
    %v2105 = vsel %vm247, %v2098, 0.0
    %2106 = vadd.xlane.f32.xlu0 %v2105
    %v2107 = vpop.xlane.xlu0 %2106
    %v2108 = vsel %vm247, %v2100, 0.0
    %2109 = vadd.xlane.f32.xlu0 %v2108
    %v2110 = vpop.xlane.xlu0 %2109
    %v2111 = vsel %vm247, %v2102, 0.0
    %2112 = vadd.xlane.f32.xlu0 %v2111
    %v2113 = vpop.xlane.xlu0 %2112
    %v2114 = vsel %vm247, %v2104, 0.0
    %2115 = vadd.xlane.f32.xlu0 %v2114
    %v2116 = vpop.xlane.xlu0 %2115
    %v2117 = vrcp.pop %v2107
    %v2118 = vrcp.pop %v2110
    %v2119 = vrcp.pop %v2113
    %v2120 = vrcp.pop %v2116
    %v2121 = vmul.f32 %v2098, %v2117
    %v2122 = vmul.f32 %v2100, %v2118
    %v2123 = vmul.f32 %v2102, %v2119
    %v2124 = vmul.f32 %v2104, %v2120
    %v2125 = vpack.c.bf16 %v2122, %v2121
    %v2126 = vpack.c.bf16 %v2124, %v2123
    %2127 = vrot.lane.b32.xlu0 %v2012, 64
    %v2128 = vpop.permute.xlu0 %2127
    %2129 = vrot.lane.b32.xlu0 %v2013, 64
    %v2130 = vpop.permute.xlu0 %2129
    %v2134 = vsel %vm247, %v2125, 0
    %v2137 = vsel %vm247, %v2126, 0
    %2139 = vmatprep.subr.bf16.mxu0 0
    %2140 = vmatpush1.bf16.msra.mxu0 %v2128
    %2141 = vmatprep.subr.bf16.mxu0 0
    %2142 = vmatpush1.bf16.msra.mxu0 %v2130
    %2143 = vmatprep.subr.bf16.mxu0 0
    %2144 = vmatpush1.bf16.msra.mxu0 0
    %2145 = vmatprep.subr.bf16.mxu0 0
    %2146 = vmatpush1.bf16.msra.mxu0 0
    %2147 = vmatprep.subr.bf16.mxu0 0
    %2148 = vmatpush1.bf16.msra.mxu0 0
    %2149 = vmatprep.subr.bf16.mxu0 0
    %2150 = vmatpush1.bf16.msra.mxu0 0
    %2151 = vmatprep.subr.bf16.mxu0 0
    %2152 = vmatpush1.bf16.msra.mxu0 0
    %2153 = vmatprep.subr.bf16.mxu0 0
    %2154 = vmatpush1.bf16.msra.mxu0 0
    %2155 = vmatprep.subr.bf16.mxu0 0
    %2156 = vmatpush1.bf16.msra.mxu0 0
    %2157 = vmatprep.subr.bf16.mxu0 0
    %2158 = vmatpush1.bf16.msra.mxu0 0
    %2159 = vmatprep.subr.bf16.mxu0 0
    %2160 = vmatpush1.bf16.msra.mxu0 0
    %2161 = vmatprep.subr.bf16.mxu0 0
    %2162 = vmatpush1.bf16.msra.mxu0 0
    %2163 = vmatprep.subr.bf16.mxu0 0
    %2164 = vmatpush1.bf16.msra.mxu0 0
    %2165 = vmatprep.subr.bf16.mxu0 0
    %2166 = vmatpush1.bf16.msra.mxu0 0
    %2167 = vmatprep.subr.bf16.mxu0 0
    %2168 = vmatpush1.bf16.msra.mxu0 0
    %2169 = vmatprep.subr.bf16.mxu0 0
    %2170 = vmatpush1.bf16.msra.mxu0 0
    %2171 = vmatprep.mubr.bf16.mxu0 0
    %2172 = vmatmul.mubr.bf16.gmra.mrb[0].mxu0 %v2134
    %v2173 = vpop.f32.mrb[0].mxu0
    %v2174 = vadd.f32 0.0, %v2173
    %v2175 = vpop.f32.mrb[0].mxu0
    %v2176 = vpop.f32.mrb[0].mxu0
    %v2177 = vadd.f32 0.0, %v2176
    %v2178 = vpop.f32.mrb[0].mxu0
    %2179 = vmatprep.mubr.bf16.mxu0 0
    %2180 = vmatmul.mubr.bf16.gmra.mrb[0].mxu0 %v2137
    %v2181 = vpop.f32.mrb[0].mxu0
    %v2182 = vadd.f32 0.0, %v2181
    %v2183 = vpop.f32.mrb[0].mxu0
    %v2184 = vpop.f32.mrb[0].mxu0
    %v2185 = vadd.f32 0.0, %v2184
    %v2186 = vpop.f32.mrb[0].mxu0
    %2187 = vdwg.mxu0
    %v2188 = vpack.c.bf16 %v2177, %v2174
    %v2189 = vpack.c.bf16 %v2185, %v2182
    %2192 = vrot.lane.b32.xlu0 %v2010, 120
    %v2193 = vpop.permute.xlu0 %2192
    %2194 = vrot.lane.b32.xlu0 %v2011, 120
    %v2195 = vpop.permute.xlu0 %2194
    %2196 = vrot.lane.b32.xlu0 %v2012, 88
    %v2197 = vpop.permute.xlu0 %2196
    %2198 = vrot.lane.b32.xlu0 %v2013, 88
    %v2199 = vpop.permute.xlu0 %2198
    %v2201 = vsel %vm493, %v2193, 0
    %v2204 = vsel %vm493, %v2195, 0
    %v2207 = vsel %vm493, %v2197, 0
    %v2210 = vsel %vm493, %v2199, 0
    %2212 = vmatprep.subr.bf16.mxu0 0
    %2213 = vmatpush1.bf16.xpose.msra.mxu0 %v2207
    %2214 = vmatprep.subr.bf16.mxu0 0
    %2215 = vmatpush1.bf16.xpose.msra.mxu0 %v2210
    %2216 = vmatprep.subr.bf16.mxu0 0
    %2217 = vmatpush1.bf16.xpose.msra.mxu0 0
    %2218 = vmatprep.subr.bf16.mxu0 0
    %2219 = vmatpush1.bf16.xpose.msra.mxu0 0
    %2220 = vmatprep.subr.bf16.mxu0 0
    %2221 = vmatpush1.bf16.xpose.msra.mxu0 0
    %2222 = vmatprep.subr.bf16.mxu0 0
    %2223 = vmatpush1.bf16.xpose.msra.mxu0 0
    %2224 = vmatprep.subr.bf16.mxu0 0
    %2225 = vmatpush1.bf16.xpose.msra.mxu0 0
    %2226 = vmatprep.subr.bf16.mxu0 0
    %2227 = vmatpush1.bf16.xpose.msra.mxu0 0
    %2228 = vmatprep.subr.bf16.mxu0 0
    %2229 = vmatpush1.bf16.xpose.msra.mxu0 0
    %2230 = vmatprep.subr.bf16.mxu0 0
    %2231 = vmatpush1.bf16.xpose.msra.mxu0 0
    %2232 = vmatprep.subr.bf16.mxu0 0
    %2233 = vmatpush1.bf16.xpose.msra.mxu0 0
    %2234 = vmatprep.subr.bf16.mxu0 0
    %2235 = vmatpush1.bf16.xpose.msra.mxu0 0
    %2236 = vmatprep.subr.bf16.mxu0 0
    %2237 = vmatpush1.bf16.xpose.msra.mxu0 0
    %2238 = vmatprep.subr.bf16.mxu0 0
    %2239 = vmatpush1.bf16.xpose.msra.mxu0 0
    %2240 = vmatprep.subr.bf16.mxu0 0
    %2241 = vmatpush1.bf16.xpose.msra.mxu0 0
    %2242 = vmatprep.subr.bf16.mxu0 0
    %2243 = vmatpush1.bf16.xpose.msra.mxu0 0
    %2244 = vmatprep.mubr.bf16.mxu0 0
    %2245 = vmatmul.mubr.bf16.gmra.mrb[0].mxu0 %v2201
    %v2246 = vpop.f32.mrb[0].mxu0
    %v2247 = vadd.f32 %v140, %v2246
    %v2248 = vpop.f32.mrb[0].mxu0
    %v2249 = vpop.f32.mrb[0].mxu0
    %v2250 = vadd.f32 %v141, %v2249
    %v2251 = vpop.f32.mrb[0].mxu0
    %2252 = vmatprep.mubr.bf16.mxu0 0
    %2253 = vmatmul.mubr.bf16.gmra.mrb[0].mxu0 %v2204
    %v2254 = vpop.f32.mrb[0].mxu0
    %v2255 = vadd.f32 %v142, %v2254
    %v2256 = vpop.f32.mrb[0].mxu0
    %v2257 = vpop.f32.mrb[0].mxu0
    %v2258 = vadd.f32 %v143, %v2257
    %v2259 = vpop.f32.mrb[0].mxu0
    %2260 = vdwg.mxu0
    %v2261 = vsel %vm247, %v2247, -inf
    %2262 = vmax.xlane.f32.xlu0 %v2261
    %v2263 = vpop.xlane.xlu0 %2262
    %v2264 = vsel %vm247, %v2250, -inf
    %2265 = vmax.xlane.f32.xlu0 %v2264
    %v2266 = vpop.xlane.xlu0 %2265
    %v2267 = vsel %vm247, %v2255, -inf
    %2268 = vmax.xlane.f32.xlu0 %v2267
    %v2269 = vpop.xlane.xlu0 %2268
    %v2270 = vsel %vm247, %v2258, -inf
    %2271 = vmax.xlane.f32.xlu0 %v2270
    %v2272 = vpop.xlane.xlu0 %2271
    %v2273 = vsub.f32 %v2247, %v2263
    %v2274 = vsub.f32 %v2250, %v2266
    %v2275 = vsub.f32 %v2255, %v2269
    %v2276 = vsub.f32 %v2258, %v2272
    %v2277 = vmul.f32 %v2273, 1.442695
    %v2278 = vpow.pop %v2277
    %v2279 = vmul.f32 %v2274, 1.442695
    %v2280 = vpow.pop %v2279
    %v2281 = vmul.f32 %v2275, 1.442695
    %v2282 = vpow.pop %v2281
    %v2283 = vmul.f32 %v2276, 1.442695
    %v2284 = vpow.pop %v2283
    %v2285 = vsel %vm247, %v2278, 0.0
    %2286 = vadd.xlane.f32.xlu0 %v2285
    %v2287 = vpop.xlane.xlu0 %2286
    %v2288 = vsel %vm247, %v2280, 0.0
    %2289 = vadd.xlane.f32.xlu0 %v2288
    %v2290 = vpop.xlane.xlu0 %2289
    %v2291 = vsel %vm247, %v2282, 0.0
    %2292 = vadd.xlane.f32.xlu0 %v2291
    %v2293 = vpop.xlane.xlu0 %2292
    %v2294 = vsel %vm247, %v2284, 0.0
    %2295 = vadd.xlane.f32.xlu0 %v2294
    %v2296 = vpop.xlane.xlu0 %2295
    %v2297 = vrcp.pop %v2287
    %v2298 = vrcp.pop %v2290
    %v2299 = vrcp.pop %v2293
    %v2300 = vrcp.pop %v2296
    %v2301 = vmul.f32 %v2278, %v2297
    %v2302 = vmul.f32 %v2280, %v2298
    %v2303 = vmul.f32 %v2282, %v2299
    %v2304 = vmul.f32 %v2284, %v2300
    %v2305 = vpack.c.bf16 %v2302, %v2301
    %v2306 = vpack.c.bf16 %v2304, %v2303
    %2307 = vrot.lane.b32.xlu0 %v2012, 56
    %v2308 = vpop.permute.xlu0 %2307
    %2309 = vrot.lane.b32.xlu0 %v2013, 56
    %v2310 = vpop.permute.xlu0 %2309
    %v2314 = vsel %vm247, %v2305, 0
    %v2317 = vsel %vm247, %v2306, 0
    %2319 = vmatprep.subr.bf16.mxu0 0
    %2320 = vmatpush1.bf16.msra.mxu0 %v2308
    %2321 = vmatprep.subr.bf16.mxu0 0
    %2322 = vmatpush1.bf16.msra.mxu0 %v2310
    %2323 = vmatprep.subr.bf16.mxu0 0
    %2324 = vmatpush1.bf16.msra.mxu0 0
    %2325 = vmatprep.subr.bf16.mxu0 0
    %2326 = vmatpush1.bf16.msra.mxu0 0
    %2327 = vmatprep.subr.bf16.mxu0 0
    %2328 = vmatpush1.bf16.msra.mxu0 0
    %2329 = vmatprep.subr.bf16.mxu0 0
    %2330 = vmatpush1.bf16.msra.mxu0 0
    %2331 = vmatprep.subr.bf16.mxu0 0
    %2332 = vmatpush1.bf16.msra.mxu0 0
    %2333 = vmatprep.subr.bf16.mxu0 0
    %2334 = vmatpush1.bf16.msra.mxu0 0
    %2335 = vmatprep.subr.bf16.mxu0 0
    %2336 = vmatpush1.bf16.msra.mxu0 0
    %2337 = vmatprep.subr.bf16.mxu0 0
    %2338 = vmatpush1.bf16.msra.mxu0 0
    %2339 = vmatprep.subr.bf16.mxu0 0
    %2340 = vmatpush1.bf16.msra.mxu0 0
    %2341 = vmatprep.subr.bf16.mxu0 0
    %2342 = vmatpush1.bf16.msra.mxu0 0
    %2343 = vmatprep.subr.bf16.mxu0 0
    %2344 = vmatpush1.bf16.msra.mxu0 0
    %2345 = vmatprep.subr.bf16.mxu0 0
    %2346 = vmatpush1.bf16.msra.mxu0 0
    %2347 = vmatprep.subr.bf16.mxu0 0
    %2348 = vmatpush1.bf16.msra.mxu0 0
    %2349 = vmatprep.subr.bf16.mxu0 0
    %2350 = vmatpush1.bf16.msra.mxu0 0
    %2351 = vmatprep.mubr.bf16.mxu0 0
    %2352 = vmatmul.mubr.bf16.gmra.mrb[0].mxu0 %v2314
    %v2353 = vpop.f32.mrb[0].mxu0
    %v2354 = vadd.f32 0.0, %v2353
    %v2355 = vpop.f32.mrb[0].mxu0
    %v2356 = vpop.f32.mrb[0].mxu0
    %v2357 = vadd.f32 0.0, %v2356
    %v2358 = vpop.f32.mrb[0].mxu0
    %2359 = vmatprep.mubr.bf16.mxu0 0
    %2360 = vmatmul.mubr.bf16.gmra.mrb[0].mxu0 %v2317
    %v2361 = vpop.f32.mrb[0].mxu0
    %v2362 = vadd.f32 0.0, %v2361
    %v2363 = vpop.f32.mrb[0].mxu0
    %v2364 = vpop.f32.mrb[0].mxu0
    %v2365 = vadd.f32 0.0, %v2364
    %v2366 = vpop.f32.mrb[0].mxu0
    %2367 = vdwg.mxu0
    %v2368 = vpack.c.bf16 %v2357, %v2354
    %v2369 = vpack.c.bf16 %v2365, %v2362
    %v2371 = vsel %vm493, %v2368, 0
    %v2374 = vsel %vm493, %v2369, 0
    %v2377 = vsel %vm850, %v2003, 0
    %2379 = vmatprep.subr.bf16.mxu0 0
    %2380 = vmatpush1.bf16.msra.mxu0 %v2377
    %2381 = vmatprep.subr.bf16.mxu0 0
    %2382 = vmatpush1.bf16.msra.mxu0 0
    %2383 = vmatprep.subr.bf16.mxu0 0
    %2384 = vmatpush1.bf16.msra.mxu0 0
    %2385 = vmatprep.subr.bf16.mxu0 0
    %2386 = vmatpush1.bf16.msra.mxu0 0
    %2387 = vmatprep.subr.bf16.mxu0 0
    %2388 = vmatpush1.bf16.msra.mxu0 0
    %2389 = vmatprep.subr.bf16.mxu0 0
    %2390 = vmatpush1.bf16.msra.mxu0 0
    %2391 = vmatprep.subr.bf16.mxu0 0
    %2392 = vmatpush1.bf16.msra.mxu0 0
    %2393 = vmatprep.subr.bf16.mxu0 0
    %2394 = vmatpush1.bf16.msra.mxu0 0
    %2395 = vmatprep.subr.bf16.mxu0 0
    %2396 = vmatpush1.bf16.msra.mxu0 0
    %2397 = vmatprep.subr.bf16.mxu0 0
    %2398 = vmatpush1.bf16.msra.mxu0 0
    %2399 = vmatprep.subr.bf16.mxu0 0
    %2400 = vmatpush1.bf16.msra.mxu0 0
    %2401 = vmatprep.subr.bf16.mxu0 0
    %2402 = vmatpush1.bf16.msra.mxu0 0
    %2403 = vmatprep.subr.bf16.mxu0 0
    %2404 = vmatpush1.bf16.msra.mxu0 0
    %2405 = vmatprep.subr.bf16.mxu0 0
    %2406 = vmatpush1.bf16.msra.mxu0 0
    %2407 = vmatprep.subr.bf16.mxu0 0
    %2408 = vmatpush1.bf16.msra.mxu0 0
    %2409 = vmatprep.subr.bf16.mxu0 0
    %2410 = vmatpush1.bf16.msra.mxu0 0
    %2411 = vmatprep.mubr.bf16.mxu0 0
    %2412 = vmatmul.mubr.bf16.gmra.mrb[0].mxu0 %v2371
    %v2413 = vpop.f32.mrb[0].mxu0
    %v2414 = vadd.f32 0.0, %v2413
    %v2415 = vpop.f32.mrb[0].mxu0
    %v2416 = vpop.f32.mrb[0].mxu0
    %v2417 = vadd.f32 0.0, %v2416
    %v2418 = vpop.f32.mrb[0].mxu0
    %2419 = vmatprep.mubr.bf16.mxu0 0
    %2420 = vmatmul.mubr.bf16.gmra.mrb[0].mxu0 %v2374
    %v2421 = vpop.f32.mrb[0].mxu0
    %v2422 = vadd.f32 0.0, %v2421
    %v2423 = vpop.f32.mrb[0].mxu0
    %v2424 = vpop.f32.mrb[0].mxu0
    %v2425 = vadd.f32 0.0, %v2424
    %v2426 = vpop.f32.mrb[0].mxu0
    %2427 = vdwg.mxu0
    %v2429 = vsel %vm493, %v2188, 0
    %v2432 = vsel %vm493, %v2189, 0
    %v2435 = vsel %vm850, %v2002, 0
    %2437 = vmatprep.subr.bf16.mxu0 0
    %2438 = vmatpush1.bf16.msra.mxu0 %v2435
    %2439 = vmatprep.subr.bf16.mxu0 0
    %2440 = vmatpush1.bf16.msra.mxu0 0
    %2441 = vmatprep.subr.bf16.mxu0 0
    %2442 = vmatpush1.bf16.msra.mxu0 0
    %2443 = vmatprep.subr.bf16.mxu0 0
    %2444 = vmatpush1.bf16.msra.mxu0 0
    %2445 = vmatprep.subr.bf16.mxu0 0
    %2446 = vmatpush1.bf16.msra.mxu0 0
    %2447 = vmatprep.subr.bf16.mxu0 0
    %2448 = vmatpush1.bf16.msra.mxu0 0
    %2449 = vmatprep.subr.bf16.mxu0 0
    %2450 = vmatpush1.bf16.msra.mxu0 0
    %2451 = vmatprep.subr.bf16.mxu0 0
    %2452 = vmatpush1.bf16.msra.mxu0 0
    %2453 = vmatprep.subr.bf16.mxu0 0
    %2454 = vmatpush1.bf16.msra.mxu0 0
    %2455 = vmatprep.subr.bf16.mxu0 0
    %2456 = vmatpush1.bf16.msra.mxu0 0
    %2457 = vmatprep.subr.bf16.mxu0 0
    %2458 = vmatpush1.bf16.msra.mxu0 0
    %2459 = vmatprep.subr.bf16.mxu0 0
    %2460 = vmatpush1.bf16.msra.mxu0 0
    %2461 = vmatprep.subr.bf16.mxu0 0
    %2462 = vmatpush1.bf16.msra.mxu0 0
    %2463 = vmatprep.subr.bf16.mxu0 0
    %2464 = vmatpush1.bf16.msra.mxu0 0
    %2465 = vmatprep.subr.bf16.mxu0 0
    %2466 = vmatpush1.bf16.msra.mxu0 0
    %2467 = vmatprep.subr.bf16.mxu0 0
    %2468 = vmatpush1.bf16.msra.mxu0 0
    %2469 = vmatprep.mubr.bf16.mxu0 0
    %2470 = vmatmul.mubr.bf16.gmra.mrb[0].mxu0 %v2429
    %v2471 = vpop.f32.mrb[0].mxu0
    %v2472 = vadd.f32 %v2414, %v2471
    %v2473 = vpop.f32.mrb[0].mxu0
    %v2474 = vpop.f32.mrb[0].mxu0
    %v2475 = vadd.f32 %v2417, %v2474
    %v2476 = vpop.f32.mrb[0].mxu0
    %2477 = vmatprep.mubr.bf16.mxu0 0
    %2478 = vmatmul.mubr.bf16.gmra.mrb[0].mxu0 %v2432
    %v2479 = vpop.f32.mrb[0].mxu0
    %v2480 = vadd.f32 %v2422, %v2479
    %v2481 = vpop.f32.mrb[0].mxu0
    %v2482 = vpop.f32.mrb[0].mxu0
    %v2483 = vadd.f32 %v2425, %v2482
    %v2484 = vpop.f32.mrb[0].mxu0
    %2485 = vdwg.mxu0
    %2486 = vrot.lane.b32.xlu0 %v2010, 112
    %v2487 = vpop.permute.xlu0 %2486
    %2488 = vrot.lane.b32.xlu0 %v2011, 112
    %v2489 = vpop.permute.xlu0 %2488
    %2490 = vrot.lane.b32.xlu0 %v2012, 80
    %v2491 = vpop.permute.xlu0 %2490
    %2492 = vrot.lane.b32.xlu0 %v2013, 80
    %v2493 = vpop.permute.xlu0 %2492
    %v2495 = vsel %vm493, %v2487, 0
    %v2498 = vsel %vm493, %v2489, 0
    %v2501 = vsel %vm493, %v2491, 0
    %v2504 = vsel %vm493, %v2493, 0
    %2506 = vmatprep.subr.bf16.mxu0 0
    %2507 = vmatpush1.bf16.xpose.msra.mxu0 %v2501
    %2508 = vmatprep.subr.bf16.mxu0 0
    %2509 = vmatpush1.bf16.xpose.msra.mxu0 %v2504
    %2510 = vmatprep.subr.bf16.mxu0 0
    %2511 = vmatpush1.bf16.xpose.msra.mxu0 0
    %2512 = vmatprep.subr.bf16.mxu0 0
    %2513 = vmatpush1.bf16.xpose.msra.mxu0 0
    %2514 = vmatprep.subr.bf16.mxu0 0
    %2515 = vmatpush1.bf16.xpose.msra.mxu0 0
    %2516 = vmatprep.subr.bf16.mxu0 0
    %2517 = vmatpush1.bf16.xpose.msra.mxu0 0
    %2518 = vmatprep.subr.bf16.mxu0 0
    %2519 = vmatpush1.bf16.xpose.msra.mxu0 0
    %2520 = vmatprep.subr.bf16.mxu0 0
    %2521 = vmatpush1.bf16.xpose.msra.mxu0 0
    %2522 = vmatprep.subr.bf16.mxu0 0
    %2523 = vmatpush1.bf16.xpose.msra.mxu0 0
    %2524 = vmatprep.subr.bf16.mxu0 0
    %2525 = vmatpush1.bf16.xpose.msra.mxu0 0
    %2526 = vmatprep.subr.bf16.mxu0 0
    %2527 = vmatpush1.bf16.xpose.msra.mxu0 0
    %2528 = vmatprep.subr.bf16.mxu0 0
    %2529 = vmatpush1.bf16.xpose.msra.mxu0 0
    %2530 = vmatprep.subr.bf16.mxu0 0
    %2531 = vmatpush1.bf16.xpose.msra.mxu0 0
    %2532 = vmatprep.subr.bf16.mxu0 0
    %2533 = vmatpush1.bf16.xpose.msra.mxu0 0
    %2534 = vmatprep.subr.bf16.mxu0 0
    %2535 = vmatpush1.bf16.xpose.msra.mxu0 0
    %2536 = vmatprep.subr.bf16.mxu0 0
    %2537 = vmatpush1.bf16.xpose.msra.mxu0 0
    %2538 = vmatprep.mubr.bf16.mxu0 0
    %2539 = vmatmul.mubr.bf16.gmra.mrb[0].mxu0 %v2495
    %v2540 = vpop.f32.mrb[0].mxu0
    %v2541 = vadd.f32 %v140, %v2540
    %v2542 = vpop.f32.mrb[0].mxu0
    %v2543 = vpop.f32.mrb[0].mxu0
    %v2544 = vadd.f32 %v141, %v2543
    %v2545 = vpop.f32.mrb[0].mxu0
    %2546 = vmatprep.mubr.bf16.mxu0 0
    %2547 = vmatmul.mubr.bf16.gmra.mrb[0].mxu0 %v2498
    %v2548 = vpop.f32.mrb[0].mxu0
    %v2549 = vadd.f32 %v142, %v2548
    %v2550 = vpop.f32.mrb[0].mxu0
    %v2551 = vpop.f32.mrb[0].mxu0
    %v2552 = vadd.f32 %v143, %v2551
    %v2553 = vpop.f32.mrb[0].mxu0
    %2554 = vdwg.mxu0
    %v2555 = vsel %vm247, %v2541, -inf
    %2556 = vmax.xlane.f32.xlu0 %v2555
    %v2557 = vpop.xlane.xlu0 %2556
    %v2558 = vsel %vm247, %v2544, -inf
    %2559 = vmax.xlane.f32.xlu0 %v2558
    %v2560 = vpop.xlane.xlu0 %2559
    %v2561 = vsel %vm247, %v2549, -inf
    %2562 = vmax.xlane.f32.xlu0 %v2561
    %v2563 = vpop.xlane.xlu0 %2562
    %v2564 = vsel %vm247, %v2552, -inf
    %2565 = vmax.xlane.f32.xlu0 %v2564
    %v2566 = vpop.xlane.xlu0 %2565
    %v2567 = vsub.f32 %v2541, %v2557
    %v2568 = vsub.f32 %v2544, %v2560
    %v2569 = vsub.f32 %v2549, %v2563
    %v2570 = vsub.f32 %v2552, %v2566
    %v2571 = vmul.f32 %v2567, 1.442695
    %v2572 = vpow.pop %v2571
    %v2573 = vmul.f32 %v2568, 1.442695
    %v2574 = vpow.pop %v2573
    %v2575 = vmul.f32 %v2569, 1.442695
    %v2576 = vpow.pop %v2575
    %v2577 = vmul.f32 %v2570, 1.442695
    %v2578 = vpow.pop %v2577
    %v2579 = vsel %vm247, %v2572, 0.0
    %2580 = vadd.xlane.f32.xlu0 %v2579
    %v2581 = vpop.xlane.xlu0 %2580
    %v2582 = vsel %vm247, %v2574, 0.0
    %2583 = vadd.xlane.f32.xlu0 %v2582
    %v2584 = vpop.xlane.xlu0 %2583
    %v2585 = vsel %vm247, %v2576, 0.0
    %2586 = vadd.xlane.f32.xlu0 %v2585
    %v2587 = vpop.xlane.xlu0 %2586
    %v2588 = vsel %vm247, %v2578, 0.0
    %2589 = vadd.xlane.f32.xlu0 %v2588
    %v2590 = vpop.xlane.xlu0 %2589
    %v2591 = vrcp.pop %v2581
    %v2592 = vrcp.pop %v2584
    %v2593 = vrcp.pop %v2587
    %v2594 = vrcp.pop %v2590
    %v2595 = vmul.f32 %v2572, %v2591
    %v2596 = vmul.f32 %v2574, %v2592
    %v2597 = vmul.f32 %v2576, %v2593
    %v2598 = vmul.f32 %v2578, %v2594
    %v2599 = vpack.c.bf16 %v2596, %v2595
    %v2600 = vpack.c.bf16 %v2598, %v2597
    %2601 = vrot.lane.b32.xlu0 %v2012, 48
    %v2602 = vpop.permute.xlu0 %2601
    %2603 = vrot.lane.b32.xlu0 %v2013, 48
    %v2604 = vpop.permute.xlu0 %2603
    %v2608 = vsel %vm247, %v2599, 0
    %v2611 = vsel %vm247, %v2600, 0
    %2613 = vmatprep.subr.bf16.mxu0 0
    %2614 = vmatpush1.bf16.msra.mxu0 %v2602
    %2615 = vmatprep.subr.bf16.mxu0 0
    %2616 = vmatpush1.bf16.msra.mxu0 %v2604
    %2617 = vmatprep.subr.bf16.mxu0 0
    %2618 = vmatpush1.bf16.msra.mxu0 0
    %2619 = vmatprep.subr.bf16.mxu0 0
    %2620 = vmatpush1.bf16.msra.mxu0 0
    %2621 = vmatprep.subr.bf16.mxu0 0
    %2622 = vmatpush1.bf16.msra.mxu0 0
    %2623 = vmatprep.subr.bf16.mxu0 0
    %2624 = vmatpush1.bf16.msra.mxu0 0
    %2625 = vmatprep.subr.bf16.mxu0 0
    %2626 = vmatpush1.bf16.msra.mxu0 0
    %2627 = vmatprep.subr.bf16.mxu0 0
    %2628 = vmatpush1.bf16.msra.mxu0 0
    %2629 = vmatprep.subr.bf16.mxu0 0
    %2630 = vmatpush1.bf16.msra.mxu0 0
    %2631 = vmatprep.subr.bf16.mxu0 0
    %2632 = vmatpush1.bf16.msra.mxu0 0
    %2633 = vmatprep.subr.bf16.mxu0 0
    %2634 = vmatpush1.bf16.msra.mxu0 0
    %2635 = vmatprep.subr.bf16.mxu0 0
    %2636 = vmatpush1.bf16.msra.mxu0 0
    %2637 = vmatprep.subr.bf16.mxu0 0
    %2638 = vmatpush1.bf16.msra.mxu0 0
    %2639 = vmatprep.subr.bf16.mxu0 0
    %2640 = vmatpush1.bf16.msra.mxu0 0
    %2641 = vmatprep.subr.bf16.mxu0 0
    %2642 = vmatpush1.bf16.msra.mxu0 0
    %2643 = vmatprep.subr.bf16.mxu0 0
    %2644 = vmatpush1.bf16.msra.mxu0 0
    %2645 = vmatprep.mubr.bf16.mxu0 0
    %2646 = vmatmul.mubr.bf16.gmra.mrb[0].mxu0 %v2608
    %v2647 = vpop.f32.mrb[0].mxu0
    %v2648 = vadd.f32 0.0, %v2647
    %v2649 = vpop.f32.mrb[0].mxu0
    %v2650 = vpop.f32.mrb[0].mxu0
    %v2651 = vadd.f32 0.0, %v2650
    %v2652 = vpop.f32.mrb[0].mxu0
    %2653 = vmatprep.mubr.bf16.mxu0 0
    %2654 = vmatmul.mubr.bf16.gmra.mrb[0].mxu0 %v2611
    %v2655 = vpop.f32.mrb[0].mxu0
    %v2656 = vadd.f32 0.0, %v2655
    %v2657 = vpop.f32.mrb[0].mxu0
    %v2658 = vpop.f32.mrb[0].mxu0
    %v2659 = vadd.f32 0.0, %v2658
    %v2660 = vpop.f32.mrb[0].mxu0
    %2661 = vdwg.mxu0
    %v2662 = vpack.c.bf16 %v2651, %v2648
    %v2663 = vpack.c.bf16 %v2659, %v2656
    %v2665 = vsel %vm493, %v2662, 0
    %v2668 = vsel %vm493, %v2663, 0
    %v2671 = vsel %vm850, %v2004, 0
    %2673 = vmatprep.subr.bf16.mxu0 0
    %2674 = vmatpush1.bf16.msra.mxu0 %v2671
    %2675 = vmatprep.subr.bf16.mxu0 0
    %2676 = vmatpush1.bf16.msra.mxu0 0
    %2677 = vmatprep.subr.bf16.mxu0 0
    %2678 = vmatpush1.bf16.msra.mxu0 0
    %2679 = vmatprep.subr.bf16.mxu0 0
    %2680 = vmatpush1.bf16.msra.mxu0 0
    %2681 = vmatprep.subr.bf16.mxu0 0
    %2682 = vmatpush1.bf16.msra.mxu0 0
    %2683 = vmatprep.subr.bf16.mxu0 0
    %2684 = vmatpush1.bf16.msra.mxu0 0
    %2685 = vmatprep.subr.bf16.mxu0 0
    %2686 = vmatpush1.bf16.msra.mxu0 0
    %2687 = vmatprep.subr.bf16.mxu0 0
    %2688 = vmatpush1.bf16.msra.mxu0 0
    %2689 = vmatprep.subr.bf16.mxu0 0
    %2690 = vmatpush1.bf16.msra.mxu0 0
    %2691 = vmatprep.subr.bf16.mxu0 0
    %2692 = vmatpush1.bf16.msra.mxu0 0
    %2693 = vmatprep.subr.bf16.mxu0 0
    %2694 = vmatpush1.bf16.msra.mxu0 0
    %2695 = vmatprep.subr.bf16.mxu0 0
    %2696 = vmatpush1.bf16.msra.mxu0 0
    %2697 = vmatprep.subr.bf16.mxu0 0
    %2698 = vmatpush1.bf16.msra.mxu0 0
    %2699 = vmatprep.subr.bf16.mxu0 0
    %2700 = vmatpush1.bf16.msra.mxu0 0
    %2701 = vmatprep.subr.bf16.mxu0 0
    %2702 = vmatpush1.bf16.msra.mxu0 0
    %2703 = vmatprep.subr.bf16.mxu0 0
    %2704 = vmatpush1.bf16.msra.mxu0 0
    %2705 = vmatprep.mubr.bf16.mxu0 0
    %2706 = vmatmul.mubr.bf16.gmra.mrb[0].mxu0 %v2665
    %v2707 = vpop.f32.mrb[0].mxu0
    %v2708 = vadd.f32 0.0, %v2707
    %v2709 = vpop.f32.mrb[0].mxu0
    %v2710 = vpop.f32.mrb[0].mxu0
    %v2711 = vadd.f32 0.0, %v2710
    %v2712 = vpop.f32.mrb[0].mxu0
    %2713 = vmatprep.mubr.bf16.mxu0 0
    %2714 = vmatmul.mubr.bf16.gmra.mrb[0].mxu0 %v2668
    %v2715 = vpop.f32.mrb[0].mxu0
    %v2716 = vadd.f32 0.0, %v2715
    %v2717 = vpop.f32.mrb[0].mxu0
    %v2718 = vpop.f32.mrb[0].mxu0
    %v2719 = vadd.f32 0.0, %v2718
    %v2720 = vpop.f32.mrb[0].mxu0
    %2721 = vdwg.mxu0
    %v2722 = vadd.f32 %v2472, %v2708
    %v2723 = vadd.f32 %v2475, %v2711
    %v2724 = vadd.f32 %v2480, %v2716
    %v2725 = vadd.f32 %v2483, %v2719
    %2726 = vrot.lane.b32.xlu0 %v2010, 104
    %v2727 = vpop.permute.xlu0 %2726
    %2728 = vrot.lane.b32.xlu0 %v2011, 104
    %v2729 = vpop.permute.xlu0 %2728
    %2730 = vrot.lane.b32.xlu0 %v2012, 72
    %v2731 = vpop.permute.xlu0 %2730
    %2732 = vrot.lane.b32.xlu0 %v2013, 72
    %v2733 = vpop.permute.xlu0 %2732
    %v2735 = vsel %vm493, %v2727, 0
    %v2738 = vsel %vm493, %v2729, 0
    %v2741 = vsel %vm493, %v2731, 0
    %v2744 = vsel %vm493, %v2733, 0
    %2746 = vmatprep.subr.bf16.mxu0 0
    %2747 = vmatpush1.bf16.xpose.msra.mxu0 %v2741
    %2748 = vmatprep.subr.bf16.mxu0 0
    %2749 = vmatpush1.bf16.xpose.msra.mxu0 %v2744
    %2750 = vmatprep.subr.bf16.mxu0 0
    %2751 = vmatpush1.bf16.xpose.msra.mxu0 0
    %2752 = vmatprep.subr.bf16.mxu0 0
    %2753 = vmatpush1.bf16.xpose.msra.mxu0 0
    %2754 = vmatprep.subr.bf16.mxu0 0
    %2755 = vmatpush1.bf16.xpose.msra.mxu0 0
    %2756 = vmatprep.subr.bf16.mxu0 0
    %2757 = vmatpush1.bf16.xpose.msra.mxu0 0
    %2758 = vmatprep.subr.bf16.mxu0 0
    %2759 = vmatpush1.bf16.xpose.msra.mxu0 0
    %2760 = vmatprep.subr.bf16.mxu0 0
    %2761 = vmatpush1.bf16.xpose.msra.mxu0 0
    %2762 = vmatprep.subr.bf16.mxu0 0
    %2763 = vmatpush1.bf16.xpose.msra.mxu0 0
    %2764 = vmatprep.subr.bf16.mxu0 0
    %2765 = vmatpush1.bf16.xpose.msra.mxu0 0
    %2766 = vmatprep.subr.bf16.mxu0 0
    %2767 = vmatpush1.bf16.xpose.msra.mxu0 0
    %2768 = vmatprep.subr.bf16.mxu0 0
    %2769 = vmatpush1.bf16.xpose.msra.mxu0 0
    %2770 = vmatprep.subr.bf16.mxu0 0
    %2771 = vmatpush1.bf16.xpose.msra.mxu0 0
    %2772 = vmatprep.subr.bf16.mxu0 0
    %2773 = vmatpush1.bf16.xpose.msra.mxu0 0
    %2774 = vmatprep.subr.bf16.mxu0 0
    %2775 = vmatpush1.bf16.xpose.msra.mxu0 0
    %2776 = vmatprep.subr.bf16.mxu0 0
    %2777 = vmatpush1.bf16.xpose.msra.mxu0 0
    %2778 = vmatprep.mubr.bf16.mxu0 0
    %2779 = vmatmul.mubr.bf16.gmra.mrb[0].mxu0 %v2735
    %v2780 = vpop.f32.mrb[0].mxu0
    %v2781 = vadd.f32 %v140, %v2780
    %v2782 = vpop.f32.mrb[0].mxu0
    %v2783 = vpop.f32.mrb[0].mxu0
    %v2784 = vadd.f32 %v141, %v2783
    %v2785 = vpop.f32.mrb[0].mxu0
    %2786 = vmatprep.mubr.bf16.mxu0 0
    %2787 = vmatmul.mubr.bf16.gmra.mrb[0].mxu0 %v2738
    %v2788 = vpop.f32.mrb[0].mxu0
    %v2789 = vadd.f32 %v142, %v2788
    %v2790 = vpop.f32.mrb[0].mxu0
    %v2791 = vpop.f32.mrb[0].mxu0
    %v2792 = vadd.f32 %v143, %v2791
    %v2793 = vpop.f32.mrb[0].mxu0
    %2794 = vdwg.mxu0
    %v2795 = vsel %vm247, %v2781, -inf
    %2796 = vmax.xlane.f32.xlu0 %v2795
    %v2797 = vpop.xlane.xlu0 %2796
    %v2798 = vsel %vm247, %v2784, -inf
    %2799 = vmax.xlane.f32.xlu0 %v2798
    %v2800 = vpop.xlane.xlu0 %2799
    %v2801 = vsel %vm247, %v2789, -inf
    %2802 = vmax.xlane.f32.xlu0 %v2801
    %v2803 = vpop.xlane.xlu0 %2802
    %v2804 = vsel %vm247, %v2792, -inf
    %2805 = vmax.xlane.f32.xlu0 %v2804
    %v2806 = vpop.xlane.xlu0 %2805
    %v2807 = vsub.f32 %v2781, %v2797
    %v2808 = vsub.f32 %v2784, %v2800
    %v2809 = vsub.f32 %v2789, %v2803
    %v2810 = vsub.f32 %v2792, %v2806
    %v2811 = vmul.f32 %v2807, 1.442695
    %v2812 = vpow.pop %v2811
    %v2813 = vmul.f32 %v2808, 1.442695
    %v2814 = vpow.pop %v2813
    %v2815 = vmul.f32 %v2809, 1.442695
    %v2816 = vpow.pop %v2815
    %v2817 = vmul.f32 %v2810, 1.442695
    %v2818 = vpow.pop %v2817
    %v2819 = vsel %vm247, %v2812, 0.0
    %2820 = vadd.xlane.f32.xlu0 %v2819
    %v2821 = vpop.xlane.xlu0 %2820
    %v2822 = vsel %vm247, %v2814, 0.0
    %2823 = vadd.xlane.f32.xlu0 %v2822
    %v2824 = vpop.xlane.xlu0 %2823
    %v2825 = vsel %vm247, %v2816, 0.0
    %2826 = vadd.xlane.f32.xlu0 %v2825
    %v2827 = vpop.xlane.xlu0 %2826
    %v2828 = vsel %vm247, %v2818, 0.0
    %2829 = vadd.xlane.f32.xlu0 %v2828
    %v2830 = vpop.xlane.xlu0 %2829
    %v2831 = vrcp.pop %v2821
    %v2832 = vrcp.pop %v2824
    %v2833 = vrcp.pop %v2827
    %v2834 = vrcp.pop %v2830
    %v2835 = vmul.f32 %v2812, %v2831
    %v2836 = vmul.f32 %v2814, %v2832
    %v2837 = vmul.f32 %v2816, %v2833
    %v2838 = vmul.f32 %v2818, %v2834
    %v2839 = vpack.c.bf16 %v2836, %v2835
    %v2840 = vpack.c.bf16 %v2838, %v2837
    %2841 = vrot.lane.b32.xlu0 %v2012, 40
    %v2842 = vpop.permute.xlu0 %2841
    %2843 = vrot.lane.b32.xlu0 %v2013, 40
    %v2844 = vpop.permute.xlu0 %2843
    %v2848 = vsel %vm247, %v2839, 0
    %v2851 = vsel %vm247, %v2840, 0
    %2853 = vmatprep.subr.bf16.mxu0 0
    %2854 = vmatpush1.bf16.msra.mxu0 %v2842
    %2855 = vmatprep.subr.bf16.mxu0 0
    %2856 = vmatpush1.bf16.msra.mxu0 %v2844
    %2857 = vmatprep.subr.bf16.mxu0 0
    %2858 = vmatpush1.bf16.msra.mxu0 0
    %2859 = vmatprep.subr.bf16.mxu0 0
    %2860 = vmatpush1.bf16.msra.mxu0 0
    %2861 = vmatprep.subr.bf16.mxu0 0
    %2862 = vmatpush1.bf16.msra.mxu0 0
    %2863 = vmatprep.subr.bf16.mxu0 0
    %2864 = vmatpush1.bf16.msra.mxu0 0
    %2865 = vmatprep.subr.bf16.mxu0 0
    %2866 = vmatpush1.bf16.msra.mxu0 0
    %2867 = vmatprep.subr.bf16.mxu0 0
    %2868 = vmatpush1.bf16.msra.mxu0 0
    %2869 = vmatprep.subr.bf16.mxu0 0
    %2870 = vmatpush1.bf16.msra.mxu0 0
    %2871 = vmatprep.subr.bf16.mxu0 0
    %2872 = vmatpush1.bf16.msra.mxu0 0
    %2873 = vmatprep.subr.bf16.mxu0 0
    %2874 = vmatpush1.bf16.msra.mxu0 0
    %2875 = vmatprep.subr.bf16.mxu0 0
    %2876 = vmatpush1.bf16.msra.mxu0 0
    %2877 = vmatprep.subr.bf16.mxu0 0
    %2878 = vmatpush1.bf16.msra.mxu0 0
    %2879 = vmatprep.subr.bf16.mxu0 0
    %2880 = vmatpush1.bf16.msra.mxu0 0
    %2881 = vmatprep.subr.bf16.mxu0 0
    %2882 = vmatpush1.bf16.msra.mxu0 0
    %2883 = vmatprep.subr.bf16.mxu0 0
    %2884 = vmatpush1.bf16.msra.mxu0 0
    %2885 = vmatprep.mubr.bf16.mxu0 0
    %2886 = vmatmul.mubr.bf16.gmra.mrb[0].mxu0 %v2848
    %v2887 = vpop.f32.mrb[0].mxu0
    %v2888 = vadd.f32 0.0, %v2887
    %v2889 = vpop.f32.mrb[0].mxu0
    %v2890 = vpop.f32.mrb[0].mxu0
    %v2891 = vadd.f32 0.0, %v2890
    %v2892 = vpop.f32.mrb[0].mxu0
    %2893 = vmatprep.mubr.bf16.mxu0 0
    %2894 = vmatmul.mubr.bf16.gmra.mrb[0].mxu0 %v2851
    %v2895 = vpop.f32.mrb[0].mxu0
    %v2896 = vadd.f32 0.0, %v2895
    %v2897 = vpop.f32.mrb[0].mxu0
    %v2898 = vpop.f32.mrb[0].mxu0
    %v2899 = vadd.f32 0.0, %v2898
    %v2900 = vpop.f32.mrb[0].mxu0
    %2901 = vdwg.mxu0
    %v2902 = vpack.c.bf16 %v2891, %v2888
    %v2903 = vpack.c.bf16 %v2899, %v2896
    %v2905 = vsel %vm493, %v2902, 0
    %v2908 = vsel %vm493, %v2903, 0
    %v2911 = vsel %vm850, %v2005, 0
    %2913 = vmatprep.subr.bf16.mxu0 0
    %2914 = vmatpush1.bf16.msra.mxu0 %v2911
    %2915 = vmatprep.subr.bf16.mxu0 0
    %2916 = vmatpush1.bf16.msra.mxu0 0
    %2917 = vmatprep.subr.bf16.mxu0 0
    %2918 = vmatpush1.bf16.msra.mxu0 0
    %2919 = vmatprep.subr.bf16.mxu0 0
    %2920 = vmatpush1.bf16.msra.mxu0 0
    %2921 = vmatprep.subr.bf16.mxu0 0
    %2922 = vmatpush1.bf16.msra.mxu0 0
    %2923 = vmatprep.subr.bf16.mxu0 0
    %2924 = vmatpush1.bf16.msra.mxu0 0
    %2925 = vmatprep.subr.bf16.mxu0 0
    %2926 = vmatpush1.bf16.msra.mxu0 0
    %2927 = vmatprep.subr.bf16.mxu0 0
    %2928 = vmatpush1.bf16.msra.mxu0 0
    %2929 = vmatprep.subr.bf16.mxu0 0
    %2930 = vmatpush1.bf16.msra.mxu0 0
    %2931 = vmatprep.subr.bf16.mxu0 0
    %2932 = vmatpush1.bf16.msra.mxu0 0
    %2933 = vmatprep.subr.bf16.mxu0 0
    %2934 = vmatpush1.bf16.msra.mxu0 0
    %2935 = vmatprep.subr.bf16.mxu0 0
    %2936 = vmatpush1.bf16.msra.mxu0 0
    %2937 = vmatprep.subr.bf16.mxu0 0
    %2938 = vmatpush1.bf16.msra.mxu0 0
    %2939 = vmatprep.subr.bf16.mxu0 0
    %2940 = vmatpush1.bf16.msra.mxu0 0
    %2941 = vmatprep.subr.bf16.mxu0 0
    %2942 = vmatpush1.bf16.msra.mxu0 0
    %2943 = vmatprep.subr.bf16.mxu0 0
    %2944 = vmatpush1.bf16.msra.mxu0 0
    %2945 = vmatprep.mubr.bf16.mxu0 0
    %2946 = vmatmul.mubr.bf16.gmra.mrb[0].mxu0 %v2905
    %v2947 = vpop.f32.mrb[0].mxu0
    %v2948 = vadd.f32 0.0, %v2947
    %v2949 = vpop.f32.mrb[0].mxu0
    %v2950 = vpop.f32.mrb[0].mxu0
    %v2951 = vadd.f32 0.0, %v2950
    %v2952 = vpop.f32.mrb[0].mxu0
    %2953 = vmatprep.mubr.bf16.mxu0 0
    %2954 = vmatmul.mubr.bf16.gmra.mrb[0].mxu0 %v2908
    %v2955 = vpop.f32.mrb[0].mxu0
    %v2956 = vadd.f32 0.0, %v2955
    %v2957 = vpop.f32.mrb[0].mxu0
    %v2958 = vpop.f32.mrb[0].mxu0
    %v2959 = vadd.f32 0.0, %v2958
    %v2960 = vpop.f32.mrb[0].mxu0
    %2961 = vdwg.mxu0
    %v2962 = vadd.f32 %v2722, %v2948
    %v2963 = vadd.f32 %v2723, %v2951
    %v2964 = vadd.f32 %v2724, %v2956
    %v2965 = vadd.f32 %v2725, %v2959
    %v2966 = vadd.f32 %v1844, %v2962
    %v2967 = vadd.f32 %v1845, %v2963
    %v2968 = vadd.f32 %v1846, %v2964
    %v2969 = vadd.f32 %v1847, %v2965
    %v2970 = vld [vmem:[%s45] sm:$0x1]
    %v2972 = vlaneseq
    %v2973 = vshrl.u32 %v2972, 7
    %v2974 = vsub.s32 0, %v2973
    %v2975 = vrot.slane %v2970, %v2974
    %v2977 = vadd.f32 %v2966, %v2975
    %v2978 = vadd.f32 %v2967, %v2975
    %v2979 = vadd.f32 %v2968, %v2975
    %v2980 = vadd.f32 %v2969, %v2975
    %v2981 = vld [vmem:[%s47] sm:$0x1]
    %v2982 = vld [vmem:[%s49] sm:$0x1]
    %v2983 = vsel %vm247, %v2977, 0.0
    %2984 = vadd.xlane.f32.xlu0 %v2983
    %v2985 = vpop.xlane.xlu0 %2984
    %v2986 = vsel %vm247, %v2978, 0.0
    %2987 = vadd.xlane.f32.xlu0 %v2986
    %v2988 = vpop.xlane.xlu0 %2987
    %v2989 = vsel %vm247, %v2979, 0.0
    %2990 = vadd.xlane.f32.xlu0 %v2989
    %v2991 = vpop.xlane.xlu0 %2990
    %v2992 = vsel %vm247, %v2980, 0.0
    %2993 = vadd.xlane.f32.xlu0 %v2992
    %v2994 = vpop.xlane.xlu0 %2993
    %v2995 = vmul.f32 %v2985, %v260
    %v2996 = vmul.f32 %v2988, %v260
    %v2997 = vmul.f32 %v2991, %v260
    %v2998 = vmul.f32 %v2994, %v260
    %v2999 = vsub.f32 %v2977, %v2995
    %v3000 = vsub.f32 %v2978, %v2996
    %v3001 = vsub.f32 %v2979, %v2997
    %v3002 = vsub.f32 %v2980, %v2998
    %v3003 = vmul.f32 %v2999, %v2999
    %v3004 = vmul.f32 %v3000, %v3000
    %v3005 = vmul.f32 %v3001, %v3001
    %v3006 = vmul.f32 %v3002, %v3002
    %v3007 = vsel %vm247, %v3003, 0.0
    %3008 = vadd.xlane.f32.xlu0 %v3007
    %v3009 = vpop.xlane.xlu0 %3008
    %v3010 = vsel %vm247, %v3004, 0.0
    %3011 = vadd.xlane.f32.xlu0 %v3010
    %v3012 = vpop.xlane.xlu0 %3011
    %v3013 = vsel %vm247, %v3005, 0.0
    %3014 = vadd.xlane.f32.xlu0 %v3013
    %v3015 = vpop.xlane.xlu0 %3014
    %v3016 = vsel %vm247, %v3006, 0.0
    %3017 = vadd.xlane.f32.xlu0 %v3016
    %v3018 = vpop.xlane.xlu0 %3017
    %v3019 = vmul.f32 %v3009, %v260
    %v3020 = vmul.f32 %v3012, %v260
    %v3021 = vmul.f32 %v3015, %v260
    %v3022 = vmul.f32 %v3018, %v260
    %v3023 = vadd.f32 %v3019, 1e-05
    %v3024 = vadd.f32 %v3020, 1e-05
    %v3025 = vadd.f32 %v3021, 1e-05
    %v3026 = vadd.f32 %v3022, 1e-05
    %v3027 = vrsqrt.pop %v3023
    %v3028 = vrsqrt.pop %v3024
    %v3029 = vrsqrt.pop %v3025
    %v3030 = vrsqrt.pop %v3026
    %v3031 = vmul.f32 %v2999, %v3027
    %v3032 = vmul.f32 %v3000, %v3028
    %v3033 = vmul.f32 %v3001, %v3029
    %v3034 = vmul.f32 %v3002, %v3030
    %v3036 = vlaneseq
    %v3037 = vshrl.u32 %v3036, 7
    %v3038 = vsub.s32 0, %v3037
    %v3039 = vrot.slane %v2981, %v3038
    %v3041 = vmul.f32 %v3031, %v3039
    %v3042 = vmul.f32 %v3032, %v3039
    %v3043 = vmul.f32 %v3033, %v3039
    %v3044 = vmul.f32 %v3034, %v3039
    %v3046 = vlaneseq
    %v3047 = vshrl.u32 %v3046, 7
    %v3048 = vsub.s32 0, %v3047
    %v3049 = vrot.slane %v2982, %v3048
    %v3051 = vadd.f32 %v3041, %v3049
    %v3052 = vadd.f32 %v3042, %v3049
    %v3053 = vadd.f32 %v3043, %v3049
    %v3054 = vadd.f32 %v3044, %v3049
    %v3055 = vld [vmem:[%s51] sm:$0xf]
    %v3056 = vld [vmem:[%s51 + $0x4] sm:$0xf]
    %v3057 = vld [vmem:[%s51 + $0x8] sm:$0xf]
    %v3058 = vld [vmem:[%s51 + $0xc] sm:$0xf]
    %v3059 = vpack.c.bf16 %v3052, %v3051
    %v3060 = vpack.c.bf16 %v3054, %v3053
    %v3061 = vld [vmem:[%s53] sm:$0x1]
    %v3063 = vlaneseq
    %v3064 = vshrl.u32 %v3063, 7
    %v3065 = vsub.s32 0, %v3064
    %v3066 = vrot.slane %v3061, %v3065
    %v3072 = vunpack.c.l.b16 %v3055
    %v3073 = vunpack.c.l.b16 %v3056
    %v3074 = vunpack.c.l.b16 %v3057
    %v3075 = vunpack.c.l.b16 %v3058
    %v3076 = vpack.c.b16 %v3073, %v3072
    %v3077 = vpack.c.b16 %v3075, %v3074
    %v3081 = vsel %vm247, %v3059, 0
    %v3084 = vsel %vm247, %v3060, 0
    %3086 = vmatprep.subr.bf16.mxu0 0
    %3087 = vmatpush1.bf16.msra.mxu0 %v3076
    %3088 = vmatprep.subr.bf16.mxu0 0
    %3089 = vmatpush1.bf16.msra.mxu0 %v3077
    %3090 = vmatprep.subr.bf16.mxu0 0
    %3091 = vmatpush1.bf16.msra.mxu0 0
    %3092 = vmatprep.subr.bf16.mxu0 0
    %3093 = vmatpush1.bf16.msra.mxu0 0
    %3094 = vmatprep.subr.bf16.mxu0 0
    %3095 = vmatpush1.bf16.msra.mxu0 0
    %3096 = vmatprep.subr.bf16.mxu0 0
    %3097 = vmatpush1.bf16.msra.mxu0 0
    %3098 = vmatprep.subr.bf16.mxu0 0
    %3099 = vmatpush1.bf16.msra.mxu0 0
    %3100 = vmatprep.subr.bf16.mxu0 0
    %3101 = vmatpush1.bf16.msra.mxu0 0
    %3102 = vmatprep.subr.bf16.mxu0 0
    %3103 = vmatpush1.bf16.msra.mxu0 0
    %3104 = vmatprep.subr.bf16.mxu0 0
    %3105 = vmatpush1.bf16.msra.mxu0 0
    %3106 = vmatprep.subr.bf16.mxu0 0
    %3107 = vmatpush1.bf16.msra.mxu0 0
    %3108 = vmatprep.subr.bf16.mxu0 0
    %3109 = vmatpush1.bf16.msra.mxu0 0
    %3110 = vmatprep.subr.bf16.mxu0 0
    %3111 = vmatpush1.bf16.msra.mxu0 0
    %3112 = vmatprep.subr.bf16.mxu0 0
    %3113 = vmatpush1.bf16.msra.mxu0 0
    %3114 = vmatprep.subr.bf16.mxu0 0
    %3115 = vmatpush1.bf16.msra.mxu0 0
    %3116 = vmatprep.subr.bf16.mxu0 0
    %3117 = vmatpush1.bf16.msra.mxu0 0
    %3118 = vmatprep.mubr.bf16.mxu0 0
    %3119 = vmatmul.mubr.bf16.gmra.mrb[0].mxu0 %v3081
    %v3120 = vpop.f32.mrb[0].mxu0
    %v3121 = vadd.f32 %v3066, %v3120
    %v3122 = vpop.f32.mrb[0].mxu0
    %v3123 = vpop.f32.mrb[0].mxu0
    %v3124 = vadd.f32 %v3066, %v3123
    %v3125 = vpop.f32.mrb[0].mxu0
    %3126 = vmatprep.mubr.bf16.mxu0 0
    %3127 = vmatmul.mubr.bf16.gmra.mrb[0].mxu0 %v3084
    %v3128 = vpop.f32.mrb[0].mxu0
    %v3129 = vadd.f32 %v3066, %v3128
    %v3130 = vpop.f32.mrb[0].mxu0
    %v3131 = vpop.f32.mrb[0].mxu0
    %v3132 = vadd.f32 %v3066, %v3131
    %v3133 = vpop.f32.mrb[0].mxu0
    %3134 = vdwg.mxu0
    %v3135 = vmul.f32 %v3121, 0.5
    %v3136 = vmul.f32 %v3124, 0.5
    %v3137 = vmul.f32 %v3129, 0.5
    %v3138 = vmul.f32 %v3132, 0.5
    %v3139 = vmul.f32 %v3121, 0.70710677
    %v3140 = vmul.f32 %v3124, 0.70710677
    %v3141 = vmul.f32 %v3129, 0.70710677
    %v3142 = vmul.f32 %v3132, 0.70710677
    %vm3143 = vcmp.ge.f32.partialorder %v3139, 0.0
    %vm3144 = vcmp.ge.f32.partialorder %v3140, 0.0
    %vm3145 = vcmp.ge.f32.partialorder %v3141, 0.0
    %vm3146 = vcmp.ge.f32.partialorder %v3142, 0.0
    %v3147 = vsel %vm3143, 1.0, -1.0
    %v3148 = vsel %vm3144, 1.0, -1.0
    %v3149 = vsel %vm3145, 1.0, -1.0
    %v3150 = vsel %vm3146, 1.0, -1.0
    %v3151 = vand.u32 2147483647, %v3139
    %v3152 = vand.u32 2147483647, %v3140
    %v3153 = vand.u32 2147483647, %v3141
    %v3154 = vand.u32 2147483647, %v3142
    %v3155 = vmul.f32 %v3151, 0.3275911
    %v3156 = vmul.f32 %v3152, 0.3275911
    %v3157 = vmul.f32 %v3153, 0.3275911
    %v3158 = vmul.f32 %v3154, 0.3275911
    %v3159 = vadd.f32 %v3155, 1.0
    %v3160 = vadd.f32 %v3156, 1.0
    %v3161 = vadd.f32 %v3157, 1.0
    %v3162 = vadd.f32 %v3158, 1.0
    %v3163 = vrcp.pop %v3159
    %v3164 = vmul.f32 1.0, %v3163
    %v3165 = vrcp.pop %v3160
    %v3166 = vmul.f32 1.0, %v3165
    %v3167 = vrcp.pop %v3161
    %v3168 = vmul.f32 1.0, %v3167
    %v3169 = vrcp.pop %v3162
    %v3170 = vmul.f32 1.0, %v3169
    %v3171 = vmul.f32 %v3164, 1.0614054
    %v3172 = vmul.f32 %v3166, 1.0614054
    %v3173 = vmul.f32 %v3168, 1.0614054
    %v3174 = vmul.f32 %v3170, 1.0614054
    %v3175 = vadd.f32 %v3171, -1.4531521
    %v3176 = vadd.f32 %v3172, -1.4531521
    %v3177 = vadd.f32 %v3173, -1.4531521
    %v3178 = vadd.f32 %v3174, -1.4531521
    %v3179 = vmul.f32 %v3175, %v3164
    %v3180 = vmul.f32 %v3176, %v3166
    %v3181 = vmul.f32 %v3177, %v3168
    %v3182 = vmul.f32 %v3178, %v3170
    %v3183 = vadd.f32 %v3179, 1.4214138
    %v3184 = vadd.f32 %v3180, 1.4214138
    %v3185 = vadd.f32 %v3181, 1.4214138
    %v3186 = vadd.f32 %v3182, 1.4214138
    %v3187 = vmul.f32 %v3183, %v3164
    %v3188 = vmul.f32 %v3184, %v3166
    %v3189 = vmul.f32 %v3185, %v3168
    %v3190 = vmul.f32 %v3186, %v3170
    %v3191 = vadd.f32 %v3187, -0.28449672
    %v3192 = vadd.f32 %v3188, -0.28449672
    %v3193 = vadd.f32 %v3189, -0.28449672
    %v3194 = vadd.f32 %v3190, -0.28449672
    %v3195 = vmul.f32 %v3191, %v3164
    %v3196 = vmul.f32 %v3192, %v3166
    %v3197 = vmul.f32 %v3193, %v3168
    %v3198 = vmul.f32 %v3194, %v3170
    %v3199 = vadd.f32 %v3195, 0.2548296
    %v3200 = vadd.f32 %v3196, 0.2548296
    %v3201 = vadd.f32 %v3197, 0.2548296
    %v3202 = vadd.f32 %v3198, 0.2548296
    %v3203 = vmul.f32 %v3199, %v3164
    %v3204 = vmul.f32 %v3200, %v3166
    %v3205 = vmul.f32 %v3201, %v3168
    %v3206 = vmul.f32 %v3202, %v3170
    %v3207 = vsub.f32 0.0, %v3151
    %v3208 = vsub.f32 0.0, %v3152
    %v3209 = vsub.f32 0.0, %v3153
    %v3210 = vsub.f32 0.0, %v3154
    %v3211 = vmul.f32 %v3207, %v3151
    %v3212 = vmul.f32 %v3208, %v3152
    %v3213 = vmul.f32 %v3209, %v3153
    %v3214 = vmul.f32 %v3210, %v3154
    %v3215 = vmul.f32 %v3211, 1.442695
    %v3216 = vpow.pop %v3215
    %v3217 = vmul.f32 %v3212, 1.442695
    %v3218 = vpow.pop %v3217
    %v3219 = vmul.f32 %v3213, 1.442695
    %v3220 = vpow.pop %v3219
    %v3221 = vmul.f32 %v3214, 1.442695
    %v3222 = vpow.pop %v3221
    %v3223 = vmul.f32 %v3203, %v3216
    %v3224 = vmul.f32 %v3204, %v3218
    %v3225 = vmul.f32 %v3205, %v3220
    %v3226 = vmul.f32 %v3206, %v3222
    %v3227 = vsub.f32 1.0, %v3223
    %v3228 = vsub.f32 1.0, %v3224
    %v3229 = vsub.f32 1.0, %v3225
    %v3230 = vsub.f32 1.0, %v3226
    %v3231 = vmul.f32 %v3147, %v3227
    %v3232 = vmul.f32 %v3148, %v3228
    %v3233 = vmul.f32 %v3149, %v3229
    %v3234 = vmul.f32 %v3150, %v3230
    %v3235 = vadd.f32 %v3231, 1.0
    %v3236 = vadd.f32 %v3232, 1.0
    %v3237 = vadd.f32 %v3233, 1.0
    %v3238 = vadd.f32 %v3234, 1.0
    %v3239 = vmul.f32 %v3135, %v3235
    %v3240 = vmul.f32 %v3136, %v3236
    %v3241 = vmul.f32 %v3137, %v3237
    %v3242 = vmul.f32 %v3138, %v3238
    %v3243 = vld [vmem:[%s55] sm:$0xf]
    %v3244 = vld [vmem:[%s55 + $0x4] sm:$0xf]
    %v3245 = vld [vmem:[%s55 + $0x8] sm:$0xf]
    %v3246 = vld [vmem:[%s55 + $0xc] sm:$0xf]
    %v3247 = vld [vmem:[%s55 + $0x10] sm:$0xf]
    %v3248 = vld [vmem:[%s55 + $0x14] sm:$0xf]
    %v3249 = vld [vmem:[%s55 + $0x18] sm:$0xf]
    %v3250 = vld [vmem:[%s55 + $0x1c] sm:$0xf]
    %v3251 = vld [vmem:[%s55 + $0x20] sm:$0xf]
    %v3252 = vld [vmem:[%s55 + $0x24] sm:$0xf]
    %v3253 = vld [vmem:[%s55 + $0x28] sm:$0xf]
    %v3254 = vld [vmem:[%s55 + $0x2c] sm:$0xf]
    %v3255 = vld [vmem:[%s55 + $0x30] sm:$0xf]
    %v3256 = vld [vmem:[%s55 + $0x34] sm:$0xf]
    %v3257 = vld [vmem:[%s55 + $0x38] sm:$0xf]
    %v3258 = vld [vmem:[%s55 + $0x3c] sm:$0xf]
    %v3259 = vpack.c.bf16 %v3240, %v3239
    %v3260 = vpack.c.bf16 %v3242, %v3241
    %v3277 = vunpack.c.l.b16 %v3243
    %v3278 = vunpack.c.l.b16 %v3244
    %v3279 = vunpack.c.l.b16 %v3245
    %v3280 = vunpack.c.l.b16 %v3246
    %v3281 = vunpack.c.l.b16 %v3247
    %v3282 = vunpack.c.l.b16 %v3248
    %v3283 = vunpack.c.l.b16 %v3249
    %v3284 = vunpack.c.l.b16 %v3250
    %v3285 = vunpack.c.l.b16 %v3251
    %v3286 = vunpack.c.l.b16 %v3252
    %v3287 = vunpack.c.l.b16 %v3253
    %v3288 = vunpack.c.l.b16 %v3254
    %v3289 = vunpack.c.l.b16 %v3255
    %v3290 = vunpack.c.l.b16 %v3256
    %v3291 = vunpack.c.l.b16 %v3257
    %v3292 = vunpack.c.l.b16 %v3258
    %v3293 = vpack.c.b16 %v3278, %v3277
    %v3294 = vpack.c.b16 %v3280, %v3279
    %v3295 = vpack.c.b16 %v3282, %v3281
    %v3296 = vpack.c.b16 %v3284, %v3283
    %v3297 = vpack.c.b16 %v3286, %v3285
    %v3298 = vpack.c.b16 %v3288, %v3287
    %v3299 = vpack.c.b16 %v3290, %v3289
    %v3300 = vpack.c.b16 %v3292, %v3291
    %3309 = vmatprep.subr.bf16.mxu0 0
    %3310 = vmatpush1.bf16.msra.mxu0 %v3293
    %3311 = vmatprep.subr.bf16.mxu0 0
    %3312 = vmatpush1.bf16.msra.mxu0 %v3294
    %3313 = vmatprep.subr.bf16.mxu0 0
    %3314 = vmatpush1.bf16.msra.mxu0 %v3295
    %3315 = vmatprep.subr.bf16.mxu0 0
    %3316 = vmatpush1.bf16.msra.mxu0 %v3296
    %3317 = vmatprep.subr.bf16.mxu0 0
    %3318 = vmatpush1.bf16.msra.mxu0 %v3297
    %3319 = vmatprep.subr.bf16.mxu0 0
    %3320 = vmatpush1.bf16.msra.mxu0 %v3298
    %3321 = vmatprep.subr.bf16.mxu0 0
    %3322 = vmatpush1.bf16.msra.mxu0 %v3299
    %3323 = vmatprep.subr.bf16.mxu0 0
    %3324 = vmatpush1.bf16.msra.mxu0 %v3300
    %3325 = vmatprep.subr.bf16.mxu0 0
    %3326 = vmatpush1.bf16.msra.mxu0 0
    %3327 = vmatprep.subr.bf16.mxu0 0
    %3328 = vmatpush1.bf16.msra.mxu0 0
    %3329 = vmatprep.subr.bf16.mxu0 0
    %3330 = vmatpush1.bf16.msra.mxu0 0
    %3331 = vmatprep.subr.bf16.mxu0 0
    %3332 = vmatpush1.bf16.msra.mxu0 0
    %3333 = vmatprep.subr.bf16.mxu0 0
    %3334 = vmatpush1.bf16.msra.mxu0 0
    %3335 = vmatprep.subr.bf16.mxu0 0
    %3336 = vmatpush1.bf16.msra.mxu0 0
    %3337 = vmatprep.subr.bf16.mxu0 0
    %3338 = vmatpush1.bf16.msra.mxu0 0
    %3339 = vmatprep.subr.bf16.mxu0 0
    %3340 = vmatpush1.bf16.msra.mxu0 0
    %3341 = vmatprep.mubr.bf16.mxu0 0
    %3342 = vmatmul.mubr.bf16.gmra.mrb[0].mxu0 %v3259
    %v3343 = vpop.f32.mrb[0].mxu0
    %v3344 = vadd.f32 0.0, %v3343
    %v3345 = vpop.f32.mrb[0].mxu0
    %v3346 = vpop.f32.mrb[0].mxu0
    %v3347 = vadd.f32 0.0, %v3346
    %v3348 = vpop.f32.mrb[0].mxu0
    %3349 = vmatprep.mubr.bf16.mxu0 0
    %3350 = vmatmul.mubr.bf16.gmra.mrb[0].mxu0 %v3260
    %v3351 = vpop.f32.mrb[0].mxu0
    %v3352 = vadd.f32 0.0, %v3351
    %v3353 = vpop.f32.mrb[0].mxu0
    %v3354 = vpop.f32.mrb[0].mxu0
    %v3355 = vadd.f32 0.0, %v3354
    %v3356 = vpop.f32.mrb[0].mxu0
    %3357 = vdwg.mxu0
    %v3358 = vadd.f32 %v2977, %v3344
    %v3359 = vadd.f32 %v2978, %v3347
    %v3360 = vadd.f32 %v2979, %v3352
    %v3361 = vadd.f32 %v2980, %v3355
    %v3362 = vld [vmem:[%s57] sm:$0x1]
    %v3364 = vlaneseq
    %v3365 = vshrl.u32 %v3364, 7
    %v3366 = vsub.s32 0, %v3365
    %v3367 = vrot.slane %v3362, %v3366
    %v3369 = vadd.f32 %v3358, %v3367
    %v3370 = vadd.f32 %v3359, %v3367
    %v3371 = vadd.f32 %v3360, %v3367
    %v3372 = vadd.f32 %v3361, %v3367
    %v3373 = vld [vmem:[%s59] sm:$0xf]
    %v3374 = vld [vmem:[%s61] sm:$0xf]
    %v3375 = vld [vmem:[%s63] sm:$0xff]
    %v3376 = vld [vmem:[%s63 + $0x8] sm:$0xff]
    %v3377 = vld [vmem:[%s63 + $0x10] sm:$0xff]
    %v3378 = vld [vmem:[%s63 + $0x18] sm:$0xff]
    %3380 = vset.pattern.permute.xlu0 0
    %3381 = vperm.xlu0 %3380, %v3374
    %v3382 = vpop.permute.xlu0 %3381
    %v3385 = vsel %vm247, %v3373, 0
    %v3388 = vsel %vm247, %v3369, 0
    %v3391 = vsel %vm247, %v3370, 0
    %3393 = vmatprep.subr.mxu0 0.0
    %3394 = vmatpush1.xpose.msra.mxu0 %v3388
    %3395 = vmatprep.subr.mxu0 0.0
    %3396 = vmatpush1.xpose.msra.mxu0 %v3391
    %3397 = vmatprep.subr.mxu0 0.0
    %3398 = vmatpush1.xpose.msra.mxu0 0.0
    %3399 = vmatprep.subr.mxu0 0.0
    %3400 = vmatpush1.xpose.msra.mxu0 0.0
    %3401 = vmatprep.subr.mxu0 0.0
    %3402 = vmatpush1.xpose.msra.mxu0 0.0
    %3403 = vmatprep.subr.mxu0 0.0
    %3404 = vmatpush1.xpose.msra.mxu0 0.0
    %3405 = vmatprep.subr.mxu0 0.0
    %3406 = vmatpush1.xpose.msra.mxu0 0.0
    %3407 = vmatprep.subr.mxu0 0.0
    %3408 = vmatpush1.xpose.msra.mxu0 0.0
    %3409 = vmatprep.subr.mxu0 0.0
    %3410 = vmatpush1.xpose.msra.mxu0 0.0
    %3411 = vmatprep.subr.mxu0 0.0
    %3412 = vmatpush1.xpose.msra.mxu0 0.0
    %3413 = vmatprep.subr.mxu0 0.0
    %3414 = vmatpush1.xpose.msra.mxu0 0.0
    %3415 = vmatprep.subr.mxu0 0.0
    %3416 = vmatpush1.xpose.msra.mxu0 0.0
    %3417 = vmatprep.subr.mxu0 0.0
    %3418 = vmatpush1.xpose.msra.mxu0 0.0
    %3419 = vmatprep.subr.mxu0 0.0
    %3420 = vmatpush1.xpose.msra.mxu0 0.0
    %3421 = vmatprep.subr.mxu0 0.0
    %3422 = vmatpush1.xpose.msra.mxu0 0.0
    %3423 = vmatprep.subr.mxu0 0.0
    %3424 = vmatpush1.xpose.msra.mxu0 0.0
    %3425 = vmatprep.subr.mxu0 0.0
    %3426 = vmatpush1.xpose.msra.mxu0 0.0
    %3427 = vmatprep.subr.mxu0 0.0
    %3428 = vmatpush1.xpose.msra.mxu0 0.0
    %3429 = vmatprep.subr.mxu0 0.0
    %3430 = vmatpush1.xpose.msra.mxu0 0.0
    %3431 = vmatprep.subr.mxu0 0.0
    %3432 = vmatpush1.xpose.msra.mxu0 0.0
    %3433 = vmatprep.subr.mxu0 0.0
    %3434 = vmatpush1.xpose.msra.mxu0 0.0
    %3435 = vmatprep.subr.mxu0 0.0
    %3436 = vmatpush1.xpose.msra.mxu0 0.0
    %3437 = vmatprep.subr.mxu0 0.0
    %3438 = vmatpush1.xpose.msra.mxu0 0.0
    %3439 = vmatprep.subr.mxu0 0.0
    %3440 = vmatpush1.xpose.msra.mxu0 0.0
    %3441 = vmatprep.subr.mxu0 0.0
    %3442 = vmatpush1.xpose.msra.mxu0 0.0
    %3443 = vmatprep.subr.mxu0 0.0
    %3444 = vmatpush1.xpose.msra.mxu0 0.0
    %3445 = vmatprep.subr.mxu0 0.0
    %3446 = vmatpush1.xpose.msra.mxu0 0.0
    %3447 = vmatprep.subr.mxu0 0.0
    %3448 = vmatpush1.xpose.msra.mxu0 0.0
    %3449 = vmatprep.subr.mxu0 0.0
    %3450 = vmatpush1.xpose.msra.mxu0 0.0
    %3451 = vmatprep.subr.mxu0 0.0
    %3452 = vmatpush1.xpose.msra.mxu0 0.0
    %3453 = vmatprep.subr.mxu0 0.0
    %3454 = vmatpush1.xpose.msra.mxu0 0.0
    %3455 = vmatprep.subr.mxu0 0.0
    %3456 = vmatpush1.xpose.msra.mxu0 0.0
    %3457 = vmatprep.mubr.f32.mxu0 0.0
    %3458 = vmatmul.mubr.f32.gmra.mrb[0].mxu0 %v3385
    %v3459 = vpop.f32.mrb[0].mxu0
    %v3460 = vadd.f32 %v3382, %v3459
    %v3461 = vpop.f32.mrb[0].mxu0
    %3462 = vdwg.mxu0
    %vm3463 = vcmask 130048
    %v3465 = vsel %vm3463, %v3460, 0
    %3467 = vmatprep.subr.mxu0 %v3376
    %3468 = vmatpush1.msra.mxu0 %v3375
    %3469 = vmatprep.subr.mxu0 %v3378
    %3470 = vmatpush1.msra.mxu0 %v3377
    %3471 = vmatprep.subr.mxu0 0.0
    %3472 = vmatpush1.msra.mxu0 0.0
    %3473 = vmatprep.subr.mxu0 0.0
    %3474 = vmatpush1.msra.mxu0 0.0
    %3475 = vmatprep.subr.mxu0 0.0
    %3476 = vmatpush1.msra.mxu0 0.0
    %3477 = vmatprep.subr.mxu0 0.0
    %3478 = vmatpush1.msra.mxu0 0.0
    %3479 = vmatprep.subr.mxu0 0.0
    %3480 = vmatpush1.msra.mxu0 0.0
    %3481 = vmatprep.subr.mxu0 0.0
    %3482 = vmatpush1.msra.mxu0 0.0
    %3483 = vmatprep.subr.mxu0 0.0
    %3484 = vmatpush1.msra.mxu0 0.0
    %3485 = vmatprep.subr.mxu0 0.0
    %3486 = vmatpush1.msra.mxu0 0.0
    %3487 = vmatprep.subr.mxu0 0.0
    %3488 = vmatpush1.msra.mxu0 0.0
    %3489 = vmatprep.subr.mxu0 0.0
    %3490 = vmatpush1.msra.mxu0 0.0
    %3491 = vmatprep.subr.mxu0 0.0
    %3492 = vmatpush1.msra.mxu0 0.0
    %3493 = vmatprep.subr.mxu0 0.0
    %3494 = vmatpush1.msra.mxu0 0.0
    %3495 = vmatprep.subr.mxu0 0.0
    %3496 = vmatpush1.msra.mxu0 0.0
    %3497 = vmatprep.subr.mxu0 0.0
    %3498 = vmatpush1.msra.mxu0 0.0
    %3499 = vmatprep.subr.mxu0 0.0
    %3500 = vmatpush1.msra.mxu0 0.0
    %3501 = vmatprep.subr.mxu0 0.0
    %3502 = vmatpush1.msra.mxu0 0.0
    %3503 = vmatprep.subr.mxu0 0.0
    %3504 = vmatpush1.msra.mxu0 0.0
    %3505 = vmatprep.subr.mxu0 0.0
    %3506 = vmatpush1.msra.mxu0 0.0
    %3507 = vmatprep.subr.mxu0 0.0
    %3508 = vmatpush1.msra.mxu0 0.0
    %3509 = vmatprep.subr.mxu0 0.0
    %3510 = vmatpush1.msra.mxu0 0.0
    %3511 = vmatprep.subr.mxu0 0.0
    %3512 = vmatpush1.msra.mxu0 0.0
    %3513 = vmatprep.subr.mxu0 0.0
    %3514 = vmatpush1.msra.mxu0 0.0
    %3515 = vmatprep.subr.mxu0 0.0
    %3516 = vmatpush1.msra.mxu0 0.0
    %3517 = vmatprep.subr.mxu0 0.0
    %3518 = vmatpush1.msra.mxu0 0.0
    %3519 = vmatprep.subr.mxu0 0.0
    %3520 = vmatpush1.msra.mxu0 0.0
    %3521 = vmatprep.subr.mxu0 0.0
    %3522 = vmatpush1.msra.mxu0 0.0
    %3523 = vmatprep.subr.mxu0 0.0
    %3524 = vmatpush1.msra.mxu0 0.0
    %3525 = vmatprep.subr.mxu0 0.0
    %3526 = vmatpush1.msra.mxu0 0.0
    %3527 = vmatprep.subr.mxu0 0.0
    %3528 = vmatpush1.msra.mxu0 0.0
    %3529 = vmatprep.subr.mxu0 0.0
    %3530 = vmatpush1.msra.mxu0 0.0
    %3531 = vmatprep.mubr.f32.mxu0 0.0
    %3532 = vmatmul.mubr.f32.gmra.mrb[0].mxu0 %v3465
    %v3533 = vpop.f32.mrb[0].mxu0
    %v3534 = vadd.f32 0.0, %v3533
    %v3535 = vpop.f32.mrb[0].mxu0
    %v3536 = vadd.f32 0.0, %v3535
    %3537 = vdwg.mxu0
    %v3540 = vcombine.low %v3534, %v3536
    %3542 = vst [vmem:[#allocation2] sm:$0xff] %v3540
    %v3544 = vsel %vm247, %v3371, 0
    %v3547 = vsel %vm247, %v3372, 0
    %3549 = vmatprep.subr.mxu0 0.0
    %3550 = vmatpush1.xpose.msra.mxu0 %v3544
    %3551 = vmatprep.subr.mxu0 0.0
    %3552 = vmatpush1.xpose.msra.mxu0 %v3547
    %3553 = vmatprep.subr.mxu0 0.0
    %3554 = vmatpush1.xpose.msra.mxu0 0.0
    %3555 = vmatprep.subr.mxu0 0.0
    %3556 = vmatpush1.xpose.msra.mxu0 0.0
    %3557 = vmatprep.subr.mxu0 0.0
    %3558 = vmatpush1.xpose.msra.mxu0 0.0
    %3559 = vmatprep.subr.mxu0 0.0
    %3560 = vmatpush1.xpose.msra.mxu0 0.0
    %3561 = vmatprep.subr.mxu0 0.0
    %3562 = vmatpush1.xpose.msra.mxu0 0.0
    %3563 = vmatprep.subr.mxu0 0.0
    %3564 = vmatpush1.xpose.msra.mxu0 0.0
    %3565 = vmatprep.subr.mxu0 0.0
    %3566 = vmatpush1.xpose.msra.mxu0 0.0
    %3567 = vmatprep.subr.mxu0 0.0
    %3568 = vmatpush1.xpose.msra.mxu0 0.0
    %3569 = vmatprep.subr.mxu0 0.0
    %3570 = vmatpush1.xpose.msra.mxu0 0.0
    %3571 = vmatprep.subr.mxu0 0.0
    %3572 = vmatpush1.xpose.msra.mxu0 0.0
    %3573 = vmatprep.subr.mxu0 0.0
    %3574 = vmatpush1.xpose.msra.mxu0 0.0
    %3575 = vmatprep.subr.mxu0 0.0
    %3576 = vmatpush1.xpose.msra.mxu0 0.0
    %3577 = vmatprep.subr.mxu0 0.0
    %3578 = vmatpush1.xpose.msra.mxu0 0.0
    %3579 = vmatprep.subr.mxu0 0.0
    %3580 = vmatpush1.xpose.msra.mxu0 0.0
    %3581 = vmatprep.subr.mxu0 0.0
    %3582 = vmatpush1.xpose.msra.mxu0 0.0
    %3583 = vmatprep.subr.mxu0 0.0
    %3584 = vmatpush1.xpose.msra.mxu0 0.0
    %3585 = vmatprep.subr.mxu0 0.0
    %3586 = vmatpush1.xpose.msra.mxu0 0.0
    %3587 = vmatprep.subr.mxu0 0.0
    %3588 = vmatpush1.xpose.msra.mxu0 0.0
    %3589 = vmatprep.subr.mxu0 0.0
    %3590 = vmatpush1.xpose.msra.mxu0 0.0
    %3591 = vmatprep.subr.mxu0 0.0
    %3592 = vmatpush1.xpose.msra.mxu0 0.0
    %3593 = vmatprep.subr.mxu0 0.0
    %3594 = vmatpush1.xpose.msra.mxu0 0.0
    %3595 = vmatprep.subr.mxu0 0.0
    %3596 = vmatpush1.xpose.msra.mxu0 0.0
    %3597 = vmatprep.subr.mxu0 0.0
    %3598 = vmatpush1.xpose.msra.mxu0 0.0
    %3599 = vmatprep.subr.mxu0 0.0
    %3600 = vmatpush1.xpose.msra.mxu0 0.0
    %3601 = vmatprep.subr.mxu0 0.0
    %3602 = vmatpush1.xpose.msra.mxu0 0.0
    %3603 = vmatprep.subr.mxu0 0.0
    %3604 = vmatpush1.xpose.msra.mxu0 0.0
    %3605 = vmatprep.subr.mxu0 0.0
    %3606 = vmatpush1.xpose.msra.mxu0 0.0
    %3607 = vmatprep.subr.mxu0 0.0
    %3608 = vmatpush1.xpose.msra.mxu0 0.0
    %3609 = vmatprep.subr.mxu0 0.0
    %3610 = vmatpush1.xpose.msra.mxu0 0.0
    %3611 = vmatprep.subr.mxu0 0.0
    %3612 = vmatpush1.xpose.msra.mxu0 0.0
    %3613 = vmatprep.mubr.f32.mxu0 0.0
    %3614 = vmatmul.mubr.f32.gmra.mrb[0].mxu0 %v3385
    %v3615 = vpop.f32.mrb[0].mxu0
    %v3616 = vadd.f32 %v3382, %v3615
    %v3617 = vpop.f32.mrb[0].mxu0
    %3618 = vdwg.mxu0
    %v3620 = vsel %vm3463, %v3616, 0
    %3622 = vmatprep.subr.mxu0 %v3376
    %3623 = vmatpush1.msra.mxu0 %v3375
    %3624 = vmatprep.subr.mxu0 %v3378
    %3625 = vmatpush1.msra.mxu0 %v3377
    %3626 = vmatprep.subr.mxu0 0.0
    %3627 = vmatpush1.msra.mxu0 0.0
    %3628 = vmatprep.subr.mxu0 0.0
    %3629 = vmatpush1.msra.mxu0 0.0
    %3630 = vmatprep.subr.mxu0 0.0
    %3631 = vmatpush1.msra.mxu0 0.0
    %3632 = vmatprep.subr.mxu0 0.0
    %3633 = vmatpush1.msra.mxu0 0.0
    %3634 = vmatprep.subr.mxu0 0.0
    %3635 = vmatpush1.msra.mxu0 0.0
    %3636 = vmatprep.subr.mxu0 0.0
    %3637 = vmatpush1.msra.mxu0 0.0
    %3638 = vmatprep.subr.mxu0 0.0
    %3639 = vmatpush1.msra.mxu0 0.0
    %3640 = vmatprep.subr.mxu0 0.0
    %3641 = vmatpush1.msra.mxu0 0.0
    %3642 = vmatprep.subr.mxu0 0.0
    %3643 = vmatpush1.msra.mxu0 0.0
    %3644 = vmatprep.subr.mxu0 0.0
    %3645 = vmatpush1.msra.mxu0 0.0
    %3646 = vmatprep.subr.mxu0 0.0
    %3647 = vmatpush1.msra.mxu0 0.0
    %3648 = vmatprep.subr.mxu0 0.0
    %3649 = vmatpush1.msra.mxu0 0.0
    %3650 = vmatprep.subr.mxu0 0.0
    %3651 = vmatpush1.msra.mxu0 0.0
    %3652 = vmatprep.subr.mxu0 0.0
    %3653 = vmatpush1.msra.mxu0 0.0
    %3654 = vmatprep.subr.mxu0 0.0
    %3655 = vmatpush1.msra.mxu0 0.0
    %3656 = vmatprep.subr.mxu0 0.0
    %3657 = vmatpush1.msra.mxu0 0.0
    %3658 = vmatprep.subr.mxu0 0.0
    %3659 = vmatpush1.msra.mxu0 0.0
    %3660 = vmatprep.subr.mxu0 0.0
    %3661 = vmatpush1.msra.mxu0 0.0
    %3662 = vmatprep.subr.mxu0 0.0
    %3663 = vmatpush1.msra.mxu0 0.0
    %3664 = vmatprep.subr.mxu0 0.0
    %3665 = vmatpush1.msra.mxu0 0.0
    %3666 = vmatprep.subr.mxu0 0.0
    %3667 = vmatpush1.msra.mxu0 0.0
    %3668 = vmatprep.subr.mxu0 0.0
    %3669 = vmatpush1.msra.mxu0 0.0
    %3670 = vmatprep.subr.mxu0 0.0
    %3671 = vmatpush1.msra.mxu0 0.0
    %3672 = vmatprep.subr.mxu0 0.0
    %3673 = vmatpush1.msra.mxu0 0.0
    %3674 = vmatprep.subr.mxu0 0.0
    %3675 = vmatpush1.msra.mxu0 0.0
    %3676 = vmatprep.subr.mxu0 0.0
    %3677 = vmatpush1.msra.mxu0 0.0
    %3678 = vmatprep.subr.mxu0 0.0
    %3679 = vmatpush1.msra.mxu0 0.0
    %3680 = vmatprep.subr.mxu0 0.0
    %3681 = vmatpush1.msra.mxu0 0.0
    %3682 = vmatprep.subr.mxu0 0.0
    %3683 = vmatpush1.msra.mxu0 0.0
    %3684 = vmatprep.subr.mxu0 0.0
    %3685 = vmatpush1.msra.mxu0 0.0
    %3686 = vmatprep.mubr.f32.mxu0 0.0
    %3687 = vmatmul.mubr.f32.gmra.mrb[0].mxu0 %v3620
    %v3688 = vpop.f32.mrb[0].mxu0
    %v3689 = vadd.f32 0.0, %v3688
    %v3690 = vpop.f32.mrb[0].mxu0
    %v3691 = vadd.f32 0.0, %v3690
    %3692 = vdwg.mxu0
    %v3695 = vcombine.low %v3689, %v3691
    %s3697 = scalar_lea.vmem [#allocation2], 8
    %3698 = vst [vmem:[%s3697] sm:$0xff] %v3695
    // Predicated region
    $region134: #{swin_unet_forward.1} parent=1 // pred_check
      _
    $region135: #{swin_unet_forward.1} parent=1 // pred_check_branch
      %3700 = sbr.rel (0) target = $region137
    $region136: #{swin_unet_forward.1} parent=1 // pred_region
      %s3702 = ssub.s32 256, 256
      %3703 = vsyncadd [#allocation3], %s3702
      %s3704 = sshll.u32 [#allocation2], 4
      %s3705 = int_to_ptr.vmem [resolvable:$true] %s3704
      %3710 = dma.vmem_to_hbm [thread:$0]  %s3705, 256, %s67, [#allocation3], 128, 128, 8
    $region137: #{swin_unet_forward.1} parent=1 // pred_fallthru
      _
    // Predicated region
    $region138: #{swin_unet_forward.1} parent=1 // pred_check
      _
    $region139: #{swin_unet_forward.1} parent=1 // pred_check_branch
      %3712 = sbr.rel (0) target = $region141
    $region140: #{swin_unet_forward.1} parent=1 // pred_region
      %3713 = dma.done [#allocation3], 256
    $region141: #{swin_unet_forward.1} parent=1 // pred_fallthru
      _
    %3714 = vsyncpa [#allocation3], 1

</llo_original>
